<compile_context>
chip_gen: v6e
topology: v6e:2x2x1
jax: 0.10.0
libtpu: 0.0.40
codegen_flags: <defaults>
</compile_context>

<pallas_src>
import functools

import jax
import jax.numpy as jnp
from jax.experimental import pallas as pl
from jax.experimental.pallas import tpu as pltpu


# ----------------------------------------------------------------------------
# Kernel bodies
# ----------------------------------------------------------------------------
def _epilogue(h, vec_ref, wslab_ref, o_ref, n_hidden, eps):
    """Hidden [Linear+BN+ReLU] stack + final Linear, fully in VMEM/vregs.

    h:        (B, N) f32 post first-layer bias+ReLU
    vec_ref:  (n_vec, N) f32 slab: [b0, (b_i, gamma_i, beta_i)*n_hidden, bf_pad]
    wslab_ref:(n_hidden+1, N, N) f32 slab: hidden weights + zero-padded final W
    """
    for i in range(n_hidden):
        b = vec_ref[pl.ds(1 + 3 * i, 1), :]
        g = vec_ref[pl.ds(2 + 3 * i, 1), :]
        beta = vec_ref[pl.ds(3 + 3 * i, 1), :]
        y = jnp.dot(h, wslab_ref[i, :, :],
                    preferred_element_type=jnp.float32) + b
        # BatchNorm1d training mode: biased batch stats, single pass.
        m = jnp.mean(y, axis=0, keepdims=True)
        ms = jnp.mean(y * y, axis=0, keepdims=True)
        inv = jax.lax.rsqrt((ms - m * m) + eps)
        h = jnp.maximum((y - m) * inv * g + beta, 0.0)
    bf = vec_ref[pl.ds(1 + 3 * n_hidden, 1), :]
    logits = jnp.dot(h, wslab_ref[n_hidden, :, :],
                     preferred_element_type=jnp.float32) + bf
    o_ref[...] = logits.astype(o_ref.dtype)      # lane-dense (B, N) store


def _make_single_step_kernel(n_hidden, eps):
    """grid=(1,): whole network in one body, no accumulator scratch."""
    def kernel(x_ref, w0_ref, vec_ref, wslab_ref, o_ref):
        xv = x_ref[...].astype(w0_ref.dtype)      # bf16 (or no-op) cast in VMEM
        acc = jnp.dot(xv, w0_ref[...], preferred_element_type=jnp.float32)
        h = jnp.maximum(acc + vec_ref[pl.ds(0, 1), :], 0.0)
        _epilogue(h, vec_ref, wslab_ref, o_ref, n_hidden, eps)
    return kernel


def _make_tiled_kernel(n_hidden, eps):
    """grid=(n_k,): first-layer K streamed in tiles, f32 accumulator scratch."""
    def kernel(x_ref, w0_ref, vec_ref, wslab_ref, o_ref, acc_ref):
        k = pl.program_id(0)

        @pl.when(k == 0)
        def _():
            # Fold the first-layer bias into the accumulator init (saves one
            # VPU add + broadcast in the serial epilogue).
            acc_ref[...] = jnp.broadcast_to(vec_ref[pl.ds(0, 1), :],
                                            acc_ref.shape)

        xv = x_ref[...].astype(w0_ref.dtype)
        acc_ref[...] += jnp.dot(xv, w0_ref[...],
                                preferred_element_type=jnp.float32)

        @pl.when(k == pl.num_programs(0) - 1)
        def _():
            h = jnp.maximum(acc_ref[...], 0.0)
            _epilogue(h, vec_ref, wslab_ref, o_ref, n_hidden, eps)
    return kernel


# ----------------------------------------------------------------------------
# Parameter packing (one-time, OUTSIDE the per-call forward)
# ----------------------------------------------------------------------------
def prepare_mlpb_params(params, bn_params, *, first_layer_bf16=True):
    """Pack parameters for the fused kernel.

    Returns (w0, vec_slab, w_slab):
      w0:       (K, N) first-layer weight, bf16 if first_layer_bf16
      vec_slab: (2 + 3*n_hidden, N) f32 — b0, [b_i, gamma_i, beta_i]*, bf padded
      w_slab:   (n_hidden + 1, N, N) f32 — hidden weights + zero-padded final W
    """
    N = params[0]["w"].shape[1]
    wf, bf = params[-1]["w"], params[-1]["b"]
    C = wf.shape[1]
    n_hidden = len(bn_params)

    w0 = params[0]["w"]
    if first_layer_bf16:
        w0 = w0.astype(jnp.bfloat16)

    rows = [params[0]["b"].reshape(1, N).astype(jnp.float32)]
    for i, bn in enumerate(bn_params):
        p = params[1 + i]
        rows += [p["b"].reshape(1, N).astype(jnp.float32),
                 bn["gamma"].reshape(1, N).astype(jnp.float32),
                 bn["beta"].reshape(1, N).astype(jnp.float32)]
    bf_row = jnp.zeros((1, N), jnp.float32).at[0, :C].set(
        bf.astype(jnp.float32))
    rows.append(bf_row)
    vec_slab = jnp.concatenate(rows, axis=0)

    planes = [params[1 + i]["w"].astype(jnp.float32)[None]
              for i in range(n_hidden)]
    wf_pad = jnp.zeros((N, N), jnp.float32).at[:, :C].set(
        wf.astype(jnp.float32))
    planes.append(wf_pad[None])
    w_slab = jnp.concatenate(planes, axis=0)

    return w0, vec_slab, w_slab


def _choose_tk(K, N, itemsize, max_tile_bytes):
    """Single K tile if it fits; otherwise the fewest equal tiles that do."""
    if K * N * itemsize <= max_tile_bytes:
        return K
    n_k = -(-(K * N * itemsize) // max_tile_bytes)
    while K % n_k:
        n_k += 1
    return K // n_k


# ----------------------------------------------------------------------------
# Forward wrapper
# ----------------------------------------------------------------------------
def mlpb_forward(x, w0, vec_slab, w_slab, *, n_classes, eps=1e-5,
                 max_w0_tile_bytes=8 << 20):
    """Fused Pallas forward of MLPB_hydration.

    x: (B, C, 96, 96).  w0/vec_slab/w_slab come from prepare_mlpb_params.
    """
    B = x.shape[0]
    xf = x.reshape(B, -1)                       # nn.Flatten (row-major, NCHW)
    K, N = w0.shape
    n_hidden = w_slab.shape[0] - 1
    n_vec = vec_slab.shape[0]

    tk = _choose_tk(K, N, jnp.dtype(w0.dtype).itemsize, max_w0_tile_bytes)
    n_k = K // tk

    in_specs = [
        pl.BlockSpec((B, tk), lambda k: (0, k)),            # activation K tile
        pl.BlockSpec((tk, N), lambda k: (k, 0)),            # first-layer weight
        pl.BlockSpec((n_vec, N), lambda k: (0, 0)),          # packed vectors
        pl.BlockSpec((n_hidden + 1, N, N), lambda k: (0, 0, 0)),  # packed weights
    ]
    out_spec = pl.BlockSpec((B, N), lambda k: (0, 0))        # lane-dense logits

    if n_k == 1:
        kernel = _make_single_step_kernel(n_hidden, eps)
        scratch = []
    else:
        kernel = _make_tiled_kernel(n_hidden, eps)
        scratch = [pltpu.VMEM((B, N), jnp.float32)]

    out = pl.pallas_call(
        kernel,
        out_shape=jax.ShapeDtypeStruct((B, N), jnp.float32),
        grid_spec=pltpu.PrefetchScalarGridSpec(
            num_scalar_prefetch=0,
            grid=(n_k,),
            in_specs=in_specs,
            out_specs=out_spec,
            scratch_shapes=scratch),
        # Single K-reduction axis; BN needs the full batch in one block, so
        # there is no useful parallel axis at this configuration.
        compiler_params=pltpu.CompilerParams(
            dimension_semantics=("arbitrary",)),
    )(xf, w0, vec_slab, w_slab)

    return out[:, :n_classes]


# ----------------------------------------------------------------------------
# Init + pure-JAX reference
# ----------------------------------------------------------------------------
def init_params(key, n_layers, n_units, n_channels, n_classes=10):
    """Deterministic parameter init (same shapes as the PyTorch module)."""
    in_features = 96 * 96 * n_channels
    layer_dims = [(in_features, n_units)]
    layer_dims += [(n_units, n_units) for _ in range(n_layers - 1)]
    layer_dims += [(n_units, n_classes)]

    params = []
    for i, (fan_in, fan_out) in enumerate(layer_dims):
        kw = jax.random.fold_in(key, 2 * i)
        kb = jax.random.fold_in(key, 2 * i + 1)
        bound = 1.0 / jnp.sqrt(fan_in)
        # stored as (K, N) == torch weight.T
        w = jax.random.uniform(kw, (fan_in, fan_out), jnp.float32, -bound, bound)
        b = jax.random.uniform(kb, (fan_out,), jnp.float32, -bound, bound)
        params.append({"w": w, "b": b})

    bn_params = []
    for i in range(n_layers - 1):
        kg = jax.random.fold_in(key, 1000 + 2 * i)
        kbeta = jax.random.fold_in(key, 1000 + 2 * i + 1)
        gamma = 1.0 + 0.1 * jax.random.normal(kg, (n_units,), jnp.float32)
        beta = 0.1 * jax.random.normal(kbeta, (n_units,), jnp.float32)
        bn_params.append({"gamma": gamma, "beta": beta})

    return params, bn_params


def mlpb_forward_ref(x, params, bn_params, eps=1e-5, first_layer_bf16=True):
    """Pure-JAX reference mirroring the kernel's numerics (bf16 first layer,
    f32 accumulation, single-pass biased batch-norm statistics)."""
    B = x.shape[0]
    h = x.reshape(B, -1)
    w0 = params[0]["w"]
    if first_layer_bf16:
        h = h.astype(jnp.bfloat16)
        w0 = w0.astype(jnp.bfloat16)
    h = jnp.maximum(
        jnp.dot(h, w0, preferred_element_type=jnp.float32) + params[0]["b"], 0.0)
    for i, bn in enumerate(bn_params):
        p = params[1 + i]
        y = jnp.dot(h, p["w"], preferred_element_type=jnp.float32) + p["b"]
        m = jnp.mean(y, axis=0, keepdims=True)
        ms = jnp.mean(y * y, axis=0, keepdims=True)
        y = (y - m) * jax.lax.rsqrt((ms - m * m) + eps) * bn["gamma"] + bn["beta"]
        h = jnp.maximum(y, 0.0)
    p = params[-1]
    return jnp.dot(h, p["w"], preferred_element_type=jnp.float32) + p["b"]


if __name__ == "__main__":
    # Small config: n_layers=3, n_units=128, n_channels=1, n_classes=10.
    # (96x96 spatial is fixed by the module definition.)
    n_layers, n_units, n_channels, n_classes = 3, 128, 1, 10
    B = 2

    key = jax.random.PRNGKey(0)
    params, bn_params = init_params(key, n_layers, n_units, n_channels,
                                    n_classes)
    x = jax.random.normal(jax.random.fold_in(key, 9999),
                          (B, n_channels, 96, 96), jnp.float32)

    # One-time packing / bf16 conversion — NOT part of the per-call path.
    w0, vec_slab, w_slab = prepare_mlpb_params(params, bn_params,
                                               first_layer_bf16=True)

    fwd = jax.jit(functools.partial(mlpb_forward, n_classes=n_classes))
    logits = jax.block_until_ready(fwd(x, w0, vec_slab, w_slab))

    ref = mlpb_forward_ref(x, params, bn_params, first_layer_bf16=True)
    assert logits.shape == (B, n_classes)
    assert jnp.allclose(logits, ref, atol=2e-3, rtol=2e-3), (
        "Pallas output mismatch vs reference")

    print("KERNEL_OK")
</pallas_src>

<mosaic_0001>
module attributes {stable_mosaic.version = 11 : i64} {
  func.func @kernel(%arg0: i32, %arg1: memref<2x9216xf32, #tpu.memory_space<vmem>>, %arg2: memref<9216x128xbf16, #tpu.memory_space<vmem>>, %arg3: memref<8x128xf32, #tpu.memory_space<vmem>>, %arg4: memref<3x128x128xf32, #tpu.memory_space<vmem>>, %arg5: memref<2x128xf32, #tpu.memory_space<vmem>>) attributes {dimension_semantics = [#tpu.dimension_semantics<arbitrary>], iteration_bounds = array<i64: 1>, scalar_prefetch = 0 : i64, scratch_operands = 0 : i64, tpu.core_type = #tpu.core_type<tc>, window_params = [{transform_indices = @transform_0, window_bounds = array<i64: 2, 9216>}, {transform_indices = @transform_1, window_bounds = array<i64: 9216, 128>}, {pipeline_mode = #tpu.pipeline_mode<synchronous>, transform_indices = @transform_2, window_bounds = array<i64: 8, 128>}, {pipeline_mode = #tpu.pipeline_mode<synchronous>, transform_indices = @transform_3, window_bounds = array<i64: 3, 128, 128>}, {pipeline_mode = #tpu.pipeline_mode<synchronous>, transform_indices = @transform_4, window_bounds = array<i64: 2, 128>}]} {
    %c0 = arith.constant 0 : index
    %c0_0 = arith.constant 0 : index
    %0 = vector.load %arg1[%c0, %c0_0] : memref<2x9216xf32, #tpu.memory_space<vmem>>, vector<2x9216xf32>
    %1 = arith.truncf %0 : vector<2x9216xf32> to vector<2x9216xbf16>
    %c0_1 = arith.constant 0 : index
    %c0_2 = arith.constant 0 : index
    %2 = vector.load %arg2[%c0_1, %c0_2] : memref<9216x128xbf16, #tpu.memory_space<vmem>>, vector<9216x128xbf16>
    %cst = arith.constant dense<0.000000e+00> : vector<2x128xf32>
    %3 = tpu.matmul %1, %2, %cst {dimension_numbers = #tpu.dot_dimension_numbers<[1], [0], [0], [1], [0, 0, 1, 1], [], []>} : vector<2x9216xbf16>, vector<9216x128xbf16>, vector<2x128xf32> -> vector<2x128xf32>
    %c0_3 = arith.constant 0 : index
    %c0_4 = arith.constant 0 : index
    %4 = vector.load %arg3[%c0_3, %c0_4] : memref<8x128xf32, #tpu.memory_space<vmem>>, vector<1x128xf32>
    %5 = vector.broadcast %4 : vector<1x128xf32> to vector<2x128xf32>
    %6 = arith.addf %3, %5 : vector<2x128xf32>
    %cst_5 = arith.constant 0.000000e+00 : f32
    %7 = vector.broadcast %cst_5 : f32 to vector<2x128xf32>
    %8 = arith.maximumf %6, %7 : vector<2x128xf32>
    %c1 = arith.constant 1 : index
    %c0_6 = arith.constant 0 : index
    %9 = vector.load %arg3[%c1, %c0_6] : memref<8x128xf32, #tpu.memory_space<vmem>>, vector<1x128xf32>
    %c2 = arith.constant 2 : index
    %c0_7 = arith.constant 0 : index
    %10 = vector.load %arg3[%c2, %c0_7] : memref<8x128xf32, #tpu.memory_space<vmem>>, vector<1x128xf32>
    %c3 = arith.constant 3 : index
    %c0_8 = arith.constant 0 : index
    %11 = vector.load %arg3[%c3, %c0_8] : memref<8x128xf32, #tpu.memory_space<vmem>>, vector<1x128xf32>
    %c0_9 = arith.constant 0 : index
    %c0_10 = arith.constant 0 : index
    %c0_11 = arith.constant 0 : index
    %12 = vector.load %arg4[%c0_9, %c0_10, %c0_11] : memref<3x128x128xf32, #tpu.memory_space<vmem>>, vector<1x128x128xf32>
    %13 = vector.shape_cast %12 : vector<1x128x128xf32> to vector<128x128xf32>
    %cst_12 = arith.constant dense<0.000000e+00> : vector<2x128xf32>
    %14 = tpu.matmul %8, %13, %cst_12 {dimension_numbers = #tpu.dot_dimension_numbers<[1], [0], [0], [1], [0, 0, 1, 1], [], []>} : vector<2x128xf32>, vector<128x128xf32>, vector<2x128xf32> -> vector<2x128xf32>
    %15 = vector.broadcast %9 : vector<1x128xf32> to vector<2x128xf32>
    %16 = arith.addf %14, %15 : vector<2x128xf32>
    %cst_13 = arith.constant dense<0.000000e+00> : vector<128xf32>
    %17 = vector.multi_reduction <add>, %16, %cst_13 [0] : vector<2x128xf32> to vector<128xf32>
    %18 = vector.shape_cast %17 : vector<128xf32> to vector<1x128xf32>
    %cst_14 = arith.constant 2.000000e+00 : f32
    %19 = vector.broadcast %cst_14 : f32 to vector<1x128xf32>
    %20 = arith.divf %18, %19 : vector<1x128xf32>
    %21 = arith.mulf %16, %16 : vector<2x128xf32>
    %cst_15 = arith.constant dense<0.000000e+00> : vector<128xf32>
    %22 = vector.multi_reduction <add>, %21, %cst_15 [0] : vector<2x128xf32> to vector<128xf32>
    %23 = vector.shape_cast %22 : vector<128xf32> to vector<1x128xf32>
    %cst_16 = arith.constant 2.000000e+00 : f32
    %24 = vector.broadcast %cst_16 : f32 to vector<1x128xf32>
    %25 = arith.divf %23, %24 : vector<1x128xf32>
    %26 = arith.mulf %20, %20 : vector<1x128xf32>
    %27 = arith.subf %25, %26 : vector<1x128xf32>
    %cst_17 = arith.constant 9.99999974E-6 : f32
    %28 = vector.broadcast %cst_17 : f32 to vector<1x128xf32>
    %29 = arith.addf %27, %28 : vector<1x128xf32>
    %30 = math.rsqrt %29 : vector<1x128xf32>
    %31 = vector.broadcast %20 : vector<1x128xf32> to vector<2x128xf32>
    %32 = arith.subf %16, %31 : vector<2x128xf32>
    %33 = vector.broadcast %30 : vector<1x128xf32> to vector<2x128xf32>
    %34 = arith.mulf %32, %33 : vector<2x128xf32>
    %35 = vector.broadcast %10 : vector<1x128xf32> to vector<2x128xf32>
    %36 = arith.mulf %34, %35 : vector<2x128xf32>
    %37 = vector.broadcast %11 : vector<1x128xf32> to vector<2x128xf32>
    %38 = arith.addf %36, %37 : vector<2x128xf32>
    %cst_18 = arith.constant 0.000000e+00 : f32
    %39 = vector.broadcast %cst_18 : f32 to vector<2x128xf32>
    %40 = arith.maximumf %38, %39 : vector<2x128xf32>
    %c4 = arith.constant 4 : index
    %c0_19 = arith.constant 0 : index
    %41 = vector.load %arg3[%c4, %c0_19] : memref<8x128xf32, #tpu.memory_space<vmem>>, vector<1x128xf32>
    %c5 = arith.constant 5 : index
    %c0_20 = arith.constant 0 : index
    %42 = vector.load %arg3[%c5, %c0_20] : memref<8x128xf32, #tpu.memory_space<vmem>>, vector<1x128xf32>
    %c6 = arith.constant 6 : index
    %c0_21 = arith.constant 0 : index
    %43 = vector.load %arg3[%c6, %c0_21] : memref<8x128xf32, #tpu.memory_space<vmem>>, vector<1x128xf32>
    %c1_22 = arith.constant 1 : index
    %c0_23 = arith.constant 0 : index
    %c0_24 = arith.constant 0 : index
    %44 = vector.load %arg4[%c1_22, %c0_23, %c0_24] : memref<3x128x128xf32, #tpu.memory_space<vmem>>, vector<1x128x128xf32>
    %45 = vector.shape_cast %44 : vector<1x128x128xf32> to vector<128x128xf32>
    %cst_25 = arith.constant dense<0.000000e+00> : vector<2x128xf32>
    %46 = tpu.matmul %40, %45, %cst_25 {dimension_numbers = #tpu.dot_dimension_numbers<[1], [0], [0], [1], [0, 0, 1, 1], [], []>} : vector<2x128xf32>, vector<128x128xf32>, vector<2x128xf32> -> vector<2x128xf32>
    %47 = vector.broadcast %41 : vector<1x128xf32> to vector<2x128xf32>
    %48 = arith.addf %46, %47 : vector<2x128xf32>
    %cst_26 = arith.constant dense<0.000000e+00> : vector<128xf32>
    %49 = vector.multi_reduction <add>, %48, %cst_26 [0] : vector<2x128xf32> to vector<128xf32>
    %50 = vector.shape_cast %49 : vector<128xf32> to vector<1x128xf32>
    %cst_27 = arith.constant 2.000000e+00 : f32
    %51 = vector.broadcast %cst_27 : f32 to vector<1x128xf32>
    %52 = arith.divf %50, %51 : vector<1x128xf32>
    %53 = arith.mulf %48, %48 : vector<2x128xf32>
    %cst_28 = arith.constant dense<0.000000e+00> : vector<128xf32>
    %54 = vector.multi_reduction <add>, %53, %cst_28 [0] : vector<2x128xf32> to vector<128xf32>
    %55 = vector.shape_cast %54 : vector<128xf32> to vector<1x128xf32>
    %cst_29 = arith.constant 2.000000e+00 : f32
    %56 = vector.broadcast %cst_29 : f32 to vector<1x128xf32>
    %57 = arith.divf %55, %56 : vector<1x128xf32>
    %58 = arith.mulf %52, %52 : vector<1x128xf32>
    %59 = arith.subf %57, %58 : vector<1x128xf32>
    %cst_30 = arith.constant 9.99999974E-6 : f32
    %60 = vector.broadcast %cst_30 : f32 to vector<1x128xf32>
    %61 = arith.addf %59, %60 : vector<1x128xf32>
    %62 = math.rsqrt %61 : vector<1x128xf32>
    %63 = vector.broadcast %52 : vector<1x128xf32> to vector<2x128xf32>
    %64 = arith.subf %48, %63 : vector<2x128xf32>
    %65 = vector.broadcast %62 : vector<1x128xf32> to vector<2x128xf32>
    %66 = arith.mulf %64, %65 : vector<2x128xf32>
    %67 = vector.broadcast %42 : vector<1x128xf32> to vector<2x128xf32>
    %68 = arith.mulf %66, %67 : vector<2x128xf32>
    %69 = vector.broadcast %43 : vector<1x128xf32> to vector<2x128xf32>
    %70 = arith.addf %68, %69 : vector<2x128xf32>
    %cst_31 = arith.constant 0.000000e+00 : f32
    %71 = vector.broadcast %cst_31 : f32 to vector<2x128xf32>
    %72 = arith.maximumf %70, %71 : vector<2x128xf32>
    %c7 = arith.constant 7 : index
    %c0_32 = arith.constant 0 : index
    %73 = vector.load %arg3[%c7, %c0_32] : memref<8x128xf32, #tpu.memory_space<vmem>>, vector<1x128xf32>
    %c2_33 = arith.constant 2 : index
    %c0_34 = arith.constant 0 : index
    %c0_35 = arith.constant 0 : index
    %74 = vector.load %arg4[%c2_33, %c0_34, %c0_35] : memref<3x128x128xf32, #tpu.memory_space<vmem>>, vector<1x128x128xf32>
    %75 = vector.shape_cast %74 : vector<1x128x128xf32> to vector<128x128xf32>
    %cst_36 = arith.constant dense<0.000000e+00> : vector<2x128xf32>
    %76 = tpu.matmul %72, %75, %cst_36 {dimension_numbers = #tpu.dot_dimension_numbers<[1], [0], [0], [1], [0, 0, 1, 1], [], []>} : vector<2x128xf32>, vector<128x128xf32>, vector<2x128xf32> -> vector<2x128xf32>
    %77 = vector.broadcast %73 : vector<1x128xf32> to vector<2x128xf32>
    %78 = arith.addf %76, %77 : vector<2x128xf32>
    %c0_37 = arith.constant 0 : index
    %c0_38 = arith.constant 0 : index
    %79 = vector.load %arg5[%c0_37, %c0_38] : memref<2x128xf32, #tpu.memory_space<vmem>>, vector<2x128xf32>
    tpu.vector_store %arg5[%c0_37, %c0_38], %78 {strides = array<i32>} : memref<2x128xf32, #tpu.memory_space<vmem>>, vector<2x128xf32>,
    return
  }
  func.func @transform_0(%arg0: i32) -> (i32, i32) {
    %c0_i32 = arith.constant 0 : i32
    %c0_i32_0 = arith.constant 0 : i32
    return %c0_i32, %arg0 : i32, i32
  }
  func.func @transform_1(%arg0: i32) -> (i32, i32) {
    %c0_i32 = arith.constant 0 : i32
    %c0_i32_0 = arith.constant 0 : i32
    return %arg0, %c0_i32 : i32, i32
  }
  func.func @transform_2(%arg0: i32) -> (i32, i32) {
    %c0_i32 = arith.constant 0 : i32
    %c0_i32_0 = arith.constant 0 : i32
    %c0_i32_1 = arith.constant 0 : i32
    return %c0_i32, %c0_i32_0 : i32, i32
  }
  func.func @transform_3(%arg0: i32) -> (i32, i32, i32) {
    %c0_i32 = arith.constant 0 : i32
    %c0_i32_0 = arith.constant 0 : i32
    %c0_i32_1 = arith.constant 0 : i32
    %c0_i32_2 = arith.constant 0 : i32
    return %c0_i32, %c0_i32_0, %c0_i32_1 : i32, i32, i32
  }
  func.func @transform_4(%arg0: i32) -> (i32, i32) {
    %c0_i32 = arith.constant 0 : i32
    %c0_i32_0 = arith.constant 0 : i32
    %c0_i32_1 = arith.constant 0 : i32
    return %c0_i32, %c0_i32_0 : i32, i32
  }
}

</mosaic_0001>

<llo_original>
// kernel: mlpb_forward.1
$region0: #{mlpb_forward.1}
  #allocation0 [shape = 'u32[]', space=smem, size = 0x4, offset = 0x4, fixed_abs, tag = 'smem constant byte address 0x4 - core index']
  #allocation1 [shape = 'u32[144,128]{1,0:T(1,128)}', space=vmem, size = 0x12000, scoped, tag = 'internal scratch']
  %s0 = inlined_call_operand.vmem [shape: f32[2,9216], index: 0, kind: input, shape index: {}]
  %s1 = inlined_call_operand.hbm [shape: bf16[9216,128], index: 1, kind: input, shape index: {}]
  %s2 = inlined_call_operand.hbm [shape: f32[8,128], index: 2, kind: input, shape index: {}]
  %s3 = inlined_call_operand.hbm [shape: f32[3,128,128], index: 3, kind: input, shape index: {}]
  %s4 = inlined_call_operand.hbm [shape: f32[2,128], index: 4, kind: output, shape index: {}]
  %s5 = sld [smem:[#allocation0]]
  $region38: #{mlpb_forward.1} parent=0
    _
  %s7 = ssub.s32 1, %s5
  %s8 = scalar_select 0, %s7, %s5
  $region1: #{mlpb_forward.1} parent=0
    #allocation2 [shape = 'u8[2359296]{0}', space=vmem, size = 0x240000, scoped, tag = 'input window, operand 1, single buffered']
    #allocation3 [shape = 's32[1]{0}', space=sflag, size = 0x4, scoped, tag = 'scoped memory for mlpb_forward.1']
    #allocation4 [shape = 's32[1]{0}', space=sflag, size = 0x4, scoped, tag = 'scoped memory for mlpb_forward.1']
    #allocation5 [shape = 'u8[4096]{0}', space=vmem, size = 0x1000, scoped, tag = 'input window, operand 2, single buffered']
    #allocation6 [shape = 's32[1]{0}', space=sflag, size = 0x4, scoped, tag = 'scoped memory for mlpb_forward.1']
    #allocation7 [shape = 'u8[196608]{0}', space=vmem, size = 0x30000, scoped, tag = 'input window, operand 3, single buffered']
    #allocation8 [shape = 'u8[1024]{0}', space=vmem, size = 0x400, scoped, tag = 'output window, operand 0, single buffered']
    %9 = vsyncpa [#allocation3], 0
    %10 = vsyncpa [#allocation6], 0
    %11 = vsyncpa [#allocation4], 0
    // Predicated region
    $region2: #{mlpb_forward.1} parent=1 // pred_check
      _
    $region3: #{mlpb_forward.1} parent=1 // pred_check_branch
      %13 = sbr.rel (0) target = $region5
    $region4: #{mlpb_forward.1} parent=1 // pred_region
      _
    $region5: #{mlpb_forward.1} parent=1 // pred_fallthru
      _
    // Predicated region
    $region6: #{mlpb_forward.1} parent=1 // pred_check
      _
    $region7: #{mlpb_forward.1} parent=1 // pred_check_branch
      %15 = sbr.rel (0) target = $region9
    $region8: #{mlpb_forward.1} parent=1 // pred_region
      %s17 = ssub.s32 73728, 73728
      %18 = vsyncadd [#allocation3], %s17
      %s19 = sshll.u32 [#allocation2], 4
      %s20 = int_to_ptr.vmem [resolvable:$true] %s19
      %25 = dma.hbm_to_vmem [thread:$0]  %s1, 73728, %s20, [#allocation3], 64, 64, 4
    $region9: #{mlpb_forward.1} parent=1 // pred_fallthru
      _
    // Predicated region
    $region10: #{mlpb_forward.1} parent=1 // pred_check
      _
    $region11: #{mlpb_forward.1} parent=1 // pred_check_branch
      %27 = sbr.rel (0) target = $region13
    $region12: #{mlpb_forward.1} parent=1 // pred_region
      %s29 = ssub.s32 128, 128
      %30 = vsyncadd [#allocation6], %s29
      %s32 = sshll.u32 [#allocation5], 4
      %s33 = int_to_ptr.vmem [resolvable:$true] %s32
      %35 = dma.hbm_to_vmem [thread:$0]  %s2, 128, %s33, [#allocation6]
    $region13: #{mlpb_forward.1} parent=1 // pred_fallthru
      _
    // Predicated region
    $region14: #{mlpb_forward.1} parent=1 // pred_check
      _
    $region15: #{mlpb_forward.1} parent=1 // pred_check_branch
      %37 = sbr.rel (0) target = $region17
    $region16: #{mlpb_forward.1} parent=1 // pred_region
      %s39 = ssub.s32 6144, 6144
      %40 = vsyncadd [#allocation6], %s39
      %s41 = sshll.u32 [#allocation7], 4
      %s42 = int_to_ptr.vmem [resolvable:$true] %s41
      %47 = dma.hbm_to_vmem [thread:$0]  %s3, 6144, %s42, [#allocation6], 128, 128, 8
    $region17: #{mlpb_forward.1} parent=1 // pred_fallthru
      _
    // Predicated region
    $region18: #{mlpb_forward.1} parent=1 // pred_check
      _
    $region19: #{mlpb_forward.1} parent=1 // pred_check_branch
      %49 = sbr.rel (0) target = $region21
    $region20: #{mlpb_forward.1} parent=1 // pred_region
      %50 = dma.done [#allocation3], 73728
    $region21: #{mlpb_forward.1} parent=1 // pred_fallthru
      _
    // Predicated region
    $region22: #{mlpb_forward.1} parent=1 // pred_check
      _
    $region23: #{mlpb_forward.1} parent=1 // pred_check_branch
      %52 = sbr.rel (0) target = $region25
    $region24: #{mlpb_forward.1} parent=1 // pred_region
      %53 = dma.done [#allocation6], 128
    $region25: #{mlpb_forward.1} parent=1 // pred_fallthru
      _
    // Predicated region
    $region26: #{mlpb_forward.1} parent=1 // pred_check
      _
    $region27: #{mlpb_forward.1} parent=1 // pred_check_branch
      %55 = sbr.rel (0) target = $region29
    $region28: #{mlpb_forward.1} parent=1 // pred_region
      %56 = dma.done [#allocation6], 6144
    $region29: #{mlpb_forward.1} parent=1 // pred_fallthru
      _
    %v58 = vld [vmem:[%s0] sm:$0xff]
    %v59 = vld [vmem:[%s0 + $0x8] sm:$0xff]
    %v60 = vld [vmem:[%s0 + $0x10] sm:$0xff]
    %v61 = vld [vmem:[%s0 + $0x18] sm:$0xff]
    %v62 = vld [vmem:[%s0 + $0x20] sm:$0xff]
    %v63 = vld [vmem:[%s0 + $0x28] sm:$0xff]
    %v64 = vld [vmem:[%s0 + $0x30] sm:$0xff]
    %v65 = vld [vmem:[%s0 + $0x38] sm:$0xff]
    %v66 = vld [vmem:[%s0 + $0x40] sm:$0xff]
    %v67 = vld [vmem:[%s0 + $0x48] sm:$0xff]
    %v68 = vld [vmem:[%s0 + $0x50] sm:$0xff]
    %v69 = vld [vmem:[%s0 + $0x58] sm:$0xff]
    %v70 = vld [vmem:[%s0 + $0x60] sm:$0xff]
    %v71 = vld [vmem:[%s0 + $0x68] sm:$0xff]
    %v72 = vld [vmem:[%s0 + $0x70] sm:$0xff]
    %v73 = vld [vmem:[%s0 + $0x78] sm:$0xff]
    %v74 = vld [vmem:[%s0 + $0x80] sm:$0xff]
    %v75 = vld [vmem:[%s0 + $0x88] sm:$0xff]
    %v94 = vcombine.high %v58, %v58
    %v96 = vunpack.c.l.s4 1983009808
    %v97 = vunpack.c.0.s8 %v96
    %v98 = vlaneseq
    %v99 = vshrl.u32 %v98, 7
    %v100 = vsub.s32 %v97, %v99
    %v101 = vrot.slane %v58, %v100
    %v103 = vunpack.c.l.s4 1983009808
    %v104 = vunpack.c.0.s8 %v103
    %v105 = vlaneseq
    %v106 = vshrl.u32 %v105, 7
    %v107 = vsub.s32 %v104, %v106
    %v108 = vrot.slane %v94, %v107
    %v109 = vcombine.high %v101, %v101
    %v110 = vcombine.high %v108, %v108
    %v111 = vcombine.high %v59, %v59
    %v113 = vunpack.c.l.s4 1983009808
    %v114 = vunpack.c.0.s8 %v113
    %v115 = vlaneseq
    %v116 = vshrl.u32 %v115, 7
    %v117 = vsub.s32 %v114, %v116
    %v118 = vrot.slane %v59, %v117
    %v120 = vunpack.c.l.s4 1983009808
    %v121 = vunpack.c.0.s8 %v120
    %v122 = vlaneseq
    %v123 = vshrl.u32 %v122, 7
    %v124 = vsub.s32 %v121, %v123
    %v125 = vrot.slane %v111, %v124
    %v126 = vcombine.high %v118, %v118
    %v127 = vcombine.high %v125, %v125
    %v128 = vcombine.high %v60, %v60
    %v130 = vunpack.c.l.s4 1983009808
    %v131 = vunpack.c.0.s8 %v130
    %v132 = vlaneseq
    %v133 = vshrl.u32 %v132, 7
    %v134 = vsub.s32 %v131, %v133
    %v135 = vrot.slane %v60, %v134
    %v137 = vunpack.c.l.s4 1983009808
    %v138 = vunpack.c.0.s8 %v137
    %v139 = vlaneseq
    %v140 = vshrl.u32 %v139, 7
    %v141 = vsub.s32 %v138, %v140
    %v142 = vrot.slane %v128, %v141
    %v143 = vcombine.high %v135, %v135
    %v144 = vcombine.high %v142, %v142
    %v145 = vcombine.high %v61, %v61
    %v147 = vunpack.c.l.s4 1983009808
    %v148 = vunpack.c.0.s8 %v147
    %v149 = vlaneseq
    %v150 = vshrl.u32 %v149, 7
    %v151 = vsub.s32 %v148, %v150
    %v152 = vrot.slane %v61, %v151
    %v154 = vunpack.c.l.s4 1983009808
    %v155 = vunpack.c.0.s8 %v154
    %v156 = vlaneseq
    %v157 = vshrl.u32 %v156, 7
    %v158 = vsub.s32 %v155, %v157
    %v159 = vrot.slane %v145, %v158
    %v160 = vcombine.high %v152, %v152
    %v161 = vcombine.high %v159, %v159
    %v162 = vcombine.high %v62, %v62
    %v164 = vunpack.c.l.s4 1983009808
    %v165 = vunpack.c.0.s8 %v164
    %v166 = vlaneseq
    %v167 = vshrl.u32 %v166, 7
    %v168 = vsub.s32 %v165, %v167
    %v169 = vrot.slane %v62, %v168
    %v171 = vunpack.c.l.s4 1983009808
    %v172 = vunpack.c.0.s8 %v171
    %v173 = vlaneseq
    %v174 = vshrl.u32 %v173, 7
    %v175 = vsub.s32 %v172, %v174
    %v176 = vrot.slane %v162, %v175
    %v177 = vcombine.high %v169, %v169
    %v178 = vcombine.high %v176, %v176
    %v179 = vcombine.high %v63, %v63
    %v181 = vunpack.c.l.s4 1983009808
    %v182 = vunpack.c.0.s8 %v181
    %v183 = vlaneseq
    %v184 = vshrl.u32 %v183, 7
    %v185 = vsub.s32 %v182, %v184
    %v186 = vrot.slane %v63, %v185
    %v188 = vunpack.c.l.s4 1983009808
    %v189 = vunpack.c.0.s8 %v188
    %v190 = vlaneseq
    %v191 = vshrl.u32 %v190, 7
    %v192 = vsub.s32 %v189, %v191
    %v193 = vrot.slane %v179, %v192
    %v194 = vcombine.high %v186, %v186
    %v195 = vcombine.high %v193, %v193
    %v196 = vcombine.high %v64, %v64
    %v198 = vunpack.c.l.s4 1983009808
    %v199 = vunpack.c.0.s8 %v198
    %v200 = vlaneseq
    %v201 = vshrl.u32 %v200, 7
    %v202 = vsub.s32 %v199, %v201
    %v203 = vrot.slane %v64, %v202
    %v205 = vunpack.c.l.s4 1983009808
    %v206 = vunpack.c.0.s8 %v205
    %v207 = vlaneseq
    %v208 = vshrl.u32 %v207, 7
    %v209 = vsub.s32 %v206, %v208
    %v210 = vrot.slane %v196, %v209
    %v211 = vcombine.high %v203, %v203
    %v212 = vcombine.high %v210, %v210
    %v213 = vcombine.high %v65, %v65
    %v215 = vunpack.c.l.s4 1983009808
    %v216 = vunpack.c.0.s8 %v215
    %v217 = vlaneseq
    %v218 = vshrl.u32 %v217, 7
    %v219 = vsub.s32 %v216, %v218
    %v220 = vrot.slane %v65, %v219
    %v222 = vunpack.c.l.s4 1983009808
    %v223 = vunpack.c.0.s8 %v222
    %v224 = vlaneseq
    %v225 = vshrl.u32 %v224, 7
    %v226 = vsub.s32 %v223, %v225
    %v227 = vrot.slane %v213, %v226
    %v228 = vcombine.high %v220, %v220
    %v229 = vcombine.high %v227, %v227
    %v230 = vcombine.high %v66, %v66
    %v232 = vunpack.c.l.s4 1983009808
    %v233 = vunpack.c.0.s8 %v232
    %v234 = vlaneseq
    %v235 = vshrl.u32 %v234, 7
    %v236 = vsub.s32 %v233, %v235
    %v237 = vrot.slane %v66, %v236
    %v239 = vunpack.c.l.s4 1983009808
    %v240 = vunpack.c.0.s8 %v239
    %v241 = vlaneseq
    %v242 = vshrl.u32 %v241, 7
    %v243 = vsub.s32 %v240, %v242
    %v244 = vrot.slane %v230, %v243
    %v245 = vcombine.high %v237, %v237
    %v246 = vcombine.high %v244, %v244
    %v247 = vcombine.high %v67, %v67
    %v249 = vunpack.c.l.s4 1983009808
    %v250 = vunpack.c.0.s8 %v249
    %v251 = vlaneseq
    %v252 = vshrl.u32 %v251, 7
    %v253 = vsub.s32 %v250, %v252
    %v254 = vrot.slane %v67, %v253
    %v256 = vunpack.c.l.s4 1983009808
    %v257 = vunpack.c.0.s8 %v256
    %v258 = vlaneseq
    %v259 = vshrl.u32 %v258, 7
    %v260 = vsub.s32 %v257, %v259
    %v261 = vrot.slane %v247, %v260
    %v262 = vcombine.high %v254, %v254
    %v263 = vcombine.high %v261, %v261
    %v264 = vcombine.high %v68, %v68
    %v266 = vunpack.c.l.s4 1983009808
    %v267 = vunpack.c.0.s8 %v266
    %v268 = vlaneseq
    %v269 = vshrl.u32 %v268, 7
    %v270 = vsub.s32 %v267, %v269
    %v271 = vrot.slane %v68, %v270
    %v273 = vunpack.c.l.s4 1983009808
    %v274 = vunpack.c.0.s8 %v273
    %v275 = vlaneseq
    %v276 = vshrl.u32 %v275, 7
    %v277 = vsub.s32 %v274, %v276
    %v278 = vrot.slane %v264, %v277
    %v279 = vcombine.high %v271, %v271
    %v280 = vcombine.high %v278, %v278
    %v281 = vcombine.high %v69, %v69
    %v283 = vunpack.c.l.s4 1983009808
    %v284 = vunpack.c.0.s8 %v283
    %v285 = vlaneseq
    %v286 = vshrl.u32 %v285, 7
    %v287 = vsub.s32 %v284, %v286
    %v288 = vrot.slane %v69, %v287
    %v290 = vunpack.c.l.s4 1983009808
    %v291 = vunpack.c.0.s8 %v290
    %v292 = vlaneseq
    %v293 = vshrl.u32 %v292, 7
    %v294 = vsub.s32 %v291, %v293
    %v295 = vrot.slane %v281, %v294
    %v296 = vcombine.high %v288, %v288
    %v297 = vcombine.high %v295, %v295
    %v298 = vcombine.high %v70, %v70
    %v300 = vunpack.c.l.s4 1983009808
    %v301 = vunpack.c.0.s8 %v300
    %v302 = vlaneseq
    %v303 = vshrl.u32 %v302, 7
    %v304 = vsub.s32 %v301, %v303
    %v305 = vrot.slane %v70, %v304
    %v307 = vunpack.c.l.s4 1983009808
    %v308 = vunpack.c.0.s8 %v307
    %v309 = vlaneseq
    %v310 = vshrl.u32 %v309, 7
    %v311 = vsub.s32 %v308, %v310
    %v312 = vrot.slane %v298, %v311
    %v313 = vcombine.high %v305, %v305
    %v314 = vcombine.high %v312, %v312
    %v315 = vcombine.high %v71, %v71
    %v317 = vunpack.c.l.s4 1983009808
    %v318 = vunpack.c.0.s8 %v317
    %v319 = vlaneseq
    %v320 = vshrl.u32 %v319, 7
    %v321 = vsub.s32 %v318, %v320
    %v322 = vrot.slane %v71, %v321
    %v324 = vunpack.c.l.s4 1983009808
    %v325 = vunpack.c.0.s8 %v324
    %v326 = vlaneseq
    %v327 = vshrl.u32 %v326, 7
    %v328 = vsub.s32 %v325, %v327
    %v329 = vrot.slane %v315, %v328
    %v330 = vcombine.high %v322, %v322
    %v331 = vcombine.high %v329, %v329
    %v332 = vcombine.high %v72, %v72
    %v334 = vunpack.c.l.s4 1983009808
    %v335 = vunpack.c.0.s8 %v334
    %v336 = vlaneseq
    %v337 = vshrl.u32 %v336, 7
    %v338 = vsub.s32 %v335, %v337
    %v339 = vrot.slane %v72, %v338
    %v341 = vunpack.c.l.s4 1983009808
    %v342 = vunpack.c.0.s8 %v341
    %v343 = vlaneseq
    %v344 = vshrl.u32 %v343, 7
    %v345 = vsub.s32 %v342, %v344
    %v346 = vrot.slane %v332, %v345
    %v347 = vcombine.high %v339, %v339
    %v348 = vcombine.high %v346, %v346
    %v349 = vcombine.high %v73, %v73
    %v351 = vunpack.c.l.s4 1983009808
    %v352 = vunpack.c.0.s8 %v351
    %v353 = vlaneseq
    %v354 = vshrl.u32 %v353, 7
    %v355 = vsub.s32 %v352, %v354
    %v356 = vrot.slane %v73, %v355
    %v358 = vunpack.c.l.s4 1983009808
    %v359 = vunpack.c.0.s8 %v358
    %v360 = vlaneseq
    %v361 = vshrl.u32 %v360, 7
    %v362 = vsub.s32 %v359, %v361
    %v363 = vrot.slane %v349, %v362
    %v364 = vcombine.high %v356, %v356
    %v365 = vcombine.high %v363, %v363
    %v366 = vcombine.high %v74, %v74
    %v368 = vunpack.c.l.s4 1983009808
    %v369 = vunpack.c.0.s8 %v368
    %v370 = vlaneseq
    %v371 = vshrl.u32 %v370, 7
    %v372 = vsub.s32 %v369, %v371
    %v373 = vrot.slane %v74, %v372
    %v375 = vunpack.c.l.s4 1983009808
    %v376 = vunpack.c.0.s8 %v375
    %v377 = vlaneseq
    %v378 = vshrl.u32 %v377, 7
    %v379 = vsub.s32 %v376, %v378
    %v380 = vrot.slane %v366, %v379
    %v381 = vcombine.high %v373, %v373
    %v382 = vcombine.high %v380, %v380
    %v383 = vcombine.high %v75, %v75
    %v385 = vunpack.c.l.s4 1983009808
    %v386 = vunpack.c.0.s8 %v385
    %v387 = vlaneseq
    %v388 = vshrl.u32 %v387, 7
    %v389 = vsub.s32 %v386, %v388
    %v390 = vrot.slane %v75, %v389
    %v392 = vunpack.c.l.s4 1983009808
    %v393 = vunpack.c.0.s8 %v392
    %v394 = vlaneseq
    %v395 = vshrl.u32 %v394, 7
    %v396 = vsub.s32 %v393, %v395
    %v397 = vrot.slane %v383, %v396
    %v398 = vcombine.high %v390, %v390
    %v399 = vcombine.high %v397, %v397
    %v472 = vpack.c.bf16 %v101, %v101
    %v473 = vpack.c.bf16 %v109, %v109
    %v474 = vpack.c.bf16 %v108, %v108
    %v475 = vpack.c.bf16 %v110, %v110
    %v476 = vpack.c.bf16 %v118, %v118
    %v477 = vpack.c.bf16 %v126, %v126
    %v478 = vpack.c.bf16 %v125, %v125
    %v479 = vpack.c.bf16 %v127, %v127
    %v480 = vpack.c.bf16 %v135, %v135
    %v481 = vpack.c.bf16 %v143, %v143
    %v482 = vpack.c.bf16 %v142, %v142
    %v483 = vpack.c.bf16 %v144, %v144
    %v484 = vpack.c.bf16 %v152, %v152
    %v485 = vpack.c.bf16 %v160, %v160
    %v486 = vpack.c.bf16 %v159, %v159
    %v487 = vpack.c.bf16 %v161, %v161
    %v488 = vpack.c.bf16 %v169, %v169
    %v489 = vpack.c.bf16 %v177, %v177
    %v490 = vpack.c.bf16 %v176, %v176
    %v491 = vpack.c.bf16 %v178, %v178
    %v492 = vpack.c.bf16 %v186, %v186
    %v493 = vpack.c.bf16 %v194, %v194
    %v494 = vpack.c.bf16 %v193, %v193
    %v495 = vpack.c.bf16 %v195, %v195
    %v496 = vpack.c.bf16 %v203, %v203
    %v497 = vpack.c.bf16 %v211, %v211
    %v498 = vpack.c.bf16 %v210, %v210
    %v499 = vpack.c.bf16 %v212, %v212
    %v500 = vpack.c.bf16 %v220, %v220
    %v501 = vpack.c.bf16 %v228, %v228
    %v502 = vpack.c.bf16 %v227, %v227
    %v503 = vpack.c.bf16 %v229, %v229
    %v504 = vpack.c.bf16 %v237, %v237
    %v505 = vpack.c.bf16 %v245, %v245
    %v506 = vpack.c.bf16 %v244, %v244
    %v507 = vpack.c.bf16 %v246, %v246
    %v508 = vpack.c.bf16 %v254, %v254
    %v509 = vpack.c.bf16 %v262, %v262
    %v510 = vpack.c.bf16 %v261, %v261
    %v511 = vpack.c.bf16 %v263, %v263
    %v512 = vpack.c.bf16 %v271, %v271
    %v513 = vpack.c.bf16 %v279, %v279
    %v514 = vpack.c.bf16 %v278, %v278
    %v515 = vpack.c.bf16 %v280, %v280
    %v516 = vpack.c.bf16 %v288, %v288
    %v517 = vpack.c.bf16 %v296, %v296
    %v518 = vpack.c.bf16 %v295, %v295
    %v519 = vpack.c.bf16 %v297, %v297
    %v520 = vpack.c.bf16 %v305, %v305
    %v521 = vpack.c.bf16 %v313, %v313
    %v522 = vpack.c.bf16 %v312, %v312
    %v523 = vpack.c.bf16 %v314, %v314
    %v524 = vpack.c.bf16 %v322, %v322
    %v525 = vpack.c.bf16 %v330, %v330
    %v526 = vpack.c.bf16 %v329, %v329
    %v527 = vpack.c.bf16 %v331, %v331
    %v528 = vpack.c.bf16 %v339, %v339
    %v529 = vpack.c.bf16 %v347, %v347
    %v530 = vpack.c.bf16 %v346, %v346
    %v531 = vpack.c.bf16 %v348, %v348
    %v532 = vpack.c.bf16 %v356, %v356
    %v533 = vpack.c.bf16 %v364, %v364
    %v534 = vpack.c.bf16 %v363, %v363
    %v535 = vpack.c.bf16 %v365, %v365
    %v536 = vpack.c.bf16 %v373, %v373
    %v537 = vpack.c.bf16 %v381, %v381
    %v538 = vpack.c.bf16 %v380, %v380
    %v539 = vpack.c.bf16 %v382, %v382
    %v540 = vpack.c.bf16 %v390, %v390
    %v541 = vpack.c.bf16 %v398, %v398
    %v542 = vpack.c.bf16 %v397, %v397
    %v543 = vpack.c.bf16 %v399, %v399
    %v544 = vld [vmem:[#allocation2] sm:$0xf]
    %v545 = vld [vmem:[#allocation2 + $0x4] sm:$0xf]
    %v546 = vld [vmem:[#allocation2 + $0x8] sm:$0xf]
    %v547 = vld [vmem:[#allocation2 + $0xc] sm:$0xf]
    %v548 = vld [vmem:[#allocation2 + $0x10] sm:$0xf]
    %v549 = vld [vmem:[#allocation2 + $0x14] sm:$0xf]
    %v550 = vld [vmem:[#allocation2 + $0x18] sm:$0xf]
    %v551 = vld [vmem:[#allocation2 + $0x1c] sm:$0xf]
    %v552 = vld [vmem:[#allocation2 + $0x20] sm:$0xf]
    %v553 = vld [vmem:[#allocation2 + $0x24] sm:$0xf]
    %v554 = vld [vmem:[#allocation2 + $0x28] sm:$0xf]
    %v555 = vld [vmem:[#allocation2 + $0x2c] sm:$0xf]
    %v556 = vld [vmem:[#allocation2 + $0x30] sm:$0xf]
    %v557 = vld [vmem:[#allocation2 + $0x34] sm:$0xf]
    %v558 = vld [vmem:[#allocation2 + $0x38] sm:$0xf]
    %v559 = vld [vmem:[#allocation2 + $0x3c] sm:$0xf]
    %v560 = vld [vmem:[#allocation2 + $0x40] sm:$0xf]
    %v561 = vld [vmem:[#allocation2 + $0x44] sm:$0xf]
    %v562 = vld [vmem:[#allocation2 + $0x48] sm:$0xf]
    %v563 = vld [vmem:[#allocation2 + $0x4c] sm:$0xf]
    %v564 = vld [vmem:[#allocation2 + $0x50] sm:$0xf]
    %v565 = vld [vmem:[#allocation2 + $0x54] sm:$0xf]
    %v566 = vld [vmem:[#allocation2 + $0x58] sm:$0xf]
    %v567 = vld [vmem:[#allocation2 + $0x5c] sm:$0xf]
    %v568 = vld [vmem:[#allocation2 + $0x60] sm:$0xf]
    %v569 = vld [vmem:[#allocation2 + $0x64] sm:$0xf]
    %v570 = vld [vmem:[#allocation2 + $0x68] sm:$0xf]
    %v571 = vld [vmem:[#allocation2 + $0x6c] sm:$0xf]
    %v572 = vld [vmem:[#allocation2 + $0x70] sm:$0xf]
    %v573 = vld [vmem:[#allocation2 + $0x74] sm:$0xf]
    %v574 = vld [vmem:[#allocation2 + $0x78] sm:$0xf]
    %v575 = vld [vmem:[#allocation2 + $0x7c] sm:$0xf]
    %v576 = vld [vmem:[#allocation2 + $0x80] sm:$0xf]
    %v577 = vld [vmem:[#allocation2 + $0x84] sm:$0xf]
    %v578 = vld [vmem:[#allocation2 + $0x88] sm:$0xf]
    %v579 = vld [vmem:[#allocation2 + $0x8c] sm:$0xf]
    %v580 = vld [vmem:[#allocation2 + $0x90] sm:$0xf]
    %v581 = vld [vmem:[#allocation2 + $0x94] sm:$0xf]
    %v582 = vld [vmem:[#allocation2 + $0x98] sm:$0xf]
    %v583 = vld [vmem:[#allocation2 + $0x9c] sm:$0xf]
    %v584 = vld [vmem:[#allocation2 + $0xa0] sm:$0xf]
    %v585 = vld [vmem:[#allocation2 + $0xa4] sm:$0xf]
    %v586 = vld [vmem:[#allocation2 + $0xa8] sm:$0xf]
    %v587 = vld [vmem:[#allocation2 + $0xac] sm:$0xf]
    %v588 = vld [vmem:[#allocation2 + $0xb0] sm:$0xf]
    %v589 = vld [vmem:[#allocation2 + $0xb4] sm:$0xf]
    %v590 = vld [vmem:[#allocation2 + $0xb8] sm:$0xf]
    %v591 = vld [vmem:[#allocation2 + $0xbc] sm:$0xf]
    %v592 = vld [vmem:[#allocation2 + $0xc0] sm:$0xf]
    %v593 = vld [vmem:[#allocation2 + $0xc4] sm:$0xf]
    %v594 = vld [vmem:[#allocation2 + $0xc8] sm:$0xf]
    %v595 = vld [vmem:[#allocation2 + $0xcc] sm:$0xf]
    %v596 = vld [vmem:[#allocation2 + $0xd0] sm:$0xf]
    %v597 = vld [vmem:[#allocation2 + $0xd4] sm:$0xf]
    %v598 = vld [vmem:[#allocation2 + $0xd8] sm:$0xf]
    %v599 = vld [vmem:[#allocation2 + $0xdc] sm:$0xf]
    %v600 = vld [vmem:[#allocation2 + $0xe0] sm:$0xf]
    %v601 = vld [vmem:[#allocation2 + $0xe4] sm:$0xf]
    %v602 = vld [vmem:[#allocation2 + $0xe8] sm:$0xf]
    %v603 = vld [vmem:[#allocation2 + $0xec] sm:$0xf]
    %v604 = vld [vmem:[#allocation2 + $0xf0] sm:$0xf]
    %v605 = vld [vmem:[#allocation2 + $0xf4] sm:$0xf]
    %v606 = vld [vmem:[#allocation2 + $0xf8] sm:$0xf]
    %v607 = vld [vmem:[#allocation2 + $0xfc] sm:$0xf]
    %v608 = vld [vmem:[#allocation2 + $0x100] sm:$0xf]
    %v609 = vld [vmem:[#allocation2 + $0x104] sm:$0xf]
    %v610 = vld [vmem:[#allocation2 + $0x108] sm:$0xf]
    %v611 = vld [vmem:[#allocation2 + $0x10c] sm:$0xf]
    %v612 = vld [vmem:[#allocation2 + $0x110] sm:$0xf]
    %v613 = vld [vmem:[#allocation2 + $0x114] sm:$0xf]
    %v614 = vld [vmem:[#allocation2 + $0x118] sm:$0xf]
    %v615 = vld [vmem:[#allocation2 + $0x11c] sm:$0xf]
    %v616 = vld [vmem:[#allocation2 + $0x120] sm:$0xf]
    %v617 = vld [vmem:[#allocation2 + $0x124] sm:$0xf]
    %v618 = vld [vmem:[#allocation2 + $0x128] sm:$0xf]
    %v619 = vld [vmem:[#allocation2 + $0x12c] sm:$0xf]
    %v620 = vld [vmem:[#allocation2 + $0x130] sm:$0xf]
    %v621 = vld [vmem:[#allocation2 + $0x134] sm:$0xf]
    %v622 = vld [vmem:[#allocation2 + $0x138] sm:$0xf]
    %v623 = vld [vmem:[#allocation2 + $0x13c] sm:$0xf]
    %v624 = vld [vmem:[#allocation2 + $0x140] sm:$0xf]
    %v625 = vld [vmem:[#allocation2 + $0x144] sm:$0xf]
    %v626 = vld [vmem:[#allocation2 + $0x148] sm:$0xf]
    %v627 = vld [vmem:[#allocation2 + $0x14c] sm:$0xf]
    %v628 = vld [vmem:[#allocation2 + $0x150] sm:$0xf]
    %v629 = vld [vmem:[#allocation2 + $0x154] sm:$0xf]
    %v630 = vld [vmem:[#allocation2 + $0x158] sm:$0xf]
    %v631 = vld [vmem:[#allocation2 + $0x15c] sm:$0xf]
    %v632 = vld [vmem:[#allocation2 + $0x160] sm:$0xf]
    %v633 = vld [vmem:[#allocation2 + $0x164] sm:$0xf]
    %v634 = vld [vmem:[#allocation2 + $0x168] sm:$0xf]
    %v635 = vld [vmem:[#allocation2 + $0x16c] sm:$0xf]
    %v636 = vld [vmem:[#allocation2 + $0x170] sm:$0xf]
    %v637 = vld [vmem:[#allocation2 + $0x174] sm:$0xf]
    %v638 = vld [vmem:[#allocation2 + $0x178] sm:$0xf]
    %v639 = vld [vmem:[#allocation2 + $0x17c] sm:$0xf]
    %v640 = vld [vmem:[#allocation2 + $0x180] sm:$0xf]
    %v641 = vld [vmem:[#allocation2 + $0x184] sm:$0xf]
    %v642 = vld [vmem:[#allocation2 + $0x188] sm:$0xf]
    %v643 = vld [vmem:[#allocation2 + $0x18c] sm:$0xf]
    %v644 = vld [vmem:[#allocation2 + $0x190] sm:$0xf]
    %v645 = vld [vmem:[#allocation2 + $0x194] sm:$0xf]
    %v646 = vld [vmem:[#allocation2 + $0x198] sm:$0xf]
    %v647 = vld [vmem:[#allocation2 + $0x19c] sm:$0xf]
    %v648 = vld [vmem:[#allocation2 + $0x1a0] sm:$0xf]
    %v649 = vld [vmem:[#allocation2 + $0x1a4] sm:$0xf]
    %v650 = vld [vmem:[#allocation2 + $0x1a8] sm:$0xf]
    %v651 = vld [vmem:[#allocation2 + $0x1ac] sm:$0xf]
    %v652 = vld [vmem:[#allocation2 + $0x1b0] sm:$0xf]
    %v653 = vld [vmem:[#allocation2 + $0x1b4] sm:$0xf]
    %v654 = vld [vmem:[#allocation2 + $0x1b8] sm:$0xf]
    %v655 = vld [vmem:[#allocation2 + $0x1bc] sm:$0xf]
    %v656 = vld [vmem:[#allocation2 + $0x1c0] sm:$0xf]
    %v657 = vld [vmem:[#allocation2 + $0x1c4] sm:$0xf]
    %v658 = vld [vmem:[#allocation2 + $0x1c8] sm:$0xf]
    %v659 = vld [vmem:[#allocation2 + $0x1cc] sm:$0xf]
    %v660 = vld [vmem:[#allocation2 + $0x1d0] sm:$0xf]
    %v661 = vld [vmem:[#allocation2 + $0x1d4] sm:$0xf]
    %v662 = vld [vmem:[#allocation2 + $0x1d8] sm:$0xf]
    %v663 = vld [vmem:[#allocation2 + $0x1dc] sm:$0xf]
    %v664 = vld [vmem:[#allocation2 + $0x1e0] sm:$0xf]
    %v665 = vld [vmem:[#allocation2 + $0x1e4] sm:$0xf]
    %v666 = vld [vmem:[#allocation2 + $0x1e8] sm:$0xf]
    %v667 = vld [vmem:[#allocation2 + $0x1ec] sm:$0xf]
    %v668 = vld [vmem:[#allocation2 + $0x1f0] sm:$0xf]
    %v669 = vld [vmem:[#allocation2 + $0x1f4] sm:$0xf]
    %v670 = vld [vmem:[#allocation2 + $0x1f8] sm:$0xf]
    %v671 = vld [vmem:[#allocation2 + $0x1fc] sm:$0xf]
    %v672 = vld [vmem:[#allocation2 + $0x200] sm:$0xf]
    %v673 = vld [vmem:[#allocation2 + $0x204] sm:$0xf]
    %v674 = vld [vmem:[#allocation2 + $0x208] sm:$0xf]
    %v675 = vld [vmem:[#allocation2 + $0x20c] sm:$0xf]
    %v676 = vld [vmem:[#allocation2 + $0x210] sm:$0xf]
    %v677 = vld [vmem:[#allocation2 + $0x214] sm:$0xf]
    %v678 = vld [vmem:[#allocation2 + $0x218] sm:$0xf]
    %v679 = vld [vmem:[#allocation2 + $0x21c] sm:$0xf]
    %v680 = vld [vmem:[#allocation2 + $0x220] sm:$0xf]
    %v681 = vld [vmem:[#allocation2 + $0x224] sm:$0xf]
    %v682 = vld [vmem:[#allocation2 + $0x228] sm:$0xf]
    %v683 = vld [vmem:[#allocation2 + $0x22c] sm:$0xf]
    %v684 = vld [vmem:[#allocation2 + $0x230] sm:$0xf]
    %v685 = vld [vmem:[#allocation2 + $0x234] sm:$0xf]
    %v686 = vld [vmem:[#allocation2 + $0x238] sm:$0xf]
    %v687 = vld [vmem:[#allocation2 + $0x23c] sm:$0xf]
    %v688 = vld [vmem:[#allocation2 + $0x240] sm:$0xf]
    %v689 = vld [vmem:[#allocation2 + $0x244] sm:$0xf]
    %v690 = vld [vmem:[#allocation2 + $0x248] sm:$0xf]
    %v691 = vld [vmem:[#allocation2 + $0x24c] sm:$0xf]
    %v692 = vld [vmem:[#allocation2 + $0x250] sm:$0xf]
    %v693 = vld [vmem:[#allocation2 + $0x254] sm:$0xf]
    %v694 = vld [vmem:[#allocation2 + $0x258] sm:$0xf]
    %v695 = vld [vmem:[#allocation2 + $0x25c] sm:$0xf]
    %v696 = vld [vmem:[#allocation2 + $0x260] sm:$0xf]
    %v697 = vld [vmem:[#allocation2 + $0x264] sm:$0xf]
    %v698 = vld [vmem:[#allocation2 + $0x268] sm:$0xf]
    %v699 = vld [vmem:[#allocation2 + $0x26c] sm:$0xf]
    %v700 = vld [vmem:[#allocation2 + $0x270] sm:$0xf]
    %v701 = vld [vmem:[#allocation2 + $0x274] sm:$0xf]
    %v702 = vld [vmem:[#allocation2 + $0x278] sm:$0xf]
    %v703 = vld [vmem:[#allocation2 + $0x27c] sm:$0xf]
    %v704 = vld [vmem:[#allocation2 + $0x280] sm:$0xf]
    %v705 = vld [vmem:[#allocation2 + $0x284] sm:$0xf]
    %v706 = vld [vmem:[#allocation2 + $0x288] sm:$0xf]
    %v707 = vld [vmem:[#allocation2 + $0x28c] sm:$0xf]
    %v708 = vld [vmem:[#allocation2 + $0x290] sm:$0xf]
    %v709 = vld [vmem:[#allocation2 + $0x294] sm:$0xf]
    %v710 = vld [vmem:[#allocation2 + $0x298] sm:$0xf]
    %v711 = vld [vmem:[#allocation2 + $0x29c] sm:$0xf]
    %v712 = vld [vmem:[#allocation2 + $0x2a0] sm:$0xf]
    %v713 = vld [vmem:[#allocation2 + $0x2a4] sm:$0xf]
    %v714 = vld [vmem:[#allocation2 + $0x2a8] sm:$0xf]
    %v715 = vld [vmem:[#allocation2 + $0x2ac] sm:$0xf]
    %v716 = vld [vmem:[#allocation2 + $0x2b0] sm:$0xf]
    %v717 = vld [vmem:[#allocation2 + $0x2b4] sm:$0xf]
    %v718 = vld [vmem:[#allocation2 + $0x2b8] sm:$0xf]
    %v719 = vld [vmem:[#allocation2 + $0x2bc] sm:$0xf]
    %v720 = vld [vmem:[#allocation2 + $0x2c0] sm:$0xf]
    %v721 = vld [vmem:[#allocation2 + $0x2c4] sm:$0xf]
    %v722 = vld [vmem:[#allocation2 + $0x2c8] sm:$0xf]
    %v723 = vld [vmem:[#allocation2 + $0x2cc] sm:$0xf]
    %v724 = vld [vmem:[#allocation2 + $0x2d0] sm:$0xf]
    %v725 = vld [vmem:[#allocation2 + $0x2d4] sm:$0xf]
    %v726 = vld [vmem:[#allocation2 + $0x2d8] sm:$0xf]
    %v727 = vld [vmem:[#allocation2 + $0x2dc] sm:$0xf]
    %v728 = vld [vmem:[#allocation2 + $0x2e0] sm:$0xf]
    %v729 = vld [vmem:[#allocation2 + $0x2e4] sm:$0xf]
    %v730 = vld [vmem:[#allocation2 + $0x2e8] sm:$0xf]
    %v731 = vld [vmem:[#allocation2 + $0x2ec] sm:$0xf]
    %v732 = vld [vmem:[#allocation2 + $0x2f0] sm:$0xf]
    %v733 = vld [vmem:[#allocation2 + $0x2f4] sm:$0xf]
    %v734 = vld [vmem:[#allocation2 + $0x2f8] sm:$0xf]
    %v735 = vld [vmem:[#allocation2 + $0x2fc] sm:$0xf]
    %v736 = vld [vmem:[#allocation2 + $0x300] sm:$0xf]
    %v737 = vld [vmem:[#allocation2 + $0x304] sm:$0xf]
    %v738 = vld [vmem:[#allocation2 + $0x308] sm:$0xf]
    %v739 = vld [vmem:[#allocation2 + $0x30c] sm:$0xf]
    %v740 = vld [vmem:[#allocation2 + $0x310] sm:$0xf]
    %v741 = vld [vmem:[#allocation2 + $0x314] sm:$0xf]
    %v742 = vld [vmem:[#allocation2 + $0x318] sm:$0xf]
    %v743 = vld [vmem:[#allocation2 + $0x31c] sm:$0xf]
    %v744 = vld [vmem:[#allocation2 + $0x320] sm:$0xf]
    %v745 = vld [vmem:[#allocation2 + $0x324] sm:$0xf]
    %v746 = vld [vmem:[#allocation2 + $0x328] sm:$0xf]
    %v747 = vld [vmem:[#allocation2 + $0x32c] sm:$0xf]
    %v748 = vld [vmem:[#allocation2 + $0x330] sm:$0xf]
    %v749 = vld [vmem:[#allocation2 + $0x334] sm:$0xf]
    %v750 = vld [vmem:[#allocation2 + $0x338] sm:$0xf]
    %v751 = vld [vmem:[#allocation2 + $0x33c] sm:$0xf]
    %v752 = vld [vmem:[#allocation2 + $0x340] sm:$0xf]
    %v753 = vld [vmem:[#allocation2 + $0x344] sm:$0xf]
    %v754 = vld [vmem:[#allocation2 + $0x348] sm:$0xf]
    %v755 = vld [vmem:[#allocation2 + $0x34c] sm:$0xf]
    %v756 = vld [vmem:[#allocation2 + $0x350] sm:$0xf]
    %v757 = vld [vmem:[#allocation2 + $0x354] sm:$0xf]
    %v758 = vld [vmem:[#allocation2 + $0x358] sm:$0xf]
    %v759 = vld [vmem:[#allocation2 + $0x35c] sm:$0xf]
    %v760 = vld [vmem:[#allocation2 + $0x360] sm:$0xf]
    %v761 = vld [vmem:[#allocation2 + $0x364] sm:$0xf]
    %v762 = vld [vmem:[#allocation2 + $0x368] sm:$0xf]
    %v763 = vld [vmem:[#allocation2 + $0x36c] sm:$0xf]
    %v764 = vld [vmem:[#allocation2 + $0x370] sm:$0xf]
    %v765 = vld [vmem:[#allocation2 + $0x374] sm:$0xf]
    %v766 = vld [vmem:[#allocation2 + $0x378] sm:$0xf]
    %v767 = vld [vmem:[#allocation2 + $0x37c] sm:$0xf]
    %v768 = vld [vmem:[#allocation2 + $0x380] sm:$0xf]
    %v769 = vld [vmem:[#allocation2 + $0x384] sm:$0xf]
    %v770 = vld [vmem:[#allocation2 + $0x388] sm:$0xf]
    %v771 = vld [vmem:[#allocation2 + $0x38c] sm:$0xf]
    %v772 = vld [vmem:[#allocation2 + $0x390] sm:$0xf]
    %v773 = vld [vmem:[#allocation2 + $0x394] sm:$0xf]
    %v774 = vld [vmem:[#allocation2 + $0x398] sm:$0xf]
    %v775 = vld [vmem:[#allocation2 + $0x39c] sm:$0xf]
    %v776 = vld [vmem:[#allocation2 + $0x3a0] sm:$0xf]
    %v777 = vld [vmem:[#allocation2 + $0x3a4] sm:$0xf]
    %v778 = vld [vmem:[#allocation2 + $0x3a8] sm:$0xf]
    %v779 = vld [vmem:[#allocation2 + $0x3ac] sm:$0xf]
    %v780 = vld [vmem:[#allocation2 + $0x3b0] sm:$0xf]
    %v781 = vld [vmem:[#allocation2 + $0x3b4] sm:$0xf]
    %v782 = vld [vmem:[#allocation2 + $0x3b8] sm:$0xf]
    %v783 = vld [vmem:[#allocation2 + $0x3bc] sm:$0xf]
    %v784 = vld [vmem:[#allocation2 + $0x3c0] sm:$0xf]
    %v785 = vld [vmem:[#allocation2 + $0x3c4] sm:$0xf]
    %v786 = vld [vmem:[#allocation2 + $0x3c8] sm:$0xf]
    %v787 = vld [vmem:[#allocation2 + $0x3cc] sm:$0xf]
    %v788 = vld [vmem:[#allocation2 + $0x3d0] sm:$0xf]
    %v789 = vld [vmem:[#allocation2 + $0x3d4] sm:$0xf]
    %v790 = vld [vmem:[#allocation2 + $0x3d8] sm:$0xf]
    %v791 = vld [vmem:[#allocation2 + $0x3dc] sm:$0xf]
    %v792 = vld [vmem:[#allocation2 + $0x3e0] sm:$0xf]
    %v793 = vld [vmem:[#allocation2 + $0x3e4] sm:$0xf]
    %v794 = vld [vmem:[#allocation2 + $0x3e8] sm:$0xf]
    %v795 = vld [vmem:[#allocation2 + $0x3ec] sm:$0xf]
    %v796 = vld [vmem:[#allocation2 + $0x3f0] sm:$0xf]
    %v797 = vld [vmem:[#allocation2 + $0x3f4] sm:$0xf]
    %v798 = vld [vmem:[#allocation2 + $0x3f8] sm:$0xf]
    %v799 = vld [vmem:[#allocation2 + $0x3fc] sm:$0xf]
    %v800 = vld [vmem:[#allocation2 + $0x400] sm:$0xf]
    %v801 = vld [vmem:[#allocation2 + $0x404] sm:$0xf]
    %v802 = vld [vmem:[#allocation2 + $0x408] sm:$0xf]
    %v803 = vld [vmem:[#allocation2 + $0x40c] sm:$0xf]
    %v804 = vld [vmem:[#allocation2 + $0x410] sm:$0xf]
    %v805 = vld [vmem:[#allocation2 + $0x414] sm:$0xf]
    %v806 = vld [vmem:[#allocation2 + $0x418] sm:$0xf]
    %v807 = vld [vmem:[#allocation2 + $0x41c] sm:$0xf]
    %v808 = vld [vmem:[#allocation2 + $0x420] sm:$0xf]
    %v809 = vld [vmem:[#allocation2 + $0x424] sm:$0xf]
    %v810 = vld [vmem:[#allocation2 + $0x428] sm:$0xf]
    %v811 = vld [vmem:[#allocation2 + $0x42c] sm:$0xf]
    %v812 = vld [vmem:[#allocation2 + $0x430] sm:$0xf]
    %v813 = vld [vmem:[#allocation2 + $0x434] sm:$0xf]
    %v814 = vld [vmem:[#allocation2 + $0x438] sm:$0xf]
    %v815 = vld [vmem:[#allocation2 + $0x43c] sm:$0xf]
    %v816 = vld [vmem:[#allocation2 + $0x440] sm:$0xf]
    %v817 = vld [vmem:[#allocation2 + $0x444] sm:$0xf]
    %v818 = vld [vmem:[#allocation2 + $0x448] sm:$0xf]
    %v819 = vld [vmem:[#allocation2 + $0x44c] sm:$0xf]
    %v820 = vld [vmem:[#allocation2 + $0x450] sm:$0xf]
    %v821 = vld [vmem:[#allocation2 + $0x454] sm:$0xf]
    %v822 = vld [vmem:[#allocation2 + $0x458] sm:$0xf]
    %v823 = vld [vmem:[#allocation2 + $0x45c] sm:$0xf]
    %v824 = vld [vmem:[#allocation2 + $0x460] sm:$0xf]
    %v825 = vld [vmem:[#allocation2 + $0x464] sm:$0xf]
    %v826 = vld [vmem:[#allocation2 + $0x468] sm:$0xf]
    %v827 = vld [vmem:[#allocation2 + $0x46c] sm:$0xf]
    %v828 = vld [vmem:[#allocation2 + $0x470] sm:$0xf]
    %v829 = vld [vmem:[#allocation2 + $0x474] sm:$0xf]
    %v830 = vld [vmem:[#allocation2 + $0x478] sm:$0xf]
    %v831 = vld [vmem:[#allocation2 + $0x47c] sm:$0xf]
    %v832 = vld [vmem:[#allocation2 + $0x480] sm:$0xf]
    %v833 = vld [vmem:[#allocation2 + $0x484] sm:$0xf]
    %v834 = vld [vmem:[#allocation2 + $0x488] sm:$0xf]
    %v835 = vld [vmem:[#allocation2 + $0x48c] sm:$0xf]
    %v836 = vld [vmem:[#allocation2 + $0x490] sm:$0xf]
    %v837 = vld [vmem:[#allocation2 + $0x494] sm:$0xf]
    %v838 = vld [vmem:[#allocation2 + $0x498] sm:$0xf]
    %v839 = vld [vmem:[#allocation2 + $0x49c] sm:$0xf]
    %v840 = vld [vmem:[#allocation2 + $0x4a0] sm:$0xf]
    %v841 = vld [vmem:[#allocation2 + $0x4a4] sm:$0xf]
    %v842 = vld [vmem:[#allocation2 + $0x4a8] sm:$0xf]
    %v843 = vld [vmem:[#allocation2 + $0x4ac] sm:$0xf]
    %v844 = vld [vmem:[#allocation2 + $0x4b0] sm:$0xf]
    %v845 = vld [vmem:[#allocation2 + $0x4b4] sm:$0xf]
    %v846 = vld [vmem:[#allocation2 + $0x4b8] sm:$0xf]
    %v847 = vld [vmem:[#allocation2 + $0x4bc] sm:$0xf]
    %v848 = vld [vmem:[#allocation2 + $0x4c0] sm:$0xf]
    %v849 = vld [vmem:[#allocation2 + $0x4c4] sm:$0xf]
    %v850 = vld [vmem:[#allocation2 + $0x4c8] sm:$0xf]
    %v851 = vld [vmem:[#allocation2 + $0x4cc] sm:$0xf]
    %v852 = vld [vmem:[#allocation2 + $0x4d0] sm:$0xf]
    %v853 = vld [vmem:[#allocation2 + $0x4d4] sm:$0xf]
    %v854 = vld [vmem:[#allocation2 + $0x4d8] sm:$0xf]
    %v855 = vld [vmem:[#allocation2 + $0x4dc] sm:$0xf]
    %v856 = vld [vmem:[#allocation2 + $0x4e0] sm:$0xf]
    %v857 = vld [vmem:[#allocation2 + $0x4e4] sm:$0xf]
    %v858 = vld [vmem:[#allocation2 + $0x4e8] sm:$0xf]
    %v859 = vld [vmem:[#allocation2 + $0x4ec] sm:$0xf]
    %v860 = vld [vmem:[#allocation2 + $0x4f0] sm:$0xf]
    %v861 = vld [vmem:[#allocation2 + $0x4f4] sm:$0xf]
    %v862 = vld [vmem:[#allocation2 + $0x4f8] sm:$0xf]
    %v863 = vld [vmem:[#allocation2 + $0x4fc] sm:$0xf]
    %v864 = vld [vmem:[#allocation2 + $0x500] sm:$0xf]
    %v865 = vld [vmem:[#allocation2 + $0x504] sm:$0xf]
    %v866 = vld [vmem:[#allocation2 + $0x508] sm:$0xf]
    %v867 = vld [vmem:[#allocation2 + $0x50c] sm:$0xf]
    %v868 = vld [vmem:[#allocation2 + $0x510] sm:$0xf]
    %v869 = vld [vmem:[#allocation2 + $0x514] sm:$0xf]
    %v870 = vld [vmem:[#allocation2 + $0x518] sm:$0xf]
    %v871 = vld [vmem:[#allocation2 + $0x51c] sm:$0xf]
    %v872 = vld [vmem:[#allocation2 + $0x520] sm:$0xf]
    %v873 = vld [vmem:[#allocation2 + $0x524] sm:$0xf]
    %v874 = vld [vmem:[#allocation2 + $0x528] sm:$0xf]
    %v875 = vld [vmem:[#allocation2 + $0x52c] sm:$0xf]
    %v876 = vld [vmem:[#allocation2 + $0x530] sm:$0xf]
    %v877 = vld [vmem:[#allocation2 + $0x534] sm:$0xf]
    %v878 = vld [vmem:[#allocation2 + $0x538] sm:$0xf]
    %v879 = vld [vmem:[#allocation2 + $0x53c] sm:$0xf]
    %v880 = vld [vmem:[#allocation2 + $0x540] sm:$0xf]
    %v881 = vld [vmem:[#allocation2 + $0x544] sm:$0xf]
    %v882 = vld [vmem:[#allocation2 + $0x548] sm:$0xf]
    %v883 = vld [vmem:[#allocation2 + $0x54c] sm:$0xf]
    %v884 = vld [vmem:[#allocation2 + $0x550] sm:$0xf]
    %v885 = vld [vmem:[#allocation2 + $0x554] sm:$0xf]
    %v886 = vld [vmem:[#allocation2 + $0x558] sm:$0xf]
    %v887 = vld [vmem:[#allocation2 + $0x55c] sm:$0xf]
    %v888 = vld [vmem:[#allocation2 + $0x560] sm:$0xf]
    %v889 = vld [vmem:[#allocation2 + $0x564] sm:$0xf]
    %v890 = vld [vmem:[#allocation2 + $0x568] sm:$0xf]
    %v891 = vld [vmem:[#allocation2 + $0x56c] sm:$0xf]
    %v892 = vld [vmem:[#allocation2 + $0x570] sm:$0xf]
    %v893 = vld [vmem:[#allocation2 + $0x574] sm:$0xf]
    %v894 = vld [vmem:[#allocation2 + $0x578] sm:$0xf]
    %v895 = vld [vmem:[#allocation2 + $0x57c] sm:$0xf]
    %v896 = vld [vmem:[#allocation2 + $0x580] sm:$0xf]
    %v897 = vld [vmem:[#allocation2 + $0x584] sm:$0xf]
    %v898 = vld [vmem:[#allocation2 + $0x588] sm:$0xf]
    %v899 = vld [vmem:[#allocation2 + $0x58c] sm:$0xf]
    %v900 = vld [vmem:[#allocation2 + $0x590] sm:$0xf]
    %v901 = vld [vmem:[#allocation2 + $0x594] sm:$0xf]
    %v902 = vld [vmem:[#allocation2 + $0x598] sm:$0xf]
    %v903 = vld [vmem:[#allocation2 + $0x59c] sm:$0xf]
    %v904 = vld [vmem:[#allocation2 + $0x5a0] sm:$0xf]
    %v905 = vld [vmem:[#allocation2 + $0x5a4] sm:$0xf]
    %v906 = vld [vmem:[#allocation2 + $0x5a8] sm:$0xf]
    %v907 = vld [vmem:[#allocation2 + $0x5ac] sm:$0xf]
    %v908 = vld [vmem:[#allocation2 + $0x5b0] sm:$0xf]
    %v909 = vld [vmem:[#allocation2 + $0x5b4] sm:$0xf]
    %v910 = vld [vmem:[#allocation2 + $0x5b8] sm:$0xf]
    %v911 = vld [vmem:[#allocation2 + $0x5bc] sm:$0xf]
    %v912 = vld [vmem:[#allocation2 + $0x5c0] sm:$0xf]
    %v913 = vld [vmem:[#allocation2 + $0x5c4] sm:$0xf]
    %v914 = vld [vmem:[#allocation2 + $0x5c8] sm:$0xf]
    %v915 = vld [vmem:[#allocation2 + $0x5cc] sm:$0xf]
    %v916 = vld [vmem:[#allocation2 + $0x5d0] sm:$0xf]
    %v917 = vld [vmem:[#allocation2 + $0x5d4] sm:$0xf]
    %v918 = vld [vmem:[#allocation2 + $0x5d8] sm:$0xf]
    %v919 = vld [vmem:[#allocation2 + $0x5dc] sm:$0xf]
    %v920 = vld [vmem:[#allocation2 + $0x5e0] sm:$0xf]
    %v921 = vld [vmem:[#allocation2 + $0x5e4] sm:$0xf]
    %v922 = vld [vmem:[#allocation2 + $0x5e8] sm:$0xf]
    %v923 = vld [vmem:[#allocation2 + $0x5ec] sm:$0xf]
    %v924 = vld [vmem:[#allocation2 + $0x5f0] sm:$0xf]
    %v925 = vld [vmem:[#allocation2 + $0x5f4] sm:$0xf]
    %v926 = vld [vmem:[#allocation2 + $0x5f8] sm:$0xf]
    %v927 = vld [vmem:[#allocation2 + $0x5fc] sm:$0xf]
    %v928 = vld [vmem:[#allocation2 + $0x600] sm:$0xf]
    %v929 = vld [vmem:[#allocation2 + $0x604] sm:$0xf]
    %v930 = vld [vmem:[#allocation2 + $0x608] sm:$0xf]
    %v931 = vld [vmem:[#allocation2 + $0x60c] sm:$0xf]
    %v932 = vld [vmem:[#allocation2 + $0x610] sm:$0xf]
    %v933 = vld [vmem:[#allocation2 + $0x614] sm:$0xf]
    %v934 = vld [vmem:[#allocation2 + $0x618] sm:$0xf]
    %v935 = vld [vmem:[#allocation2 + $0x61c] sm:$0xf]
    %v936 = vld [vmem:[#allocation2 + $0x620] sm:$0xf]
    %v937 = vld [vmem:[#allocation2 + $0x624] sm:$0xf]
    %v938 = vld [vmem:[#allocation2 + $0x628] sm:$0xf]
    %v939 = vld [vmem:[#allocation2 + $0x62c] sm:$0xf]
    %v940 = vld [vmem:[#allocation2 + $0x630] sm:$0xf]
    %v941 = vld [vmem:[#allocation2 + $0x634] sm:$0xf]
    %v942 = vld [vmem:[#allocation2 + $0x638] sm:$0xf]
    %v943 = vld [vmem:[#allocation2 + $0x63c] sm:$0xf]
    %v944 = vld [vmem:[#allocation2 + $0x640] sm:$0xf]
    %v945 = vld [vmem:[#allocation2 + $0x644] sm:$0xf]
    %v946 = vld [vmem:[#allocation2 + $0x648] sm:$0xf]
    %v947 = vld [vmem:[#allocation2 + $0x64c] sm:$0xf]
    %v948 = vld [vmem:[#allocation2 + $0x650] sm:$0xf]
    %v949 = vld [vmem:[#allocation2 + $0x654] sm:$0xf]
    %v950 = vld [vmem:[#allocation2 + $0x658] sm:$0xf]
    %v951 = vld [vmem:[#allocation2 + $0x65c] sm:$0xf]
    %v952 = vld [vmem:[#allocation2 + $0x660] sm:$0xf]
    %v953 = vld [vmem:[#allocation2 + $0x664] sm:$0xf]
    %v954 = vld [vmem:[#allocation2 + $0x668] sm:$0xf]
    %v955 = vld [vmem:[#allocation2 + $0x66c] sm:$0xf]
    %v956 = vld [vmem:[#allocation2 + $0x670] sm:$0xf]
    %v957 = vld [vmem:[#allocation2 + $0x674] sm:$0xf]
    %v958 = vld [vmem:[#allocation2 + $0x678] sm:$0xf]
    %v959 = vld [vmem:[#allocation2 + $0x67c] sm:$0xf]
    %v960 = vld [vmem:[#allocation2 + $0x680] sm:$0xf]
    %v961 = vld [vmem:[#allocation2 + $0x684] sm:$0xf]
    %v962 = vld [vmem:[#allocation2 + $0x688] sm:$0xf]
    %v963 = vld [vmem:[#allocation2 + $0x68c] sm:$0xf]
    %v964 = vld [vmem:[#allocation2 + $0x690] sm:$0xf]
    %v965 = vld [vmem:[#allocation2 + $0x694] sm:$0xf]
    %v966 = vld [vmem:[#allocation2 + $0x698] sm:$0xf]
    %v967 = vld [vmem:[#allocation2 + $0x69c] sm:$0xf]
    %v968 = vld [vmem:[#allocation2 + $0x6a0] sm:$0xf]
    %v969 = vld [vmem:[#allocation2 + $0x6a4] sm:$0xf]
    %v970 = vld [vmem:[#allocation2 + $0x6a8] sm:$0xf]
    %v971 = vld [vmem:[#allocation2 + $0x6ac] sm:$0xf]
    %v972 = vld [vmem:[#allocation2 + $0x6b0] sm:$0xf]
    %v973 = vld [vmem:[#allocation2 + $0x6b4] sm:$0xf]
    %v974 = vld [vmem:[#allocation2 + $0x6b8] sm:$0xf]
    %v975 = vld [vmem:[#allocation2 + $0x6bc] sm:$0xf]
    %v976 = vld [vmem:[#allocation2 + $0x6c0] sm:$0xf]
    %v977 = vld [vmem:[#allocation2 + $0x6c4] sm:$0xf]
    %v978 = vld [vmem:[#allocation2 + $0x6c8] sm:$0xf]
    %v979 = vld [vmem:[#allocation2 + $0x6cc] sm:$0xf]
    %v980 = vld [vmem:[#allocation2 + $0x6d0] sm:$0xf]
    %v981 = vld [vmem:[#allocation2 + $0x6d4] sm:$0xf]
    %v982 = vld [vmem:[#allocation2 + $0x6d8] sm:$0xf]
    %v983 = vld [vmem:[#allocation2 + $0x6dc] sm:$0xf]
    %v984 = vld [vmem:[#allocation2 + $0x6e0] sm:$0xf]
    %v985 = vld [vmem:[#allocation2 + $0x6e4] sm:$0xf]
    %v986 = vld [vmem:[#allocation2 + $0x6e8] sm:$0xf]
    %v987 = vld [vmem:[#allocation2 + $0x6ec] sm:$0xf]
    %v988 = vld [vmem:[#allocation2 + $0x6f0] sm:$0xf]
    %v989 = vld [vmem:[#allocation2 + $0x6f4] sm:$0xf]
    %v990 = vld [vmem:[#allocation2 + $0x6f8] sm:$0xf]
    %v991 = vld [vmem:[#allocation2 + $0x6fc] sm:$0xf]
    %v992 = vld [vmem:[#allocation2 + $0x700] sm:$0xf]
    %v993 = vld [vmem:[#allocation2 + $0x704] sm:$0xf]
    %v994 = vld [vmem:[#allocation2 + $0x708] sm:$0xf]
    %v995 = vld [vmem:[#allocation2 + $0x70c] sm:$0xf]
    %v996 = vld [vmem:[#allocation2 + $0x710] sm:$0xf]
    %v997 = vld [vmem:[#allocation2 + $0x714] sm:$0xf]
    %v998 = vld [vmem:[#allocation2 + $0x718] sm:$0xf]
    %v999 = vld [vmem:[#allocation2 + $0x71c] sm:$0xf]
    %v1000 = vld [vmem:[#allocation2 + $0x720] sm:$0xf]
    %v1001 = vld [vmem:[#allocation2 + $0x724] sm:$0xf]
    %v1002 = vld [vmem:[#allocation2 + $0x728] sm:$0xf]
    %v1003 = vld [vmem:[#allocation2 + $0x72c] sm:$0xf]
    %v1004 = vld [vmem:[#allocation2 + $0x730] sm:$0xf]
    %v1005 = vld [vmem:[#allocation2 + $0x734] sm:$0xf]
    %v1006 = vld [vmem:[#allocation2 + $0x738] sm:$0xf]
    %v1007 = vld [vmem:[#allocation2 + $0x73c] sm:$0xf]
    %v1008 = vld [vmem:[#allocation2 + $0x740] sm:$0xf]
    %v1009 = vld [vmem:[#allocation2 + $0x744] sm:$0xf]
    %v1010 = vld [vmem:[#allocation2 + $0x748] sm:$0xf]
    %v1011 = vld [vmem:[#allocation2 + $0x74c] sm:$0xf]
    %v1012 = vld [vmem:[#allocation2 + $0x750] sm:$0xf]
    %v1013 = vld [vmem:[#allocation2 + $0x754] sm:$0xf]
    %v1014 = vld [vmem:[#allocation2 + $0x758] sm:$0xf]
    %v1015 = vld [vmem:[#allocation2 + $0x75c] sm:$0xf]
    %v1016 = vld [vmem:[#allocation2 + $0x760] sm:$0xf]
    %v1017 = vld [vmem:[#allocation2 + $0x764] sm:$0xf]
    %v1018 = vld [vmem:[#allocation2 + $0x768] sm:$0xf]
    %v1019 = vld [vmem:[#allocation2 + $0x76c] sm:$0xf]
    %v1020 = vld [vmem:[#allocation2 + $0x770] sm:$0xf]
    %v1021 = vld [vmem:[#allocation2 + $0x774] sm:$0xf]
    %v1022 = vld [vmem:[#allocation2 + $0x778] sm:$0xf]
    %v1023 = vld [vmem:[#allocation2 + $0x77c] sm:$0xf]
    %v1024 = vld [vmem:[#allocation2 + $0x780] sm:$0xf]
    %v1025 = vld [vmem:[#allocation2 + $0x784] sm:$0xf]
    %v1026 = vld [vmem:[#allocation2 + $0x788] sm:$0xf]
    %v1027 = vld [vmem:[#allocation2 + $0x78c] sm:$0xf]
    %v1028 = vld [vmem:[#allocation2 + $0x790] sm:$0xf]
    %v1029 = vld [vmem:[#allocation2 + $0x794] sm:$0xf]
    %v1030 = vld [vmem:[#allocation2 + $0x798] sm:$0xf]
    %v1031 = vld [vmem:[#allocation2 + $0x79c] sm:$0xf]
    %v1032 = vld [vmem:[#allocation2 + $0x7a0] sm:$0xf]
    %v1033 = vld [vmem:[#allocation2 + $0x7a4] sm:$0xf]
    %v1034 = vld [vmem:[#allocation2 + $0x7a8] sm:$0xf]
    %v1035 = vld [vmem:[#allocation2 + $0x7ac] sm:$0xf]
    %v1036 = vld [vmem:[#allocation2 + $0x7b0] sm:$0xf]
    %v1037 = vld [vmem:[#allocation2 + $0x7b4] sm:$0xf]
    %v1038 = vld [vmem:[#allocation2 + $0x7b8] sm:$0xf]
    %v1039 = vld [vmem:[#allocation2 + $0x7bc] sm:$0xf]
    %v1040 = vld [vmem:[#allocation2 + $0x7c0] sm:$0xf]
    %v1041 = vld [vmem:[#allocation2 + $0x7c4] sm:$0xf]
    %v1042 = vld [vmem:[#allocation2 + $0x7c8] sm:$0xf]
    %v1043 = vld [vmem:[#allocation2 + $0x7cc] sm:$0xf]
    %v1044 = vld [vmem:[#allocation2 + $0x7d0] sm:$0xf]
    %v1045 = vld [vmem:[#allocation2 + $0x7d4] sm:$0xf]
    %v1046 = vld [vmem:[#allocation2 + $0x7d8] sm:$0xf]
    %v1047 = vld [vmem:[#allocation2 + $0x7dc] sm:$0xf]
    %v1048 = vld [vmem:[#allocation2 + $0x7e0] sm:$0xf]
    %v1049 = vld [vmem:[#allocation2 + $0x7e4] sm:$0xf]
    %v1050 = vld [vmem:[#allocation2 + $0x7e8] sm:$0xf]
    %v1051 = vld [vmem:[#allocation2 + $0x7ec] sm:$0xf]
    %v1052 = vld [vmem:[#allocation2 + $0x7f0] sm:$0xf]
    %v1053 = vld [vmem:[#allocation2 + $0x7f4] sm:$0xf]
    %v1054 = vld [vmem:[#allocation2 + $0x7f8] sm:$0xf]
    %v1055 = vld [vmem:[#allocation2 + $0x7fc] sm:$0xf]
    %v1056 = vld [vmem:[#allocation2 + $0x800] sm:$0xf]
    %v1057 = vld [vmem:[#allocation2 + $0x804] sm:$0xf]
    %v1058 = vld [vmem:[#allocation2 + $0x808] sm:$0xf]
    %v1059 = vld [vmem:[#allocation2 + $0x80c] sm:$0xf]
    %v1060 = vld [vmem:[#allocation2 + $0x810] sm:$0xf]
    %v1061 = vld [vmem:[#allocation2 + $0x814] sm:$0xf]
    %v1062 = vld [vmem:[#allocation2 + $0x818] sm:$0xf]
    %v1063 = vld [vmem:[#allocation2 + $0x81c] sm:$0xf]
    %v1064 = vld [vmem:[#allocation2 + $0x820] sm:$0xf]
    %v1065 = vld [vmem:[#allocation2 + $0x824] sm:$0xf]
    %v1066 = vld [vmem:[#allocation2 + $0x828] sm:$0xf]
    %v1067 = vld [vmem:[#allocation2 + $0x82c] sm:$0xf]
    %v1068 = vld [vmem:[#allocation2 + $0x830] sm:$0xf]
    %v1069 = vld [vmem:[#allocation2 + $0x834] sm:$0xf]
    %v1070 = vld [vmem:[#allocation2 + $0x838] sm:$0xf]
    %v1071 = vld [vmem:[#allocation2 + $0x83c] sm:$0xf]
    %v1072 = vld [vmem:[#allocation2 + $0x840] sm:$0xf]
    %v1073 = vld [vmem:[#allocation2 + $0x844] sm:$0xf]
    %v1074 = vld [vmem:[#allocation2 + $0x848] sm:$0xf]
    %v1075 = vld [vmem:[#allocation2 + $0x84c] sm:$0xf]
    %v1076 = vld [vmem:[#allocation2 + $0x850] sm:$0xf]
    %v1077 = vld [vmem:[#allocation2 + $0x854] sm:$0xf]
    %v1078 = vld [vmem:[#allocation2 + $0x858] sm:$0xf]
    %v1079 = vld [vmem:[#allocation2 + $0x85c] sm:$0xf]
    %v1080 = vld [vmem:[#allocation2 + $0x860] sm:$0xf]
    %v1081 = vld [vmem:[#allocation2 + $0x864] sm:$0xf]
    %v1082 = vld [vmem:[#allocation2 + $0x868] sm:$0xf]
    %v1083 = vld [vmem:[#allocation2 + $0x86c] sm:$0xf]
    %v1084 = vld [vmem:[#allocation2 + $0x870] sm:$0xf]
    %v1085 = vld [vmem:[#allocation2 + $0x874] sm:$0xf]
    %v1086 = vld [vmem:[#allocation2 + $0x878] sm:$0xf]
    %v1087 = vld [vmem:[#allocation2 + $0x87c] sm:$0xf]
    %v1088 = vld [vmem:[#allocation2 + $0x880] sm:$0xf]
    %v1089 = vld [vmem:[#allocation2 + $0x884] sm:$0xf]
    %v1090 = vld [vmem:[#allocation2 + $0x888] sm:$0xf]
    %v1091 = vld [vmem:[#allocation2 + $0x88c] sm:$0xf]
    %v1092 = vld [vmem:[#allocation2 + $0x890] sm:$0xf]
    %v1093 = vld [vmem:[#allocation2 + $0x894] sm:$0xf]
    %v1094 = vld [vmem:[#allocation2 + $0x898] sm:$0xf]
    %v1095 = vld [vmem:[#allocation2 + $0x89c] sm:$0xf]
    %v1096 = vld [vmem:[#allocation2 + $0x8a0] sm:$0xf]
    %v1097 = vld [vmem:[#allocation2 + $0x8a4] sm:$0xf]
    %v1098 = vld [vmem:[#allocation2 + $0x8a8] sm:$0xf]
    %v1099 = vld [vmem:[#allocation2 + $0x8ac] sm:$0xf]
    %v1100 = vld [vmem:[#allocation2 + $0x8b0] sm:$0xf]
    %v1101 = vld [vmem:[#allocation2 + $0x8b4] sm:$0xf]
    %v1102 = vld [vmem:[#allocation2 + $0x8b8] sm:$0xf]
    %v1103 = vld [vmem:[#allocation2 + $0x8bc] sm:$0xf]
    %v1104 = vld [vmem:[#allocation2 + $0x8c0] sm:$0xf]
    %v1105 = vld [vmem:[#allocation2 + $0x8c4] sm:$0xf]
    %v1106 = vld [vmem:[#allocation2 + $0x8c8] sm:$0xf]
    %v1107 = vld [vmem:[#allocation2 + $0x8cc] sm:$0xf]
    %v1108 = vld [vmem:[#allocation2 + $0x8d0] sm:$0xf]
    %v1109 = vld [vmem:[#allocation2 + $0x8d4] sm:$0xf]
    %v1110 = vld [vmem:[#allocation2 + $0x8d8] sm:$0xf]
    %v1111 = vld [vmem:[#allocation2 + $0x8dc] sm:$0xf]
    %v1112 = vld [vmem:[#allocation2 + $0x8e0] sm:$0xf]
    %v1113 = vld [vmem:[#allocation2 + $0x8e4] sm:$0xf]
    %v1114 = vld [vmem:[#allocation2 + $0x8e8] sm:$0xf]
    %v1115 = vld [vmem:[#allocation2 + $0x8ec] sm:$0xf]
    %v1116 = vld [vmem:[#allocation2 + $0x8f0] sm:$0xf]
    %v1117 = vld [vmem:[#allocation2 + $0x8f4] sm:$0xf]
    %v1118 = vld [vmem:[#allocation2 + $0x8f8] sm:$0xf]
    %v1119 = vld [vmem:[#allocation2 + $0x8fc] sm:$0xf]
    %v1120 = vld [vmem:[#allocation2 + $0x900] sm:$0xf]
    %v1121 = vld [vmem:[#allocation2 + $0x904] sm:$0xf]
    %v1122 = vld [vmem:[#allocation2 + $0x908] sm:$0xf]
    %v1123 = vld [vmem:[#allocation2 + $0x90c] sm:$0xf]
    %v1124 = vld [vmem:[#allocation2 + $0x910] sm:$0xf]
    %v1125 = vld [vmem:[#allocation2 + $0x914] sm:$0xf]
    %v1126 = vld [vmem:[#allocation2 + $0x918] sm:$0xf]
    %v1127 = vld [vmem:[#allocation2 + $0x91c] sm:$0xf]
    %v1128 = vld [vmem:[#allocation2 + $0x920] sm:$0xf]
    %v1129 = vld [vmem:[#allocation2 + $0x924] sm:$0xf]
    %v1130 = vld [vmem:[#allocation2 + $0x928] sm:$0xf]
    %v1131 = vld [vmem:[#allocation2 + $0x92c] sm:$0xf]
    %v1132 = vld [vmem:[#allocation2 + $0x930] sm:$0xf]
    %v1133 = vld [vmem:[#allocation2 + $0x934] sm:$0xf]
    %v1134 = vld [vmem:[#allocation2 + $0x938] sm:$0xf]
    %v1135 = vld [vmem:[#allocation2 + $0x93c] sm:$0xf]
    %v1136 = vld [vmem:[#allocation2 + $0x940] sm:$0xf]
    %v1137 = vld [vmem:[#allocation2 + $0x944] sm:$0xf]
    %v1138 = vld [vmem:[#allocation2 + $0x948] sm:$0xf]
    %v1139 = vld [vmem:[#allocation2 + $0x94c] sm:$0xf]
    %v1140 = vld [vmem:[#allocation2 + $0x950] sm:$0xf]
    %v1141 = vld [vmem:[#allocation2 + $0x954] sm:$0xf]
    %v1142 = vld [vmem:[#allocation2 + $0x958] sm:$0xf]
    %v1143 = vld [vmem:[#allocation2 + $0x95c] sm:$0xf]
    %v1144 = vld [vmem:[#allocation2 + $0x960] sm:$0xf]
    %v1145 = vld [vmem:[#allocation2 + $0x964] sm:$0xf]
    %v1146 = vld [vmem:[#allocation2 + $0x968] sm:$0xf]
    %v1147 = vld [vmem:[#allocation2 + $0x96c] sm:$0xf]
    %v1148 = vld [vmem:[#allocation2 + $0x970] sm:$0xf]
    %v1149 = vld [vmem:[#allocation2 + $0x974] sm:$0xf]
    %v1150 = vld [vmem:[#allocation2 + $0x978] sm:$0xf]
    %v1151 = vld [vmem:[#allocation2 + $0x97c] sm:$0xf]
    %v1152 = vld [vmem:[#allocation2 + $0x980] sm:$0xf]
    %v1153 = vld [vmem:[#allocation2 + $0x984] sm:$0xf]
    %v1154 = vld [vmem:[#allocation2 + $0x988] sm:$0xf]
    %v1155 = vld [vmem:[#allocation2 + $0x98c] sm:$0xf]
    %v1156 = vld [vmem:[#allocation2 + $0x990] sm:$0xf]
    %v1157 = vld [vmem:[#allocation2 + $0x994] sm:$0xf]
    %v1158 = vld [vmem:[#allocation2 + $0x998] sm:$0xf]
    %v1159 = vld [vmem:[#allocation2 + $0x99c] sm:$0xf]
    %v1160 = vld [vmem:[#allocation2 + $0x9a0] sm:$0xf]
    %v1161 = vld [vmem:[#allocation2 + $0x9a4] sm:$0xf]
    %v1162 = vld [vmem:[#allocation2 + $0x9a8] sm:$0xf]
    %v1163 = vld [vmem:[#allocation2 + $0x9ac] sm:$0xf]
    %v1164 = vld [vmem:[#allocation2 + $0x9b0] sm:$0xf]
    %v1165 = vld [vmem:[#allocation2 + $0x9b4] sm:$0xf]
    %v1166 = vld [vmem:[#allocation2 + $0x9b8] sm:$0xf]
    %v1167 = vld [vmem:[#allocation2 + $0x9bc] sm:$0xf]
    %v1168 = vld [vmem:[#allocation2 + $0x9c0] sm:$0xf]
    %v1169 = vld [vmem:[#allocation2 + $0x9c4] sm:$0xf]
    %v1170 = vld [vmem:[#allocation2 + $0x9c8] sm:$0xf]
    %v1171 = vld [vmem:[#allocation2 + $0x9cc] sm:$0xf]
    %v1172 = vld [vmem:[#allocation2 + $0x9d0] sm:$0xf]
    %v1173 = vld [vmem:[#allocation2 + $0x9d4] sm:$0xf]
    %v1174 = vld [vmem:[#allocation2 + $0x9d8] sm:$0xf]
    %v1175 = vld [vmem:[#allocation2 + $0x9dc] sm:$0xf]
    %v1176 = vld [vmem:[#allocation2 + $0x9e0] sm:$0xf]
    %v1177 = vld [vmem:[#allocation2 + $0x9e4] sm:$0xf]
    %v1178 = vld [vmem:[#allocation2 + $0x9e8] sm:$0xf]
    %v1179 = vld [vmem:[#allocation2 + $0x9ec] sm:$0xf]
    %v1180 = vld [vmem:[#allocation2 + $0x9f0] sm:$0xf]
    %v1181 = vld [vmem:[#allocation2 + $0x9f4] sm:$0xf]
    %v1182 = vld [vmem:[#allocation2 + $0x9f8] sm:$0xf]
    %v1183 = vld [vmem:[#allocation2 + $0x9fc] sm:$0xf]
    %v1184 = vld [vmem:[#allocation2 + $0xa00] sm:$0xf]
    %v1185 = vld [vmem:[#allocation2 + $0xa04] sm:$0xf]
    %v1186 = vld [vmem:[#allocation2 + $0xa08] sm:$0xf]
    %v1187 = vld [vmem:[#allocation2 + $0xa0c] sm:$0xf]
    %v1188 = vld [vmem:[#allocation2 + $0xa10] sm:$0xf]
    %v1189 = vld [vmem:[#allocation2 + $0xa14] sm:$0xf]
    %v1190 = vld [vmem:[#allocation2 + $0xa18] sm:$0xf]
    %v1191 = vld [vmem:[#allocation2 + $0xa1c] sm:$0xf]
    %v1192 = vld [vmem:[#allocation2 + $0xa20] sm:$0xf]
    %v1193 = vld [vmem:[#allocation2 + $0xa24] sm:$0xf]
    %v1194 = vld [vmem:[#allocation2 + $0xa28] sm:$0xf]
    %v1195 = vld [vmem:[#allocation2 + $0xa2c] sm:$0xf]
    %v1196 = vld [vmem:[#allocation2 + $0xa30] sm:$0xf]
    %v1197 = vld [vmem:[#allocation2 + $0xa34] sm:$0xf]
    %v1198 = vld [vmem:[#allocation2 + $0xa38] sm:$0xf]
    %v1199 = vld [vmem:[#allocation2 + $0xa3c] sm:$0xf]
    %v1200 = vld [vmem:[#allocation2 + $0xa40] sm:$0xf]
    %v1201 = vld [vmem:[#allocation2 + $0xa44] sm:$0xf]
    %v1202 = vld [vmem:[#allocation2 + $0xa48] sm:$0xf]
    %v1203 = vld [vmem:[#allocation2 + $0xa4c] sm:$0xf]
    %v1204 = vld [vmem:[#allocation2 + $0xa50] sm:$0xf]
    %v1205 = vld [vmem:[#allocation2 + $0xa54] sm:$0xf]
    %v1206 = vld [vmem:[#allocation2 + $0xa58] sm:$0xf]
    %v1207 = vld [vmem:[#allocation2 + $0xa5c] sm:$0xf]
    %v1208 = vld [vmem:[#allocation2 + $0xa60] sm:$0xf]
    %v1209 = vld [vmem:[#allocation2 + $0xa64] sm:$0xf]
    %v1210 = vld [vmem:[#allocation2 + $0xa68] sm:$0xf]
    %v1211 = vld [vmem:[#allocation2 + $0xa6c] sm:$0xf]
    %v1212 = vld [vmem:[#allocation2 + $0xa70] sm:$0xf]
    %v1213 = vld [vmem:[#allocation2 + $0xa74] sm:$0xf]
    %v1214 = vld [vmem:[#allocation2 + $0xa78] sm:$0xf]
    %v1215 = vld [vmem:[#allocation2 + $0xa7c] sm:$0xf]
    %v1216 = vld [vmem:[#allocation2 + $0xa80] sm:$0xf]
    %v1217 = vld [vmem:[#allocation2 + $0xa84] sm:$0xf]
    %v1218 = vld [vmem:[#allocation2 + $0xa88] sm:$0xf]
    %v1219 = vld [vmem:[#allocation2 + $0xa8c] sm:$0xf]
    %v1220 = vld [vmem:[#allocation2 + $0xa90] sm:$0xf]
    %v1221 = vld [vmem:[#allocation2 + $0xa94] sm:$0xf]
    %v1222 = vld [vmem:[#allocation2 + $0xa98] sm:$0xf]
    %v1223 = vld [vmem:[#allocation2 + $0xa9c] sm:$0xf]
    %v1224 = vld [vmem:[#allocation2 + $0xaa0] sm:$0xf]
    %v1225 = vld [vmem:[#allocation2 + $0xaa4] sm:$0xf]
    %v1226 = vld [vmem:[#allocation2 + $0xaa8] sm:$0xf]
    %v1227 = vld [vmem:[#allocation2 + $0xaac] sm:$0xf]
    %v1228 = vld [vmem:[#allocation2 + $0xab0] sm:$0xf]
    %v1229 = vld [vmem:[#allocation2 + $0xab4] sm:$0xf]
    %v1230 = vld [vmem:[#allocation2 + $0xab8] sm:$0xf]
    %v1231 = vld [vmem:[#allocation2 + $0xabc] sm:$0xf]
    %v1232 = vld [vmem:[#allocation2 + $0xac0] sm:$0xf]
    %v1233 = vld [vmem:[#allocation2 + $0xac4] sm:$0xf]
    %v1234 = vld [vmem:[#allocation2 + $0xac8] sm:$0xf]
    %v1235 = vld [vmem:[#allocation2 + $0xacc] sm:$0xf]
    %v1236 = vld [vmem:[#allocation2 + $0xad0] sm:$0xf]
    %v1237 = vld [vmem:[#allocation2 + $0xad4] sm:$0xf]
    %v1238 = vld [vmem:[#allocation2 + $0xad8] sm:$0xf]
    %v1239 = vld [vmem:[#allocation2 + $0xadc] sm:$0xf]
    %v1240 = vld [vmem:[#allocation2 + $0xae0] sm:$0xf]
    %v1241 = vld [vmem:[#allocation2 + $0xae4] sm:$0xf]
    %v1242 = vld [vmem:[#allocation2 + $0xae8] sm:$0xf]
    %v1243 = vld [vmem:[#allocation2 + $0xaec] sm:$0xf]
    %v1244 = vld [vmem:[#allocation2 + $0xaf0] sm:$0xf]
    %v1245 = vld [vmem:[#allocation2 + $0xaf4] sm:$0xf]
    %v1246 = vld [vmem:[#allocation2 + $0xaf8] sm:$0xf]
    %v1247 = vld [vmem:[#allocation2 + $0xafc] sm:$0xf]
    %v1248 = vld [vmem:[#allocation2 + $0xb00] sm:$0xf]
    %v1249 = vld [vmem:[#allocation2 + $0xb04] sm:$0xf]
    %v1250 = vld [vmem:[#allocation2 + $0xb08] sm:$0xf]
    %v1251 = vld [vmem:[#allocation2 + $0xb0c] sm:$0xf]
    %v1252 = vld [vmem:[#allocation2 + $0xb10] sm:$0xf]
    %v1253 = vld [vmem:[#allocation2 + $0xb14] sm:$0xf]
    %v1254 = vld [vmem:[#allocation2 + $0xb18] sm:$0xf]
    %v1255 = vld [vmem:[#allocation2 + $0xb1c] sm:$0xf]
    %v1256 = vld [vmem:[#allocation2 + $0xb20] sm:$0xf]
    %v1257 = vld [vmem:[#allocation2 + $0xb24] sm:$0xf]
    %v1258 = vld [vmem:[#allocation2 + $0xb28] sm:$0xf]
    %v1259 = vld [vmem:[#allocation2 + $0xb2c] sm:$0xf]
    %v1260 = vld [vmem:[#allocation2 + $0xb30] sm:$0xf]
    %v1261 = vld [vmem:[#allocation2 + $0xb34] sm:$0xf]
    %v1262 = vld [vmem:[#allocation2 + $0xb38] sm:$0xf]
    %v1263 = vld [vmem:[#allocation2 + $0xb3c] sm:$0xf]
    %v1264 = vld [vmem:[#allocation2 + $0xb40] sm:$0xf]
    %v1265 = vld [vmem:[#allocation2 + $0xb44] sm:$0xf]
    %v1266 = vld [vmem:[#allocation2 + $0xb48] sm:$0xf]
    %v1267 = vld [vmem:[#allocation2 + $0xb4c] sm:$0xf]
    %v1268 = vld [vmem:[#allocation2 + $0xb50] sm:$0xf]
    %v1269 = vld [vmem:[#allocation2 + $0xb54] sm:$0xf]
    %v1270 = vld [vmem:[#allocation2 + $0xb58] sm:$0xf]
    %v1271 = vld [vmem:[#allocation2 + $0xb5c] sm:$0xf]
    %v1272 = vld [vmem:[#allocation2 + $0xb60] sm:$0xf]
    %v1273 = vld [vmem:[#allocation2 + $0xb64] sm:$0xf]
    %v1274 = vld [vmem:[#allocation2 + $0xb68] sm:$0xf]
    %v1275 = vld [vmem:[#allocation2 + $0xb6c] sm:$0xf]
    %v1276 = vld [vmem:[#allocation2 + $0xb70] sm:$0xf]
    %v1277 = vld [vmem:[#allocation2 + $0xb74] sm:$0xf]
    %v1278 = vld [vmem:[#allocation2 + $0xb78] sm:$0xf]
    %v1279 = vld [vmem:[#allocation2 + $0xb7c] sm:$0xf]
    %v1280 = vld [vmem:[#allocation2 + $0xb80] sm:$0xf]
    %v1281 = vld [vmem:[#allocation2 + $0xb84] sm:$0xf]
    %v1282 = vld [vmem:[#allocation2 + $0xb88] sm:$0xf]
    %v1283 = vld [vmem:[#allocation2 + $0xb8c] sm:$0xf]
    %v1284 = vld [vmem:[#allocation2 + $0xb90] sm:$0xf]
    %v1285 = vld [vmem:[#allocation2 + $0xb94] sm:$0xf]
    %v1286 = vld [vmem:[#allocation2 + $0xb98] sm:$0xf]
    %v1287 = vld [vmem:[#allocation2 + $0xb9c] sm:$0xf]
    %v1288 = vld [vmem:[#allocation2 + $0xba0] sm:$0xf]
    %v1289 = vld [vmem:[#allocation2 + $0xba4] sm:$0xf]
    %v1290 = vld [vmem:[#allocation2 + $0xba8] sm:$0xf]
    %v1291 = vld [vmem:[#allocation2 + $0xbac] sm:$0xf]
    %v1292 = vld [vmem:[#allocation2 + $0xbb0] sm:$0xf]
    %v1293 = vld [vmem:[#allocation2 + $0xbb4] sm:$0xf]
    %v1294 = vld [vmem:[#allocation2 + $0xbb8] sm:$0xf]
    %v1295 = vld [vmem:[#allocation2 + $0xbbc] sm:$0xf]
    %v1296 = vld [vmem:[#allocation2 + $0xbc0] sm:$0xf]
    %v1297 = vld [vmem:[#allocation2 + $0xbc4] sm:$0xf]
    %v1298 = vld [vmem:[#allocation2 + $0xbc8] sm:$0xf]
    %v1299 = vld [vmem:[#allocation2 + $0xbcc] sm:$0xf]
    %v1300 = vld [vmem:[#allocation2 + $0xbd0] sm:$0xf]
    %v1301 = vld [vmem:[#allocation2 + $0xbd4] sm:$0xf]
    %v1302 = vld [vmem:[#allocation2 + $0xbd8] sm:$0xf]
    %v1303 = vld [vmem:[#allocation2 + $0xbdc] sm:$0xf]
    %v1304 = vld [vmem:[#allocation2 + $0xbe0] sm:$0xf]
    %v1305 = vld [vmem:[#allocation2 + $0xbe4] sm:$0xf]
    %v1306 = vld [vmem:[#allocation2 + $0xbe8] sm:$0xf]
    %v1307 = vld [vmem:[#allocation2 + $0xbec] sm:$0xf]
    %v1308 = vld [vmem:[#allocation2 + $0xbf0] sm:$0xf]
    %v1309 = vld [vmem:[#allocation2 + $0xbf4] sm:$0xf]
    %v1310 = vld [vmem:[#allocation2 + $0xbf8] sm:$0xf]
    %v1311 = vld [vmem:[#allocation2 + $0xbfc] sm:$0xf]
    %v1312 = vld [vmem:[#allocation2 + $0xc00] sm:$0xf]
    %v1313 = vld [vmem:[#allocation2 + $0xc04] sm:$0xf]
    %v1314 = vld [vmem:[#allocation2 + $0xc08] sm:$0xf]
    %v1315 = vld [vmem:[#allocation2 + $0xc0c] sm:$0xf]
    %v1316 = vld [vmem:[#allocation2 + $0xc10] sm:$0xf]
    %v1317 = vld [vmem:[#allocation2 + $0xc14] sm:$0xf]
    %v1318 = vld [vmem:[#allocation2 + $0xc18] sm:$0xf]
    %v1319 = vld [vmem:[#allocation2 + $0xc1c] sm:$0xf]
    %v1320 = vld [vmem:[#allocation2 + $0xc20] sm:$0xf]
    %v1321 = vld [vmem:[#allocation2 + $0xc24] sm:$0xf]
    %v1322 = vld [vmem:[#allocation2 + $0xc28] sm:$0xf]
    %v1323 = vld [vmem:[#allocation2 + $0xc2c] sm:$0xf]
    %v1324 = vld [vmem:[#allocation2 + $0xc30] sm:$0xf]
    %v1325 = vld [vmem:[#allocation2 + $0xc34] sm:$0xf]
    %v1326 = vld [vmem:[#allocation2 + $0xc38] sm:$0xf]
    %v1327 = vld [vmem:[#allocation2 + $0xc3c] sm:$0xf]
    %v1328 = vld [vmem:[#allocation2 + $0xc40] sm:$0xf]
    %v1329 = vld [vmem:[#allocation2 + $0xc44] sm:$0xf]
    %v1330 = vld [vmem:[#allocation2 + $0xc48] sm:$0xf]
    %v1331 = vld [vmem:[#allocation2 + $0xc4c] sm:$0xf]
    %v1332 = vld [vmem:[#allocation2 + $0xc50] sm:$0xf]
    %v1333 = vld [vmem:[#allocation2 + $0xc54] sm:$0xf]
    %v1334 = vld [vmem:[#allocation2 + $0xc58] sm:$0xf]
    %v1335 = vld [vmem:[#allocation2 + $0xc5c] sm:$0xf]
    %v1336 = vld [vmem:[#allocation2 + $0xc60] sm:$0xf]
    %v1337 = vld [vmem:[#allocation2 + $0xc64] sm:$0xf]
    %v1338 = vld [vmem:[#allocation2 + $0xc68] sm:$0xf]
    %v1339 = vld [vmem:[#allocation2 + $0xc6c] sm:$0xf]
    %v1340 = vld [vmem:[#allocation2 + $0xc70] sm:$0xf]
    %v1341 = vld [vmem:[#allocation2 + $0xc74] sm:$0xf]
    %v1342 = vld [vmem:[#allocation2 + $0xc78] sm:$0xf]
    %v1343 = vld [vmem:[#allocation2 + $0xc7c] sm:$0xf]
    %v1344 = vld [vmem:[#allocation2 + $0xc80] sm:$0xf]
    %v1345 = vld [vmem:[#allocation2 + $0xc84] sm:$0xf]
    %v1346 = vld [vmem:[#allocation2 + $0xc88] sm:$0xf]
    %v1347 = vld [vmem:[#allocation2 + $0xc8c] sm:$0xf]
    %v1348 = vld [vmem:[#allocation2 + $0xc90] sm:$0xf]
    %v1349 = vld [vmem:[#allocation2 + $0xc94] sm:$0xf]
    %v1350 = vld [vmem:[#allocation2 + $0xc98] sm:$0xf]
    %v1351 = vld [vmem:[#allocation2 + $0xc9c] sm:$0xf]
    %v1352 = vld [vmem:[#allocation2 + $0xca0] sm:$0xf]
    %v1353 = vld [vmem:[#allocation2 + $0xca4] sm:$0xf]
    %v1354 = vld [vmem:[#allocation2 + $0xca8] sm:$0xf]
    %v1355 = vld [vmem:[#allocation2 + $0xcac] sm:$0xf]
    %v1356 = vld [vmem:[#allocation2 + $0xcb0] sm:$0xf]
    %v1357 = vld [vmem:[#allocation2 + $0xcb4] sm:$0xf]
    %v1358 = vld [vmem:[#allocation2 + $0xcb8] sm:$0xf]
    %v1359 = vld [vmem:[#allocation2 + $0xcbc] sm:$0xf]
    %v1360 = vld [vmem:[#allocation2 + $0xcc0] sm:$0xf]
    %v1361 = vld [vmem:[#allocation2 + $0xcc4] sm:$0xf]
    %v1362 = vld [vmem:[#allocation2 + $0xcc8] sm:$0xf]
    %v1363 = vld [vmem:[#allocation2 + $0xccc] sm:$0xf]
    %v1364 = vld [vmem:[#allocation2 + $0xcd0] sm:$0xf]
    %v1365 = vld [vmem:[#allocation2 + $0xcd4] sm:$0xf]
    %v1366 = vld [vmem:[#allocation2 + $0xcd8] sm:$0xf]
    %v1367 = vld [vmem:[#allocation2 + $0xcdc] sm:$0xf]
    %v1368 = vld [vmem:[#allocation2 + $0xce0] sm:$0xf]
    %v1369 = vld [vmem:[#allocation2 + $0xce4] sm:$0xf]
    %v1370 = vld [vmem:[#allocation2 + $0xce8] sm:$0xf]
    %v1371 = vld [vmem:[#allocation2 + $0xcec] sm:$0xf]
    %v1372 = vld [vmem:[#allocation2 + $0xcf0] sm:$0xf]
    %v1373 = vld [vmem:[#allocation2 + $0xcf4] sm:$0xf]
    %v1374 = vld [vmem:[#allocation2 + $0xcf8] sm:$0xf]
    %v1375 = vld [vmem:[#allocation2 + $0xcfc] sm:$0xf]
    %v1376 = vld [vmem:[#allocation2 + $0xd00] sm:$0xf]
    %v1377 = vld [vmem:[#allocation2 + $0xd04] sm:$0xf]
    %v1378 = vld [vmem:[#allocation2 + $0xd08] sm:$0xf]
    %v1379 = vld [vmem:[#allocation2 + $0xd0c] sm:$0xf]
    %v1380 = vld [vmem:[#allocation2 + $0xd10] sm:$0xf]
    %v1381 = vld [vmem:[#allocation2 + $0xd14] sm:$0xf]
    %v1382 = vld [vmem:[#allocation2 + $0xd18] sm:$0xf]
    %v1383 = vld [vmem:[#allocation2 + $0xd1c] sm:$0xf]
    %v1384 = vld [vmem:[#allocation2 + $0xd20] sm:$0xf]
    %v1385 = vld [vmem:[#allocation2 + $0xd24] sm:$0xf]
    %v1386 = vld [vmem:[#allocation2 + $0xd28] sm:$0xf]
    %v1387 = vld [vmem:[#allocation2 + $0xd2c] sm:$0xf]
    %v1388 = vld [vmem:[#allocation2 + $0xd30] sm:$0xf]
    %v1389 = vld [vmem:[#allocation2 + $0xd34] sm:$0xf]
    %v1390 = vld [vmem:[#allocation2 + $0xd38] sm:$0xf]
    %v1391 = vld [vmem:[#allocation2 + $0xd3c] sm:$0xf]
    %v1392 = vld [vmem:[#allocation2 + $0xd40] sm:$0xf]
    %v1393 = vld [vmem:[#allocation2 + $0xd44] sm:$0xf]
    %v1394 = vld [vmem:[#allocation2 + $0xd48] sm:$0xf]
    %v1395 = vld [vmem:[#allocation2 + $0xd4c] sm:$0xf]
    %v1396 = vld [vmem:[#allocation2 + $0xd50] sm:$0xf]
    %v1397 = vld [vmem:[#allocation2 + $0xd54] sm:$0xf]
    %v1398 = vld [vmem:[#allocation2 + $0xd58] sm:$0xf]
    %v1399 = vld [vmem:[#allocation2 + $0xd5c] sm:$0xf]
    %v1400 = vld [vmem:[#allocation2 + $0xd60] sm:$0xf]
    %v1401 = vld [vmem:[#allocation2 + $0xd64] sm:$0xf]
    %v1402 = vld [vmem:[#allocation2 + $0xd68] sm:$0xf]
    %v1403 = vld [vmem:[#allocation2 + $0xd6c] sm:$0xf]
    %v1404 = vld [vmem:[#allocation2 + $0xd70] sm:$0xf]
    %v1405 = vld [vmem:[#allocation2 + $0xd74] sm:$0xf]
    %v1406 = vld [vmem:[#allocation2 + $0xd78] sm:$0xf]
    %v1407 = vld [vmem:[#allocation2 + $0xd7c] sm:$0xf]
    %v1408 = vld [vmem:[#allocation2 + $0xd80] sm:$0xf]
    %v1409 = vld [vmem:[#allocation2 + $0xd84] sm:$0xf]
    %v1410 = vld [vmem:[#allocation2 + $0xd88] sm:$0xf]
    %v1411 = vld [vmem:[#allocation2 + $0xd8c] sm:$0xf]
    %v1412 = vld [vmem:[#allocation2 + $0xd90] sm:$0xf]
    %v1413 = vld [vmem:[#allocation2 + $0xd94] sm:$0xf]
    %v1414 = vld [vmem:[#allocation2 + $0xd98] sm:$0xf]
    %v1415 = vld [vmem:[#allocation2 + $0xd9c] sm:$0xf]
    %v1416 = vld [vmem:[#allocation2 + $0xda0] sm:$0xf]
    %v1417 = vld [vmem:[#allocation2 + $0xda4] sm:$0xf]
    %v1418 = vld [vmem:[#allocation2 + $0xda8] sm:$0xf]
    %v1419 = vld [vmem:[#allocation2 + $0xdac] sm:$0xf]
    %v1420 = vld [vmem:[#allocation2 + $0xdb0] sm:$0xf]
    %v1421 = vld [vmem:[#allocation2 + $0xdb4] sm:$0xf]
    %v1422 = vld [vmem:[#allocation2 + $0xdb8] sm:$0xf]
    %v1423 = vld [vmem:[#allocation2 + $0xdbc] sm:$0xf]
    %v1424 = vld [vmem:[#allocation2 + $0xdc0] sm:$0xf]
    %v1425 = vld [vmem:[#allocation2 + $0xdc4] sm:$0xf]
    %v1426 = vld [vmem:[#allocation2 + $0xdc8] sm:$0xf]
    %v1427 = vld [vmem:[#allocation2 + $0xdcc] sm:$0xf]
    %v1428 = vld [vmem:[#allocation2 + $0xdd0] sm:$0xf]
    %v1429 = vld [vmem:[#allocation2 + $0xdd4] sm:$0xf]
    %v1430 = vld [vmem:[#allocation2 + $0xdd8] sm:$0xf]
    %v1431 = vld [vmem:[#allocation2 + $0xddc] sm:$0xf]
    %v1432 = vld [vmem:[#allocation2 + $0xde0] sm:$0xf]
    %v1433 = vld [vmem:[#allocation2 + $0xde4] sm:$0xf]
    %v1434 = vld [vmem:[#allocation2 + $0xde8] sm:$0xf]
    %v1435 = vld [vmem:[#allocation2 + $0xdec] sm:$0xf]
    %v1436 = vld [vmem:[#allocation2 + $0xdf0] sm:$0xf]
    %v1437 = vld [vmem:[#allocation2 + $0xdf4] sm:$0xf]
    %v1438 = vld [vmem:[#allocation2 + $0xdf8] sm:$0xf]
    %v1439 = vld [vmem:[#allocation2 + $0xdfc] sm:$0xf]
    %v1440 = vld [vmem:[#allocation2 + $0xe00] sm:$0xf]
    %v1441 = vld [vmem:[#allocation2 + $0xe04] sm:$0xf]
    %v1442 = vld [vmem:[#allocation2 + $0xe08] sm:$0xf]
    %v1443 = vld [vmem:[#allocation2 + $0xe0c] sm:$0xf]
    %v1444 = vld [vmem:[#allocation2 + $0xe10] sm:$0xf]
    %v1445 = vld [vmem:[#allocation2 + $0xe14] sm:$0xf]
    %v1446 = vld [vmem:[#allocation2 + $0xe18] sm:$0xf]
    %v1447 = vld [vmem:[#allocation2 + $0xe1c] sm:$0xf]
    %v1448 = vld [vmem:[#allocation2 + $0xe20] sm:$0xf]
    %v1449 = vld [vmem:[#allocation2 + $0xe24] sm:$0xf]
    %v1450 = vld [vmem:[#allocation2 + $0xe28] sm:$0xf]
    %v1451 = vld [vmem:[#allocation2 + $0xe2c] sm:$0xf]
    %v1452 = vld [vmem:[#allocation2 + $0xe30] sm:$0xf]
    %v1453 = vld [vmem:[#allocation2 + $0xe34] sm:$0xf]
    %v1454 = vld [vmem:[#allocation2 + $0xe38] sm:$0xf]
    %v1455 = vld [vmem:[#allocation2 + $0xe3c] sm:$0xf]
    %v1456 = vld [vmem:[#allocation2 + $0xe40] sm:$0xf]
    %v1457 = vld [vmem:[#allocation2 + $0xe44] sm:$0xf]
    %v1458 = vld [vmem:[#allocation2 + $0xe48] sm:$0xf]
    %v1459 = vld [vmem:[#allocation2 + $0xe4c] sm:$0xf]
    %v1460 = vld [vmem:[#allocation2 + $0xe50] sm:$0xf]
    %v1461 = vld [vmem:[#allocation2 + $0xe54] sm:$0xf]
    %v1462 = vld [vmem:[#allocation2 + $0xe58] sm:$0xf]
    %v1463 = vld [vmem:[#allocation2 + $0xe5c] sm:$0xf]
    %v1464 = vld [vmem:[#allocation2 + $0xe60] sm:$0xf]
    %v1465 = vld [vmem:[#allocation2 + $0xe64] sm:$0xf]
    %v1466 = vld [vmem:[#allocation2 + $0xe68] sm:$0xf]
    %v1467 = vld [vmem:[#allocation2 + $0xe6c] sm:$0xf]
    %v1468 = vld [vmem:[#allocation2 + $0xe70] sm:$0xf]
    %v1469 = vld [vmem:[#allocation2 + $0xe74] sm:$0xf]
    %v1470 = vld [vmem:[#allocation2 + $0xe78] sm:$0xf]
    %v1471 = vld [vmem:[#allocation2 + $0xe7c] sm:$0xf]
    %v1472 = vld [vmem:[#allocation2 + $0xe80] sm:$0xf]
    %v1473 = vld [vmem:[#allocation2 + $0xe84] sm:$0xf]
    %v1474 = vld [vmem:[#allocation2 + $0xe88] sm:$0xf]
    %v1475 = vld [vmem:[#allocation2 + $0xe8c] sm:$0xf]
    %v1476 = vld [vmem:[#allocation2 + $0xe90] sm:$0xf]
    %v1477 = vld [vmem:[#allocation2 + $0xe94] sm:$0xf]
    %v1478 = vld [vmem:[#allocation2 + $0xe98] sm:$0xf]
    %v1479 = vld [vmem:[#allocation2 + $0xe9c] sm:$0xf]
    %v1480 = vld [vmem:[#allocation2 + $0xea0] sm:$0xf]
    %v1481 = vld [vmem:[#allocation2 + $0xea4] sm:$0xf]
    %v1482 = vld [vmem:[#allocation2 + $0xea8] sm:$0xf]
    %v1483 = vld [vmem:[#allocation2 + $0xeac] sm:$0xf]
    %v1484 = vld [vmem:[#allocation2 + $0xeb0] sm:$0xf]
    %v1485 = vld [vmem:[#allocation2 + $0xeb4] sm:$0xf]
    %v1486 = vld [vmem:[#allocation2 + $0xeb8] sm:$0xf]
    %v1487 = vld [vmem:[#allocation2 + $0xebc] sm:$0xf]
    %v1488 = vld [vmem:[#allocation2 + $0xec0] sm:$0xf]
    %v1489 = vld [vmem:[#allocation2 + $0xec4] sm:$0xf]
    %v1490 = vld [vmem:[#allocation2 + $0xec8] sm:$0xf]
    %v1491 = vld [vmem:[#allocation2 + $0xecc] sm:$0xf]
    %v1492 = vld [vmem:[#allocation2 + $0xed0] sm:$0xf]
    %v1493 = vld [vmem:[#allocation2 + $0xed4] sm:$0xf]
    %v1494 = vld [vmem:[#allocation2 + $0xed8] sm:$0xf]
    %v1495 = vld [vmem:[#allocation2 + $0xedc] sm:$0xf]
    %v1496 = vld [vmem:[#allocation2 + $0xee0] sm:$0xf]
    %v1497 = vld [vmem:[#allocation2 + $0xee4] sm:$0xf]
    %v1498 = vld [vmem:[#allocation2 + $0xee8] sm:$0xf]
    %v1499 = vld [vmem:[#allocation2 + $0xeec] sm:$0xf]
    %v1500 = vld [vmem:[#allocation2 + $0xef0] sm:$0xf]
    %v1501 = vld [vmem:[#allocation2 + $0xef4] sm:$0xf]
    %v1502 = vld [vmem:[#allocation2 + $0xef8] sm:$0xf]
    %v1503 = vld [vmem:[#allocation2 + $0xefc] sm:$0xf]
    %v1504 = vld [vmem:[#allocation2 + $0xf00] sm:$0xf]
    %v1505 = vld [vmem:[#allocation2 + $0xf04] sm:$0xf]
    %v1506 = vld [vmem:[#allocation2 + $0xf08] sm:$0xf]
    %v1507 = vld [vmem:[#allocation2 + $0xf0c] sm:$0xf]
    %v1508 = vld [vmem:[#allocation2 + $0xf10] sm:$0xf]
    %v1509 = vld [vmem:[#allocation2 + $0xf14] sm:$0xf]
    %v1510 = vld [vmem:[#allocation2 + $0xf18] sm:$0xf]
    %v1511 = vld [vmem:[#allocation2 + $0xf1c] sm:$0xf]
    %v1512 = vld [vmem:[#allocation2 + $0xf20] sm:$0xf]
    %v1513 = vld [vmem:[#allocation2 + $0xf24] sm:$0xf]
    %v1514 = vld [vmem:[#allocation2 + $0xf28] sm:$0xf]
    %v1515 = vld [vmem:[#allocation2 + $0xf2c] sm:$0xf]
    %v1516 = vld [vmem:[#allocation2 + $0xf30] sm:$0xf]
    %v1517 = vld [vmem:[#allocation2 + $0xf34] sm:$0xf]
    %v1518 = vld [vmem:[#allocation2 + $0xf38] sm:$0xf]
    %v1519 = vld [vmem:[#allocation2 + $0xf3c] sm:$0xf]
    %v1520 = vld [vmem:[#allocation2 + $0xf40] sm:$0xf]
    %v1521 = vld [vmem:[#allocation2 + $0xf44] sm:$0xf]
    %v1522 = vld [vmem:[#allocation2 + $0xf48] sm:$0xf]
    %v1523 = vld [vmem:[#allocation2 + $0xf4c] sm:$0xf]
    %v1524 = vld [vmem:[#allocation2 + $0xf50] sm:$0xf]
    %v1525 = vld [vmem:[#allocation2 + $0xf54] sm:$0xf]
    %v1526 = vld [vmem:[#allocation2 + $0xf58] sm:$0xf]
    %v1527 = vld [vmem:[#allocation2 + $0xf5c] sm:$0xf]
    %v1528 = vld [vmem:[#allocation2 + $0xf60] sm:$0xf]
    %v1529 = vld [vmem:[#allocation2 + $0xf64] sm:$0xf]
    %v1530 = vld [vmem:[#allocation2 + $0xf68] sm:$0xf]
    %v1531 = vld [vmem:[#allocation2 + $0xf6c] sm:$0xf]
    %v1532 = vld [vmem:[#allocation2 + $0xf70] sm:$0xf]
    %v1533 = vld [vmem:[#allocation2 + $0xf74] sm:$0xf]
    %v1534 = vld [vmem:[#allocation2 + $0xf78] sm:$0xf]
    %v1535 = vld [vmem:[#allocation2 + $0xf7c] sm:$0xf]
    %v1536 = vld [vmem:[#allocation2 + $0xf80] sm:$0xf]
    %v1537 = vld [vmem:[#allocation2 + $0xf84] sm:$0xf]
    %v1538 = vld [vmem:[#allocation2 + $0xf88] sm:$0xf]
    %v1539 = vld [vmem:[#allocation2 + $0xf8c] sm:$0xf]
    %v1540 = vld [vmem:[#allocation2 + $0xf90] sm:$0xf]
    %v1541 = vld [vmem:[#allocation2 + $0xf94] sm:$0xf]
    %v1542 = vld [vmem:[#allocation2 + $0xf98] sm:$0xf]
    %v1543 = vld [vmem:[#allocation2 + $0xf9c] sm:$0xf]
    %v1544 = vld [vmem:[#allocation2 + $0xfa0] sm:$0xf]
    %v1545 = vld [vmem:[#allocation2 + $0xfa4] sm:$0xf]
    %v1546 = vld [vmem:[#allocation2 + $0xfa8] sm:$0xf]
    %v1547 = vld [vmem:[#allocation2 + $0xfac] sm:$0xf]
    %v1548 = vld [vmem:[#allocation2 + $0xfb0] sm:$0xf]
    %v1549 = vld [vmem:[#allocation2 + $0xfb4] sm:$0xf]
    %v1550 = vld [vmem:[#allocation2 + $0xfb8] sm:$0xf]
    %v1551 = vld [vmem:[#allocation2 + $0xfbc] sm:$0xf]
    %v1552 = vld [vmem:[#allocation2 + $0xfc0] sm:$0xf]
    %v1553 = vld [vmem:[#allocation2 + $0xfc4] sm:$0xf]
    %v1554 = vld [vmem:[#allocation2 + $0xfc8] sm:$0xf]
    %v1555 = vld [vmem:[#allocation2 + $0xfcc] sm:$0xf]
    %v1556 = vld [vmem:[#allocation2 + $0xfd0] sm:$0xf]
    %v1557 = vld [vmem:[#allocation2 + $0xfd4] sm:$0xf]
    %v1558 = vld [vmem:[#allocation2 + $0xfd8] sm:$0xf]
    %v1559 = vld [vmem:[#allocation2 + $0xfdc] sm:$0xf]
    %v1560 = vld [vmem:[#allocation2 + $0xfe0] sm:$0xf]
    %v1561 = vld [vmem:[#allocation2 + $0xfe4] sm:$0xf]
    %v1562 = vld [vmem:[#allocation2 + $0xfe8] sm:$0xf]
    %v1563 = vld [vmem:[#allocation2 + $0xfec] sm:$0xf]
    %v1564 = vld [vmem:[#allocation2 + $0xff0] sm:$0xf]
    %v1565 = vld [vmem:[#allocation2 + $0xff4] sm:$0xf]
    %v1566 = vld [vmem:[#allocation2 + $0xff8] sm:$0xf]
    %v1567 = vld [vmem:[#allocation2 + $0xffc] sm:$0xf]
    %v1568 = vld [vmem:[#allocation2 + $0x1000] sm:$0xf]
    %v1569 = vld [vmem:[#allocation2 + $0x1004] sm:$0xf]
    %v1570 = vld [vmem:[#allocation2 + $0x1008] sm:$0xf]
    %v1571 = vld [vmem:[#allocation2 + $0x100c] sm:$0xf]
    %v1572 = vld [vmem:[#allocation2 + $0x1010] sm:$0xf]
    %v1573 = vld [vmem:[#allocation2 + $0x1014] sm:$0xf]
    %v1574 = vld [vmem:[#allocation2 + $0x1018] sm:$0xf]
    %v1575 = vld [vmem:[#allocation2 + $0x101c] sm:$0xf]
    %v1576 = vld [vmem:[#allocation2 + $0x1020] sm:$0xf]
    %v1577 = vld [vmem:[#allocation2 + $0x1024] sm:$0xf]
    %v1578 = vld [vmem:[#allocation2 + $0x1028] sm:$0xf]
    %v1579 = vld [vmem:[#allocation2 + $0x102c] sm:$0xf]
    %v1580 = vld [vmem:[#allocation2 + $0x1030] sm:$0xf]
    %v1581 = vld [vmem:[#allocation2 + $0x1034] sm:$0xf]
    %v1582 = vld [vmem:[#allocation2 + $0x1038] sm:$0xf]
    %v1583 = vld [vmem:[#allocation2 + $0x103c] sm:$0xf]
    %v1584 = vld [vmem:[#allocation2 + $0x1040] sm:$0xf]
    %v1585 = vld [vmem:[#allocation2 + $0x1044] sm:$0xf]
    %v1586 = vld [vmem:[#allocation2 + $0x1048] sm:$0xf]
    %v1587 = vld [vmem:[#allocation2 + $0x104c] sm:$0xf]
    %v1588 = vld [vmem:[#allocation2 + $0x1050] sm:$0xf]
    %v1589 = vld [vmem:[#allocation2 + $0x1054] sm:$0xf]
    %v1590 = vld [vmem:[#allocation2 + $0x1058] sm:$0xf]
    %v1591 = vld [vmem:[#allocation2 + $0x105c] sm:$0xf]
    %v1592 = vld [vmem:[#allocation2 + $0x1060] sm:$0xf]
    %v1593 = vld [vmem:[#allocation2 + $0x1064] sm:$0xf]
    %v1594 = vld [vmem:[#allocation2 + $0x1068] sm:$0xf]
    %v1595 = vld [vmem:[#allocation2 + $0x106c] sm:$0xf]
    %v1596 = vld [vmem:[#allocation2 + $0x1070] sm:$0xf]
    %v1597 = vld [vmem:[#allocation2 + $0x1074] sm:$0xf]
    %v1598 = vld [vmem:[#allocation2 + $0x1078] sm:$0xf]
    %v1599 = vld [vmem:[#allocation2 + $0x107c] sm:$0xf]
    %v1600 = vld [vmem:[#allocation2 + $0x1080] sm:$0xf]
    %v1601 = vld [vmem:[#allocation2 + $0x1084] sm:$0xf]
    %v1602 = vld [vmem:[#allocation2 + $0x1088] sm:$0xf]
    %v1603 = vld [vmem:[#allocation2 + $0x108c] sm:$0xf]
    %v1604 = vld [vmem:[#allocation2 + $0x1090] sm:$0xf]
    %v1605 = vld [vmem:[#allocation2 + $0x1094] sm:$0xf]
    %v1606 = vld [vmem:[#allocation2 + $0x1098] sm:$0xf]
    %v1607 = vld [vmem:[#allocation2 + $0x109c] sm:$0xf]
    %v1608 = vld [vmem:[#allocation2 + $0x10a0] sm:$0xf]
    %v1609 = vld [vmem:[#allocation2 + $0x10a4] sm:$0xf]
    %v1610 = vld [vmem:[#allocation2 + $0x10a8] sm:$0xf]
    %v1611 = vld [vmem:[#allocation2 + $0x10ac] sm:$0xf]
    %v1612 = vld [vmem:[#allocation2 + $0x10b0] sm:$0xf]
    %v1613 = vld [vmem:[#allocation2 + $0x10b4] sm:$0xf]
    %v1614 = vld [vmem:[#allocation2 + $0x10b8] sm:$0xf]
    %v1615 = vld [vmem:[#allocation2 + $0x10bc] sm:$0xf]
    %v1616 = vld [vmem:[#allocation2 + $0x10c0] sm:$0xf]
    %v1617 = vld [vmem:[#allocation2 + $0x10c4] sm:$0xf]
    %v1618 = vld [vmem:[#allocation2 + $0x10c8] sm:$0xf]
    %v1619 = vld [vmem:[#allocation2 + $0x10cc] sm:$0xf]
    %v1620 = vld [vmem:[#allocation2 + $0x10d0] sm:$0xf]
    %v1621 = vld [vmem:[#allocation2 + $0x10d4] sm:$0xf]
    %v1622 = vld [vmem:[#allocation2 + $0x10d8] sm:$0xf]
    %v1623 = vld [vmem:[#allocation2 + $0x10dc] sm:$0xf]
    %v1624 = vld [vmem:[#allocation2 + $0x10e0] sm:$0xf]
    %v1625 = vld [vmem:[#allocation2 + $0x10e4] sm:$0xf]
    %v1626 = vld [vmem:[#allocation2 + $0x10e8] sm:$0xf]
    %v1627 = vld [vmem:[#allocation2 + $0x10ec] sm:$0xf]
    %v1628 = vld [vmem:[#allocation2 + $0x10f0] sm:$0xf]
    %v1629 = vld [vmem:[#allocation2 + $0x10f4] sm:$0xf]
    %v1630 = vld [vmem:[#allocation2 + $0x10f8] sm:$0xf]
    %v1631 = vld [vmem:[#allocation2 + $0x10fc] sm:$0xf]
    %v1632 = vld [vmem:[#allocation2 + $0x1100] sm:$0xf]
    %v1633 = vld [vmem:[#allocation2 + $0x1104] sm:$0xf]
    %v1634 = vld [vmem:[#allocation2 + $0x1108] sm:$0xf]
    %v1635 = vld [vmem:[#allocation2 + $0x110c] sm:$0xf]
    %v1636 = vld [vmem:[#allocation2 + $0x1110] sm:$0xf]
    %v1637 = vld [vmem:[#allocation2 + $0x1114] sm:$0xf]
    %v1638 = vld [vmem:[#allocation2 + $0x1118] sm:$0xf]
    %v1639 = vld [vmem:[#allocation2 + $0x111c] sm:$0xf]
    %v1640 = vld [vmem:[#allocation2 + $0x1120] sm:$0xf]
    %v1641 = vld [vmem:[#allocation2 + $0x1124] sm:$0xf]
    %v1642 = vld [vmem:[#allocation2 + $0x1128] sm:$0xf]
    %v1643 = vld [vmem:[#allocation2 + $0x112c] sm:$0xf]
    %v1644 = vld [vmem:[#allocation2 + $0x1130] sm:$0xf]
    %v1645 = vld [vmem:[#allocation2 + $0x1134] sm:$0xf]
    %v1646 = vld [vmem:[#allocation2 + $0x1138] sm:$0xf]
    %v1647 = vld [vmem:[#allocation2 + $0x113c] sm:$0xf]
    %v1648 = vld [vmem:[#allocation2 + $0x1140] sm:$0xf]
    %v1649 = vld [vmem:[#allocation2 + $0x1144] sm:$0xf]
    %v1650 = vld [vmem:[#allocation2 + $0x1148] sm:$0xf]
    %v1651 = vld [vmem:[#allocation2 + $0x114c] sm:$0xf]
    %v1652 = vld [vmem:[#allocation2 + $0x1150] sm:$0xf]
    %v1653 = vld [vmem:[#allocation2 + $0x1154] sm:$0xf]
    %v1654 = vld [vmem:[#allocation2 + $0x1158] sm:$0xf]
    %v1655 = vld [vmem:[#allocation2 + $0x115c] sm:$0xf]
    %v1656 = vld [vmem:[#allocation2 + $0x1160] sm:$0xf]
    %v1657 = vld [vmem:[#allocation2 + $0x1164] sm:$0xf]
    %v1658 = vld [vmem:[#allocation2 + $0x1168] sm:$0xf]
    %v1659 = vld [vmem:[#allocation2 + $0x116c] sm:$0xf]
    %v1660 = vld [vmem:[#allocation2 + $0x1170] sm:$0xf]
    %v1661 = vld [vmem:[#allocation2 + $0x1174] sm:$0xf]
    %v1662 = vld [vmem:[#allocation2 + $0x1178] sm:$0xf]
    %v1663 = vld [vmem:[#allocation2 + $0x117c] sm:$0xf]
    %v1664 = vld [vmem:[#allocation2 + $0x1180] sm:$0xf]
    %v1665 = vld [vmem:[#allocation2 + $0x1184] sm:$0xf]
    %v1666 = vld [vmem:[#allocation2 + $0x1188] sm:$0xf]
    %v1667 = vld [vmem:[#allocation2 + $0x118c] sm:$0xf]
    %v1668 = vld [vmem:[#allocation2 + $0x1190] sm:$0xf]
    %v1669 = vld [vmem:[#allocation2 + $0x1194] sm:$0xf]
    %v1670 = vld [vmem:[#allocation2 + $0x1198] sm:$0xf]
    %v1671 = vld [vmem:[#allocation2 + $0x119c] sm:$0xf]
    %v1672 = vld [vmem:[#allocation2 + $0x11a0] sm:$0xf]
    %v1673 = vld [vmem:[#allocation2 + $0x11a4] sm:$0xf]
    %v1674 = vld [vmem:[#allocation2 + $0x11a8] sm:$0xf]
    %v1675 = vld [vmem:[#allocation2 + $0x11ac] sm:$0xf]
    %v1676 = vld [vmem:[#allocation2 + $0x11b0] sm:$0xf]
    %v1677 = vld [vmem:[#allocation2 + $0x11b4] sm:$0xf]
    %v1678 = vld [vmem:[#allocation2 + $0x11b8] sm:$0xf]
    %v1679 = vld [vmem:[#allocation2 + $0x11bc] sm:$0xf]
    %v1680 = vld [vmem:[#allocation2 + $0x11c0] sm:$0xf]
    %v1681 = vld [vmem:[#allocation2 + $0x11c4] sm:$0xf]
    %v1682 = vld [vmem:[#allocation2 + $0x11c8] sm:$0xf]
    %v1683 = vld [vmem:[#allocation2 + $0x11cc] sm:$0xf]
    %v1684 = vld [vmem:[#allocation2 + $0x11d0] sm:$0xf]
    %v1685 = vld [vmem:[#allocation2 + $0x11d4] sm:$0xf]
    %v1686 = vld [vmem:[#allocation2 + $0x11d8] sm:$0xf]
    %v1687 = vld [vmem:[#allocation2 + $0x11dc] sm:$0xf]
    %v1688 = vld [vmem:[#allocation2 + $0x11e0] sm:$0xf]
    %v1689 = vld [vmem:[#allocation2 + $0x11e4] sm:$0xf]
    %v1690 = vld [vmem:[#allocation2 + $0x11e8] sm:$0xf]
    %v1691 = vld [vmem:[#allocation2 + $0x11ec] sm:$0xf]
    %v1692 = vld [vmem:[#allocation2 + $0x11f0] sm:$0xf]
    %v1693 = vld [vmem:[#allocation2 + $0x11f4] sm:$0xf]
    %v1694 = vld [vmem:[#allocation2 + $0x11f8] sm:$0xf]
    %v1695 = vld [vmem:[#allocation2 + $0x11fc] sm:$0xf]
    %v1696 = vld [vmem:[#allocation5] sm:$0x1]
    %v1697 = vlaneseq
    %v1698 = vshrl.u32 %v1697, 7
    %v1699 = vsub.s32 0, %v1698
    %v1700 = vrot.slane %v1696, %v1699
    %v2853 = vunpack.c.l.b16 %v544
    %v2854 = vunpack.c.l.b16 %v545
    %v2855 = vunpack.c.l.b16 %v546
    %v2856 = vunpack.c.l.b16 %v547
    %v2857 = vunpack.c.l.b16 %v548
    %v2858 = vunpack.c.l.b16 %v549
    %v2859 = vunpack.c.l.b16 %v550
    %v2860 = vunpack.c.l.b16 %v551
    %v2861 = vunpack.c.l.b16 %v552
    %v2862 = vunpack.c.l.b16 %v553
    %v2863 = vunpack.c.l.b16 %v554
    %v2864 = vunpack.c.l.b16 %v555
    %v2865 = vunpack.c.l.b16 %v556
    %v2866 = vunpack.c.l.b16 %v557
    %v2867 = vunpack.c.l.b16 %v558
    %v2868 = vunpack.c.l.b16 %v559
    %v2869 = vunpack.c.l.b16 %v560
    %v2870 = vunpack.c.l.b16 %v561
    %v2871 = vunpack.c.l.b16 %v562
    %v2872 = vunpack.c.l.b16 %v563
    %v2873 = vunpack.c.l.b16 %v564
    %v2874 = vunpack.c.l.b16 %v565
    %v2875 = vunpack.c.l.b16 %v566
    %v2876 = vunpack.c.l.b16 %v567
    %v2877 = vunpack.c.l.b16 %v568
    %v2878 = vunpack.c.l.b16 %v569
    %v2879 = vunpack.c.l.b16 %v570
    %v2880 = vunpack.c.l.b16 %v571
    %v2881 = vunpack.c.l.b16 %v572
    %v2882 = vunpack.c.l.b16 %v573
    %v2883 = vunpack.c.l.b16 %v574
    %v2884 = vunpack.c.l.b16 %v575
    %v2885 = vunpack.c.l.b16 %v576
    %v2886 = vunpack.c.l.b16 %v577
    %v2887 = vunpack.c.l.b16 %v578
    %v2888 = vunpack.c.l.b16 %v579
    %v2889 = vunpack.c.l.b16 %v580
    %v2890 = vunpack.c.l.b16 %v581
    %v2891 = vunpack.c.l.b16 %v582
    %v2892 = vunpack.c.l.b16 %v583
    %v2893 = vunpack.c.l.b16 %v584
    %v2894 = vunpack.c.l.b16 %v585
    %v2895 = vunpack.c.l.b16 %v586
    %v2896 = vunpack.c.l.b16 %v587
    %v2897 = vunpack.c.l.b16 %v588
    %v2898 = vunpack.c.l.b16 %v589
    %v2899 = vunpack.c.l.b16 %v590
    %v2900 = vunpack.c.l.b16 %v591
    %v2901 = vunpack.c.l.b16 %v592
    %v2902 = vunpack.c.l.b16 %v593
    %v2903 = vunpack.c.l.b16 %v594
    %v2904 = vunpack.c.l.b16 %v595
    %v2905 = vunpack.c.l.b16 %v596
    %v2906 = vunpack.c.l.b16 %v597
    %v2907 = vunpack.c.l.b16 %v598
    %v2908 = vunpack.c.l.b16 %v599
    %v2909 = vunpack.c.l.b16 %v600
    %v2910 = vunpack.c.l.b16 %v601
    %v2911 = vunpack.c.l.b16 %v602
    %v2912 = vunpack.c.l.b16 %v603
    %v2913 = vunpack.c.l.b16 %v604
    %v2914 = vunpack.c.l.b16 %v605
    %v2915 = vunpack.c.l.b16 %v606
    %v2916 = vunpack.c.l.b16 %v607
    %v2917 = vunpack.c.l.b16 %v608
    %v2918 = vunpack.c.l.b16 %v609
    %v2919 = vunpack.c.l.b16 %v610
    %v2920 = vunpack.c.l.b16 %v611
    %v2921 = vunpack.c.l.b16 %v612
    %v2922 = vunpack.c.l.b16 %v613
    %v2923 = vunpack.c.l.b16 %v614
    %v2924 = vunpack.c.l.b16 %v615
    %v2925 = vunpack.c.l.b16 %v616
    %v2926 = vunpack.c.l.b16 %v617
    %v2927 = vunpack.c.l.b16 %v618
    %v2928 = vunpack.c.l.b16 %v619
    %v2929 = vunpack.c.l.b16 %v620
    %v2930 = vunpack.c.l.b16 %v621
    %v2931 = vunpack.c.l.b16 %v622
    %v2932 = vunpack.c.l.b16 %v623
    %v2933 = vunpack.c.l.b16 %v624
    %v2934 = vunpack.c.l.b16 %v625
    %v2935 = vunpack.c.l.b16 %v626
    %v2936 = vunpack.c.l.b16 %v627
    %v2937 = vunpack.c.l.b16 %v628
    %v2938 = vunpack.c.l.b16 %v629
    %v2939 = vunpack.c.l.b16 %v630
    %v2940 = vunpack.c.l.b16 %v631
    %v2941 = vunpack.c.l.b16 %v632
    %v2942 = vunpack.c.l.b16 %v633
    %v2943 = vunpack.c.l.b16 %v634
    %v2944 = vunpack.c.l.b16 %v635
    %v2945 = vunpack.c.l.b16 %v636
    %v2946 = vunpack.c.l.b16 %v637
    %v2947 = vunpack.c.l.b16 %v638
    %v2948 = vunpack.c.l.b16 %v639
    %v2949 = vunpack.c.l.b16 %v640
    %v2950 = vunpack.c.l.b16 %v641
    %v2951 = vunpack.c.l.b16 %v642
    %v2952 = vunpack.c.l.b16 %v643
    %v2953 = vunpack.c.l.b16 %v644
    %v2954 = vunpack.c.l.b16 %v645
    %v2955 = vunpack.c.l.b16 %v646
    %v2956 = vunpack.c.l.b16 %v647
    %v2957 = vunpack.c.l.b16 %v648
    %v2958 = vunpack.c.l.b16 %v649
    %v2959 = vunpack.c.l.b16 %v650
    %v2960 = vunpack.c.l.b16 %v651
    %v2961 = vunpack.c.l.b16 %v652
    %v2962 = vunpack.c.l.b16 %v653
    %v2963 = vunpack.c.l.b16 %v654
    %v2964 = vunpack.c.l.b16 %v655
    %v2965 = vunpack.c.l.b16 %v656
    %v2966 = vunpack.c.l.b16 %v657
    %v2967 = vunpack.c.l.b16 %v658
    %v2968 = vunpack.c.l.b16 %v659
    %v2969 = vunpack.c.l.b16 %v660
    %v2970 = vunpack.c.l.b16 %v661
    %v2971 = vunpack.c.l.b16 %v662
    %v2972 = vunpack.c.l.b16 %v663
    %v2973 = vunpack.c.l.b16 %v664
    %v2974 = vunpack.c.l.b16 %v665
    %v2975 = vunpack.c.l.b16 %v666
    %v2976 = vunpack.c.l.b16 %v667
    %v2977 = vunpack.c.l.b16 %v668
    %v2978 = vunpack.c.l.b16 %v669
    %v2979 = vunpack.c.l.b16 %v670
    %v2980 = vunpack.c.l.b16 %v671
    %v2981 = vunpack.c.l.b16 %v672
    %v2982 = vunpack.c.l.b16 %v673
    %v2983 = vunpack.c.l.b16 %v674
    %v2984 = vunpack.c.l.b16 %v675
    %v2985 = vunpack.c.l.b16 %v676
    %v2986 = vunpack.c.l.b16 %v677
    %v2987 = vunpack.c.l.b16 %v678
    %v2988 = vunpack.c.l.b16 %v679
    %v2989 = vunpack.c.l.b16 %v680
    %v2990 = vunpack.c.l.b16 %v681
    %v2991 = vunpack.c.l.b16 %v682
    %v2992 = vunpack.c.l.b16 %v683
    %v2993 = vunpack.c.l.b16 %v684
    %v2994 = vunpack.c.l.b16 %v685
    %v2995 = vunpack.c.l.b16 %v686
    %v2996 = vunpack.c.l.b16 %v687
    %v2997 = vunpack.c.l.b16 %v688
    %v2998 = vunpack.c.l.b16 %v689
    %v2999 = vunpack.c.l.b16 %v690
    %v3000 = vunpack.c.l.b16 %v691
    %v3001 = vunpack.c.l.b16 %v692
    %v3002 = vunpack.c.l.b16 %v693
    %v3003 = vunpack.c.l.b16 %v694
    %v3004 = vunpack.c.l.b16 %v695
    %v3005 = vunpack.c.l.b16 %v696
    %v3006 = vunpack.c.l.b16 %v697
    %v3007 = vunpack.c.l.b16 %v698
    %v3008 = vunpack.c.l.b16 %v699
    %v3009 = vunpack.c.l.b16 %v700
    %v3010 = vunpack.c.l.b16 %v701
    %v3011 = vunpack.c.l.b16 %v702
    %v3012 = vunpack.c.l.b16 %v703
    %v3013 = vunpack.c.l.b16 %v704
    %v3014 = vunpack.c.l.b16 %v705
    %v3015 = vunpack.c.l.b16 %v706
    %v3016 = vunpack.c.l.b16 %v707
    %v3017 = vunpack.c.l.b16 %v708
    %v3018 = vunpack.c.l.b16 %v709
    %v3019 = vunpack.c.l.b16 %v710
    %v3020 = vunpack.c.l.b16 %v711
    %v3021 = vunpack.c.l.b16 %v712
    %v3022 = vunpack.c.l.b16 %v713
    %v3023 = vunpack.c.l.b16 %v714
    %v3024 = vunpack.c.l.b16 %v715
    %v3025 = vunpack.c.l.b16 %v716
    %v3026 = vunpack.c.l.b16 %v717
    %v3027 = vunpack.c.l.b16 %v718
    %v3028 = vunpack.c.l.b16 %v719
    %v3029 = vunpack.c.l.b16 %v720
    %v3030 = vunpack.c.l.b16 %v721
    %v3031 = vunpack.c.l.b16 %v722
    %v3032 = vunpack.c.l.b16 %v723
    %v3033 = vunpack.c.l.b16 %v724
    %v3034 = vunpack.c.l.b16 %v725
    %v3035 = vunpack.c.l.b16 %v726
    %v3036 = vunpack.c.l.b16 %v727
    %v3037 = vunpack.c.l.b16 %v728
    %v3038 = vunpack.c.l.b16 %v729
    %v3039 = vunpack.c.l.b16 %v730
    %v3040 = vunpack.c.l.b16 %v731
    %v3041 = vunpack.c.l.b16 %v732
    %v3042 = vunpack.c.l.b16 %v733
    %v3043 = vunpack.c.l.b16 %v734
    %v3044 = vunpack.c.l.b16 %v735
    %v3045 = vunpack.c.l.b16 %v736
    %v3046 = vunpack.c.l.b16 %v737
    %v3047 = vunpack.c.l.b16 %v738
    %v3048 = vunpack.c.l.b16 %v739
    %v3049 = vunpack.c.l.b16 %v740
    %v3050 = vunpack.c.l.b16 %v741
    %v3051 = vunpack.c.l.b16 %v742
    %v3052 = vunpack.c.l.b16 %v743
    %v3053 = vunpack.c.l.b16 %v744
    %v3054 = vunpack.c.l.b16 %v745
    %v3055 = vunpack.c.l.b16 %v746
    %v3056 = vunpack.c.l.b16 %v747
    %v3057 = vunpack.c.l.b16 %v748
    %v3058 = vunpack.c.l.b16 %v749
    %v3059 = vunpack.c.l.b16 %v750
    %v3060 = vunpack.c.l.b16 %v751
    %v3061 = vunpack.c.l.b16 %v752
    %v3062 = vunpack.c.l.b16 %v753
    %v3063 = vunpack.c.l.b16 %v754
    %v3064 = vunpack.c.l.b16 %v755
    %v3065 = vunpack.c.l.b16 %v756
    %v3066 = vunpack.c.l.b16 %v757
    %v3067 = vunpack.c.l.b16 %v758
    %v3068 = vunpack.c.l.b16 %v759
    %v3069 = vunpack.c.l.b16 %v760
    %v3070 = vunpack.c.l.b16 %v761
    %v3071 = vunpack.c.l.b16 %v762
    %v3072 = vunpack.c.l.b16 %v763
    %v3073 = vunpack.c.l.b16 %v764
    %v3074 = vunpack.c.l.b16 %v765
    %v3075 = vunpack.c.l.b16 %v766
    %v3076 = vunpack.c.l.b16 %v767
    %v3077 = vunpack.c.l.b16 %v768
    %v3078 = vunpack.c.l.b16 %v769
    %v3079 = vunpack.c.l.b16 %v770
    %v3080 = vunpack.c.l.b16 %v771
    %v3081 = vunpack.c.l.b16 %v772
    %v3082 = vunpack.c.l.b16 %v773
    %v3083 = vunpack.c.l.b16 %v774
    %v3084 = vunpack.c.l.b16 %v775
    %v3085 = vunpack.c.l.b16 %v776
    %v3086 = vunpack.c.l.b16 %v777
    %v3087 = vunpack.c.l.b16 %v778
    %v3088 = vunpack.c.l.b16 %v779
    %v3089 = vunpack.c.l.b16 %v780
    %v3090 = vunpack.c.l.b16 %v781
    %v3091 = vunpack.c.l.b16 %v782
    %v3092 = vunpack.c.l.b16 %v783
    %v3093 = vunpack.c.l.b16 %v784
    %v3094 = vunpack.c.l.b16 %v785
    %v3095 = vunpack.c.l.b16 %v786
    %v3096 = vunpack.c.l.b16 %v787
    %v3097 = vunpack.c.l.b16 %v788
    %v3098 = vunpack.c.l.b16 %v789
    %v3099 = vunpack.c.l.b16 %v790
    %v3100 = vunpack.c.l.b16 %v791
    %v3101 = vunpack.c.l.b16 %v792
    %v3102 = vunpack.c.l.b16 %v793
    %v3103 = vunpack.c.l.b16 %v794
    %v3104 = vunpack.c.l.b16 %v795
    %v3105 = vunpack.c.l.b16 %v796
    %v3106 = vunpack.c.l.b16 %v797
    %v3107 = vunpack.c.l.b16 %v798
    %v3108 = vunpack.c.l.b16 %v799
    %v3109 = vunpack.c.l.b16 %v800
    %v3110 = vunpack.c.l.b16 %v801
    %v3111 = vunpack.c.l.b16 %v802
    %v3112 = vunpack.c.l.b16 %v803
    %v3113 = vunpack.c.l.b16 %v804
    %v3114 = vunpack.c.l.b16 %v805
    %v3115 = vunpack.c.l.b16 %v806
    %v3116 = vunpack.c.l.b16 %v807
    %v3117 = vunpack.c.l.b16 %v808
    %v3118 = vunpack.c.l.b16 %v809
    %v3119 = vunpack.c.l.b16 %v810
    %v3120 = vunpack.c.l.b16 %v811
    %v3121 = vunpack.c.l.b16 %v812
    %v3122 = vunpack.c.l.b16 %v813
    %v3123 = vunpack.c.l.b16 %v814
    %v3124 = vunpack.c.l.b16 %v815
    %v3125 = vunpack.c.l.b16 %v816
    %v3126 = vunpack.c.l.b16 %v817
    %v3127 = vunpack.c.l.b16 %v818
    %v3128 = vunpack.c.l.b16 %v819
    %v3129 = vunpack.c.l.b16 %v820
    %v3130 = vunpack.c.l.b16 %v821
    %v3131 = vunpack.c.l.b16 %v822
    %v3132 = vunpack.c.l.b16 %v823
    %v3133 = vunpack.c.l.b16 %v824
    %v3134 = vunpack.c.l.b16 %v825
    %v3135 = vunpack.c.l.b16 %v826
    %v3136 = vunpack.c.l.b16 %v827
    %v3137 = vunpack.c.l.b16 %v828
    %v3138 = vunpack.c.l.b16 %v829
    %v3139 = vunpack.c.l.b16 %v830
    %v3140 = vunpack.c.l.b16 %v831
    %v3141 = vunpack.c.l.b16 %v832
    %v3142 = vunpack.c.l.b16 %v833
    %v3143 = vunpack.c.l.b16 %v834
    %v3144 = vunpack.c.l.b16 %v835
    %v3145 = vunpack.c.l.b16 %v836
    %v3146 = vunpack.c.l.b16 %v837
    %v3147 = vunpack.c.l.b16 %v838
    %v3148 = vunpack.c.l.b16 %v839
    %v3149 = vunpack.c.l.b16 %v840
    %v3150 = vunpack.c.l.b16 %v841
    %v3151 = vunpack.c.l.b16 %v842
    %v3152 = vunpack.c.l.b16 %v843
    %v3153 = vunpack.c.l.b16 %v844
    %v3154 = vunpack.c.l.b16 %v845
    %v3155 = vunpack.c.l.b16 %v846
    %v3156 = vunpack.c.l.b16 %v847
    %v3157 = vunpack.c.l.b16 %v848
    %v3158 = vunpack.c.l.b16 %v849
    %v3159 = vunpack.c.l.b16 %v850
    %v3160 = vunpack.c.l.b16 %v851
    %v3161 = vunpack.c.l.b16 %v852
    %v3162 = vunpack.c.l.b16 %v853
    %v3163 = vunpack.c.l.b16 %v854
    %v3164 = vunpack.c.l.b16 %v855
    %v3165 = vunpack.c.l.b16 %v856
    %v3166 = vunpack.c.l.b16 %v857
    %v3167 = vunpack.c.l.b16 %v858
    %v3168 = vunpack.c.l.b16 %v859
    %v3169 = vunpack.c.l.b16 %v860
    %v3170 = vunpack.c.l.b16 %v861
    %v3171 = vunpack.c.l.b16 %v862
    %v3172 = vunpack.c.l.b16 %v863
    %v3173 = vunpack.c.l.b16 %v864
    %v3174 = vunpack.c.l.b16 %v865
    %v3175 = vunpack.c.l.b16 %v866
    %v3176 = vunpack.c.l.b16 %v867
    %v3177 = vunpack.c.l.b16 %v868
    %v3178 = vunpack.c.l.b16 %v869
    %v3179 = vunpack.c.l.b16 %v870
    %v3180 = vunpack.c.l.b16 %v871
    %v3181 = vunpack.c.l.b16 %v872
    %v3182 = vunpack.c.l.b16 %v873
    %v3183 = vunpack.c.l.b16 %v874
    %v3184 = vunpack.c.l.b16 %v875
    %v3185 = vunpack.c.l.b16 %v876
    %v3186 = vunpack.c.l.b16 %v877
    %v3187 = vunpack.c.l.b16 %v878
    %v3188 = vunpack.c.l.b16 %v879
    %v3189 = vunpack.c.l.b16 %v880
    %v3190 = vunpack.c.l.b16 %v881
    %v3191 = vunpack.c.l.b16 %v882
    %v3192 = vunpack.c.l.b16 %v883
    %v3193 = vunpack.c.l.b16 %v884
    %v3194 = vunpack.c.l.b16 %v885
    %v3195 = vunpack.c.l.b16 %v886
    %v3196 = vunpack.c.l.b16 %v887
    %v3197 = vunpack.c.l.b16 %v888
    %v3198 = vunpack.c.l.b16 %v889
    %v3199 = vunpack.c.l.b16 %v890
    %v3200 = vunpack.c.l.b16 %v891
    %v3201 = vunpack.c.l.b16 %v892
    %v3202 = vunpack.c.l.b16 %v893
    %v3203 = vunpack.c.l.b16 %v894
    %v3204 = vunpack.c.l.b16 %v895
    %v3205 = vunpack.c.l.b16 %v896
    %v3206 = vunpack.c.l.b16 %v897
    %v3207 = vunpack.c.l.b16 %v898
    %v3208 = vunpack.c.l.b16 %v899
    %v3209 = vunpack.c.l.b16 %v900
    %v3210 = vunpack.c.l.b16 %v901
    %v3211 = vunpack.c.l.b16 %v902
    %v3212 = vunpack.c.l.b16 %v903
    %v3213 = vunpack.c.l.b16 %v904
    %v3214 = vunpack.c.l.b16 %v905
    %v3215 = vunpack.c.l.b16 %v906
    %v3216 = vunpack.c.l.b16 %v907
    %v3217 = vunpack.c.l.b16 %v908
    %v3218 = vunpack.c.l.b16 %v909
    %v3219 = vunpack.c.l.b16 %v910
    %v3220 = vunpack.c.l.b16 %v911
    %v3221 = vunpack.c.l.b16 %v912
    %v3222 = vunpack.c.l.b16 %v913
    %v3223 = vunpack.c.l.b16 %v914
    %v3224 = vunpack.c.l.b16 %v915
    %v3225 = vunpack.c.l.b16 %v916
    %v3226 = vunpack.c.l.b16 %v917
    %v3227 = vunpack.c.l.b16 %v918
    %v3228 = vunpack.c.l.b16 %v919
    %v3229 = vunpack.c.l.b16 %v920
    %v3230 = vunpack.c.l.b16 %v921
    %v3231 = vunpack.c.l.b16 %v922
    %v3232 = vunpack.c.l.b16 %v923
    %v3233 = vunpack.c.l.b16 %v924
    %v3234 = vunpack.c.l.b16 %v925
    %v3235 = vunpack.c.l.b16 %v926
    %v3236 = vunpack.c.l.b16 %v927
    %v3237 = vunpack.c.l.b16 %v928
    %v3238 = vunpack.c.l.b16 %v929
    %v3239 = vunpack.c.l.b16 %v930
    %v3240 = vunpack.c.l.b16 %v931
    %v3241 = vunpack.c.l.b16 %v932
    %v3242 = vunpack.c.l.b16 %v933
    %v3243 = vunpack.c.l.b16 %v934
    %v3244 = vunpack.c.l.b16 %v935
    %v3245 = vunpack.c.l.b16 %v936
    %v3246 = vunpack.c.l.b16 %v937
    %v3247 = vunpack.c.l.b16 %v938
    %v3248 = vunpack.c.l.b16 %v939
    %v3249 = vunpack.c.l.b16 %v940
    %v3250 = vunpack.c.l.b16 %v941
    %v3251 = vunpack.c.l.b16 %v942
    %v3252 = vunpack.c.l.b16 %v943
    %v3253 = vunpack.c.l.b16 %v944
    %v3254 = vunpack.c.l.b16 %v945
    %v3255 = vunpack.c.l.b16 %v946
    %v3256 = vunpack.c.l.b16 %v947
    %v3257 = vunpack.c.l.b16 %v948
    %v3258 = vunpack.c.l.b16 %v949
    %v3259 = vunpack.c.l.b16 %v950
    %v3260 = vunpack.c.l.b16 %v951
    %v3261 = vunpack.c.l.b16 %v952
    %v3262 = vunpack.c.l.b16 %v953
    %v3263 = vunpack.c.l.b16 %v954
    %v3264 = vunpack.c.l.b16 %v955
    %v3265 = vunpack.c.l.b16 %v956
    %v3266 = vunpack.c.l.b16 %v957
    %v3267 = vunpack.c.l.b16 %v958
    %v3268 = vunpack.c.l.b16 %v959
    %v3269 = vunpack.c.l.b16 %v960
    %v3270 = vunpack.c.l.b16 %v961
    %v3271 = vunpack.c.l.b16 %v962
    %v3272 = vunpack.c.l.b16 %v963
    %v3273 = vunpack.c.l.b16 %v964
    %v3274 = vunpack.c.l.b16 %v965
    %v3275 = vunpack.c.l.b16 %v966
    %v3276 = vunpack.c.l.b16 %v967
    %v3277 = vunpack.c.l.b16 %v968
    %v3278 = vunpack.c.l.b16 %v969
    %v3279 = vunpack.c.l.b16 %v970
    %v3280 = vunpack.c.l.b16 %v971
    %v3281 = vunpack.c.l.b16 %v972
    %v3282 = vunpack.c.l.b16 %v973
    %v3283 = vunpack.c.l.b16 %v974
    %v3284 = vunpack.c.l.b16 %v975
    %v3285 = vunpack.c.l.b16 %v976
    %v3286 = vunpack.c.l.b16 %v977
    %v3287 = vunpack.c.l.b16 %v978
    %v3288 = vunpack.c.l.b16 %v979
    %v3289 = vunpack.c.l.b16 %v980
    %v3290 = vunpack.c.l.b16 %v981
    %v3291 = vunpack.c.l.b16 %v982
    %v3292 = vunpack.c.l.b16 %v983
    %v3293 = vunpack.c.l.b16 %v984
    %v3294 = vunpack.c.l.b16 %v985
    %v3295 = vunpack.c.l.b16 %v986
    %v3296 = vunpack.c.l.b16 %v987
    %v3297 = vunpack.c.l.b16 %v988
    %v3298 = vunpack.c.l.b16 %v989
    %v3299 = vunpack.c.l.b16 %v990
    %v3300 = vunpack.c.l.b16 %v991
    %v3301 = vunpack.c.l.b16 %v992
    %v3302 = vunpack.c.l.b16 %v993
    %v3303 = vunpack.c.l.b16 %v994
    %v3304 = vunpack.c.l.b16 %v995
    %v3305 = vunpack.c.l.b16 %v996
    %v3306 = vunpack.c.l.b16 %v997
    %v3307 = vunpack.c.l.b16 %v998
    %v3308 = vunpack.c.l.b16 %v999
    %v3309 = vunpack.c.l.b16 %v1000
    %v3310 = vunpack.c.l.b16 %v1001
    %v3311 = vunpack.c.l.b16 %v1002
    %v3312 = vunpack.c.l.b16 %v1003
    %v3313 = vunpack.c.l.b16 %v1004
    %v3314 = vunpack.c.l.b16 %v1005
    %v3315 = vunpack.c.l.b16 %v1006
    %v3316 = vunpack.c.l.b16 %v1007
    %v3317 = vunpack.c.l.b16 %v1008
    %v3318 = vunpack.c.l.b16 %v1009
    %v3319 = vunpack.c.l.b16 %v1010
    %v3320 = vunpack.c.l.b16 %v1011
    %v3321 = vunpack.c.l.b16 %v1012
    %v3322 = vunpack.c.l.b16 %v1013
    %v3323 = vunpack.c.l.b16 %v1014
    %v3324 = vunpack.c.l.b16 %v1015
    %v3325 = vunpack.c.l.b16 %v1016
    %v3326 = vunpack.c.l.b16 %v1017
    %v3327 = vunpack.c.l.b16 %v1018
    %v3328 = vunpack.c.l.b16 %v1019
    %v3329 = vunpack.c.l.b16 %v1020
    %v3330 = vunpack.c.l.b16 %v1021
    %v3331 = vunpack.c.l.b16 %v1022
    %v3332 = vunpack.c.l.b16 %v1023
    %v3333 = vunpack.c.l.b16 %v1024
    %v3334 = vunpack.c.l.b16 %v1025
    %v3335 = vunpack.c.l.b16 %v1026
    %v3336 = vunpack.c.l.b16 %v1027
    %v3337 = vunpack.c.l.b16 %v1028
    %v3338 = vunpack.c.l.b16 %v1029
    %v3339 = vunpack.c.l.b16 %v1030
    %v3340 = vunpack.c.l.b16 %v1031
    %v3341 = vunpack.c.l.b16 %v1032
    %v3342 = vunpack.c.l.b16 %v1033
    %v3343 = vunpack.c.l.b16 %v1034
    %v3344 = vunpack.c.l.b16 %v1035
    %v3345 = vunpack.c.l.b16 %v1036
    %v3346 = vunpack.c.l.b16 %v1037
    %v3347 = vunpack.c.l.b16 %v1038
    %v3348 = vunpack.c.l.b16 %v1039
    %v3349 = vunpack.c.l.b16 %v1040
    %v3350 = vunpack.c.l.b16 %v1041
    %v3351 = vunpack.c.l.b16 %v1042
    %v3352 = vunpack.c.l.b16 %v1043
    %v3353 = vunpack.c.l.b16 %v1044
    %v3354 = vunpack.c.l.b16 %v1045
    %v3355 = vunpack.c.l.b16 %v1046
    %v3356 = vunpack.c.l.b16 %v1047
    %v3357 = vunpack.c.l.b16 %v1048
    %v3358 = vunpack.c.l.b16 %v1049
    %v3359 = vunpack.c.l.b16 %v1050
    %v3360 = vunpack.c.l.b16 %v1051
    %v3361 = vunpack.c.l.b16 %v1052
    %v3362 = vunpack.c.l.b16 %v1053
    %v3363 = vunpack.c.l.b16 %v1054
    %v3364 = vunpack.c.l.b16 %v1055
    %v3365 = vunpack.c.l.b16 %v1056
    %v3366 = vunpack.c.l.b16 %v1057
    %v3367 = vunpack.c.l.b16 %v1058
    %v3368 = vunpack.c.l.b16 %v1059
    %v3369 = vunpack.c.l.b16 %v1060
    %v3370 = vunpack.c.l.b16 %v1061
    %v3371 = vunpack.c.l.b16 %v1062
    %v3372 = vunpack.c.l.b16 %v1063
    %v3373 = vunpack.c.l.b16 %v1064
    %v3374 = vunpack.c.l.b16 %v1065
    %v3375 = vunpack.c.l.b16 %v1066
    %v3376 = vunpack.c.l.b16 %v1067
    %v3377 = vunpack.c.l.b16 %v1068
    %v3378 = vunpack.c.l.b16 %v1069
    %v3379 = vunpack.c.l.b16 %v1070
    %v3380 = vunpack.c.l.b16 %v1071
    %v3381 = vunpack.c.l.b16 %v1072
    %v3382 = vunpack.c.l.b16 %v1073
    %v3383 = vunpack.c.l.b16 %v1074
    %v3384 = vunpack.c.l.b16 %v1075
    %v3385 = vunpack.c.l.b16 %v1076
    %v3386 = vunpack.c.l.b16 %v1077
    %v3387 = vunpack.c.l.b16 %v1078
    %v3388 = vunpack.c.l.b16 %v1079
    %v3389 = vunpack.c.l.b16 %v1080
    %v3390 = vunpack.c.l.b16 %v1081
    %v3391 = vunpack.c.l.b16 %v1082
    %v3392 = vunpack.c.l.b16 %v1083
    %v3393 = vunpack.c.l.b16 %v1084
    %v3394 = vunpack.c.l.b16 %v1085
    %v3395 = vunpack.c.l.b16 %v1086
    %v3396 = vunpack.c.l.b16 %v1087
    %v3397 = vunpack.c.l.b16 %v1088
    %v3398 = vunpack.c.l.b16 %v1089
    %v3399 = vunpack.c.l.b16 %v1090
    %v3400 = vunpack.c.l.b16 %v1091
    %v3401 = vunpack.c.l.b16 %v1092
    %v3402 = vunpack.c.l.b16 %v1093
    %v3403 = vunpack.c.l.b16 %v1094
    %v3404 = vunpack.c.l.b16 %v1095
    %v3405 = vunpack.c.l.b16 %v1096
    %v3406 = vunpack.c.l.b16 %v1097
    %v3407 = vunpack.c.l.b16 %v1098
    %v3408 = vunpack.c.l.b16 %v1099
    %v3409 = vunpack.c.l.b16 %v1100
    %v3410 = vunpack.c.l.b16 %v1101
    %v3411 = vunpack.c.l.b16 %v1102
    %v3412 = vunpack.c.l.b16 %v1103
    %v3413 = vunpack.c.l.b16 %v1104
    %v3414 = vunpack.c.l.b16 %v1105
    %v3415 = vunpack.c.l.b16 %v1106
    %v3416 = vunpack.c.l.b16 %v1107
    %v3417 = vunpack.c.l.b16 %v1108
    %v3418 = vunpack.c.l.b16 %v1109
    %v3419 = vunpack.c.l.b16 %v1110
    %v3420 = vunpack.c.l.b16 %v1111
    %v3421 = vunpack.c.l.b16 %v1112
    %v3422 = vunpack.c.l.b16 %v1113
    %v3423 = vunpack.c.l.b16 %v1114
    %v3424 = vunpack.c.l.b16 %v1115
    %v3425 = vunpack.c.l.b16 %v1116
    %v3426 = vunpack.c.l.b16 %v1117
    %v3427 = vunpack.c.l.b16 %v1118
    %v3428 = vunpack.c.l.b16 %v1119
    %v3429 = vunpack.c.l.b16 %v1120
    %v3430 = vunpack.c.l.b16 %v1121
    %v3431 = vunpack.c.l.b16 %v1122
    %v3432 = vunpack.c.l.b16 %v1123
    %v3433 = vunpack.c.l.b16 %v1124
    %v3434 = vunpack.c.l.b16 %v1125
    %v3435 = vunpack.c.l.b16 %v1126
    %v3436 = vunpack.c.l.b16 %v1127
    %v3437 = vunpack.c.l.b16 %v1128
    %v3438 = vunpack.c.l.b16 %v1129
    %v3439 = vunpack.c.l.b16 %v1130
    %v3440 = vunpack.c.l.b16 %v1131
    %v3441 = vunpack.c.l.b16 %v1132
    %v3442 = vunpack.c.l.b16 %v1133
    %v3443 = vunpack.c.l.b16 %v1134
    %v3444 = vunpack.c.l.b16 %v1135
    %v3445 = vunpack.c.l.b16 %v1136
    %v3446 = vunpack.c.l.b16 %v1137
    %v3447 = vunpack.c.l.b16 %v1138
    %v3448 = vunpack.c.l.b16 %v1139
    %v3449 = vunpack.c.l.b16 %v1140
    %v3450 = vunpack.c.l.b16 %v1141
    %v3451 = vunpack.c.l.b16 %v1142
    %v3452 = vunpack.c.l.b16 %v1143
    %v3453 = vunpack.c.l.b16 %v1144
    %v3454 = vunpack.c.l.b16 %v1145
    %v3455 = vunpack.c.l.b16 %v1146
    %v3456 = vunpack.c.l.b16 %v1147
    %v3457 = vunpack.c.l.b16 %v1148
    %v3458 = vunpack.c.l.b16 %v1149
    %v3459 = vunpack.c.l.b16 %v1150
    %v3460 = vunpack.c.l.b16 %v1151
    %v3461 = vunpack.c.l.b16 %v1152
    %v3462 = vunpack.c.l.b16 %v1153
    %v3463 = vunpack.c.l.b16 %v1154
    %v3464 = vunpack.c.l.b16 %v1155
    %v3465 = vunpack.c.l.b16 %v1156
    %v3466 = vunpack.c.l.b16 %v1157
    %v3467 = vunpack.c.l.b16 %v1158
    %v3468 = vunpack.c.l.b16 %v1159
    %v3469 = vunpack.c.l.b16 %v1160
    %v3470 = vunpack.c.l.b16 %v1161
    %v3471 = vunpack.c.l.b16 %v1162
    %v3472 = vunpack.c.l.b16 %v1163
    %v3473 = vunpack.c.l.b16 %v1164
    %v3474 = vunpack.c.l.b16 %v1165
    %v3475 = vunpack.c.l.b16 %v1166
    %v3476 = vunpack.c.l.b16 %v1167
    %v3477 = vunpack.c.l.b16 %v1168
    %v3478 = vunpack.c.l.b16 %v1169
    %v3479 = vunpack.c.l.b16 %v1170
    %v3480 = vunpack.c.l.b16 %v1171
    %v3481 = vunpack.c.l.b16 %v1172
    %v3482 = vunpack.c.l.b16 %v1173
    %v3483 = vunpack.c.l.b16 %v1174
    %v3484 = vunpack.c.l.b16 %v1175
    %v3485 = vunpack.c.l.b16 %v1176
    %v3486 = vunpack.c.l.b16 %v1177
    %v3487 = vunpack.c.l.b16 %v1178
    %v3488 = vunpack.c.l.b16 %v1179
    %v3489 = vunpack.c.l.b16 %v1180
    %v3490 = vunpack.c.l.b16 %v1181
    %v3491 = vunpack.c.l.b16 %v1182
    %v3492 = vunpack.c.l.b16 %v1183
    %v3493 = vunpack.c.l.b16 %v1184
    %v3494 = vunpack.c.l.b16 %v1185
    %v3495 = vunpack.c.l.b16 %v1186
    %v3496 = vunpack.c.l.b16 %v1187
    %v3497 = vunpack.c.l.b16 %v1188
    %v3498 = vunpack.c.l.b16 %v1189
    %v3499 = vunpack.c.l.b16 %v1190
    %v3500 = vunpack.c.l.b16 %v1191
    %v3501 = vunpack.c.l.b16 %v1192
    %v3502 = vunpack.c.l.b16 %v1193
    %v3503 = vunpack.c.l.b16 %v1194
    %v3504 = vunpack.c.l.b16 %v1195
    %v3505 = vunpack.c.l.b16 %v1196
    %v3506 = vunpack.c.l.b16 %v1197
    %v3507 = vunpack.c.l.b16 %v1198
    %v3508 = vunpack.c.l.b16 %v1199
    %v3509 = vunpack.c.l.b16 %v1200
    %v3510 = vunpack.c.l.b16 %v1201
    %v3511 = vunpack.c.l.b16 %v1202
    %v3512 = vunpack.c.l.b16 %v1203
    %v3513 = vunpack.c.l.b16 %v1204
    %v3514 = vunpack.c.l.b16 %v1205
    %v3515 = vunpack.c.l.b16 %v1206
    %v3516 = vunpack.c.l.b16 %v1207
    %v3517 = vunpack.c.l.b16 %v1208
    %v3518 = vunpack.c.l.b16 %v1209
    %v3519 = vunpack.c.l.b16 %v1210
    %v3520 = vunpack.c.l.b16 %v1211
    %v3521 = vunpack.c.l.b16 %v1212
    %v3522 = vunpack.c.l.b16 %v1213
    %v3523 = vunpack.c.l.b16 %v1214
    %v3524 = vunpack.c.l.b16 %v1215
    %v3525 = vunpack.c.l.b16 %v1216
    %v3526 = vunpack.c.l.b16 %v1217
    %v3527 = vunpack.c.l.b16 %v1218
    %v3528 = vunpack.c.l.b16 %v1219
    %v3529 = vunpack.c.l.b16 %v1220
    %v3530 = vunpack.c.l.b16 %v1221
    %v3531 = vunpack.c.l.b16 %v1222
    %v3532 = vunpack.c.l.b16 %v1223
    %v3533 = vunpack.c.l.b16 %v1224
    %v3534 = vunpack.c.l.b16 %v1225
    %v3535 = vunpack.c.l.b16 %v1226
    %v3536 = vunpack.c.l.b16 %v1227
    %v3537 = vunpack.c.l.b16 %v1228
    %v3538 = vunpack.c.l.b16 %v1229
    %v3539 = vunpack.c.l.b16 %v1230
    %v3540 = vunpack.c.l.b16 %v1231
    %v3541 = vunpack.c.l.b16 %v1232
    %v3542 = vunpack.c.l.b16 %v1233
    %v3543 = vunpack.c.l.b16 %v1234
    %v3544 = vunpack.c.l.b16 %v1235
    %v3545 = vunpack.c.l.b16 %v1236
    %v3546 = vunpack.c.l.b16 %v1237
    %v3547 = vunpack.c.l.b16 %v1238
    %v3548 = vunpack.c.l.b16 %v1239
    %v3549 = vunpack.c.l.b16 %v1240
    %v3550 = vunpack.c.l.b16 %v1241
    %v3551 = vunpack.c.l.b16 %v1242
    %v3552 = vunpack.c.l.b16 %v1243
    %v3553 = vunpack.c.l.b16 %v1244
    %v3554 = vunpack.c.l.b16 %v1245
    %v3555 = vunpack.c.l.b16 %v1246
    %v3556 = vunpack.c.l.b16 %v1247
    %v3557 = vunpack.c.l.b16 %v1248
    %v3558 = vunpack.c.l.b16 %v1249
    %v3559 = vunpack.c.l.b16 %v1250
    %v3560 = vunpack.c.l.b16 %v1251
    %v3561 = vunpack.c.l.b16 %v1252
    %v3562 = vunpack.c.l.b16 %v1253
    %v3563 = vunpack.c.l.b16 %v1254
    %v3564 = vunpack.c.l.b16 %v1255
    %v3565 = vunpack.c.l.b16 %v1256
    %v3566 = vunpack.c.l.b16 %v1257
    %v3567 = vunpack.c.l.b16 %v1258
    %v3568 = vunpack.c.l.b16 %v1259
    %v3569 = vunpack.c.l.b16 %v1260
    %v3570 = vunpack.c.l.b16 %v1261
    %v3571 = vunpack.c.l.b16 %v1262
    %v3572 = vunpack.c.l.b16 %v1263
    %v3573 = vunpack.c.l.b16 %v1264
    %v3574 = vunpack.c.l.b16 %v1265
    %v3575 = vunpack.c.l.b16 %v1266
    %v3576 = vunpack.c.l.b16 %v1267
    %v3577 = vunpack.c.l.b16 %v1268
    %v3578 = vunpack.c.l.b16 %v1269
    %v3579 = vunpack.c.l.b16 %v1270
    %v3580 = vunpack.c.l.b16 %v1271
    %v3581 = vunpack.c.l.b16 %v1272
    %v3582 = vunpack.c.l.b16 %v1273
    %v3583 = vunpack.c.l.b16 %v1274
    %v3584 = vunpack.c.l.b16 %v1275
    %v3585 = vunpack.c.l.b16 %v1276
    %v3586 = vunpack.c.l.b16 %v1277
    %v3587 = vunpack.c.l.b16 %v1278
    %v3588 = vunpack.c.l.b16 %v1279
    %v3589 = vunpack.c.l.b16 %v1280
    %v3590 = vunpack.c.l.b16 %v1281
    %v3591 = vunpack.c.l.b16 %v1282
    %v3592 = vunpack.c.l.b16 %v1283
    %v3593 = vunpack.c.l.b16 %v1284
    %v3594 = vunpack.c.l.b16 %v1285
    %v3595 = vunpack.c.l.b16 %v1286
    %v3596 = vunpack.c.l.b16 %v1287
    %v3597 = vunpack.c.l.b16 %v1288
    %v3598 = vunpack.c.l.b16 %v1289
    %v3599 = vunpack.c.l.b16 %v1290
    %v3600 = vunpack.c.l.b16 %v1291
    %v3601 = vunpack.c.l.b16 %v1292
    %v3602 = vunpack.c.l.b16 %v1293
    %v3603 = vunpack.c.l.b16 %v1294
    %v3604 = vunpack.c.l.b16 %v1295
    %v3605 = vunpack.c.l.b16 %v1296
    %v3606 = vunpack.c.l.b16 %v1297
    %v3607 = vunpack.c.l.b16 %v1298
    %v3608 = vunpack.c.l.b16 %v1299
    %v3609 = vunpack.c.l.b16 %v1300
    %v3610 = vunpack.c.l.b16 %v1301
    %v3611 = vunpack.c.l.b16 %v1302
    %v3612 = vunpack.c.l.b16 %v1303
    %v3613 = vunpack.c.l.b16 %v1304
    %v3614 = vunpack.c.l.b16 %v1305
    %v3615 = vunpack.c.l.b16 %v1306
    %v3616 = vunpack.c.l.b16 %v1307
    %v3617 = vunpack.c.l.b16 %v1308
    %v3618 = vunpack.c.l.b16 %v1309
    %v3619 = vunpack.c.l.b16 %v1310
    %v3620 = vunpack.c.l.b16 %v1311
    %v3621 = vunpack.c.l.b16 %v1312
    %v3622 = vunpack.c.l.b16 %v1313
    %v3623 = vunpack.c.l.b16 %v1314
    %v3624 = vunpack.c.l.b16 %v1315
    %v3625 = vunpack.c.l.b16 %v1316
    %v3626 = vunpack.c.l.b16 %v1317
    %v3627 = vunpack.c.l.b16 %v1318
    %v3628 = vunpack.c.l.b16 %v1319
    %v3629 = vunpack.c.l.b16 %v1320
    %v3630 = vunpack.c.l.b16 %v1321
    %v3631 = vunpack.c.l.b16 %v1322
    %v3632 = vunpack.c.l.b16 %v1323
    %v3633 = vunpack.c.l.b16 %v1324
    %v3634 = vunpack.c.l.b16 %v1325
    %v3635 = vunpack.c.l.b16 %v1326
    %v3636 = vunpack.c.l.b16 %v1327
    %v3637 = vunpack.c.l.b16 %v1328
    %v3638 = vunpack.c.l.b16 %v1329
    %v3639 = vunpack.c.l.b16 %v1330
    %v3640 = vunpack.c.l.b16 %v1331
    %v3641 = vunpack.c.l.b16 %v1332
    %v3642 = vunpack.c.l.b16 %v1333
    %v3643 = vunpack.c.l.b16 %v1334
    %v3644 = vunpack.c.l.b16 %v1335
    %v3645 = vunpack.c.l.b16 %v1336
    %v3646 = vunpack.c.l.b16 %v1337
    %v3647 = vunpack.c.l.b16 %v1338
    %v3648 = vunpack.c.l.b16 %v1339
    %v3649 = vunpack.c.l.b16 %v1340
    %v3650 = vunpack.c.l.b16 %v1341
    %v3651 = vunpack.c.l.b16 %v1342
    %v3652 = vunpack.c.l.b16 %v1343
    %v3653 = vunpack.c.l.b16 %v1344
    %v3654 = vunpack.c.l.b16 %v1345
    %v3655 = vunpack.c.l.b16 %v1346
    %v3656 = vunpack.c.l.b16 %v1347
    %v3657 = vunpack.c.l.b16 %v1348
    %v3658 = vunpack.c.l.b16 %v1349
    %v3659 = vunpack.c.l.b16 %v1350
    %v3660 = vunpack.c.l.b16 %v1351
    %v3661 = vunpack.c.l.b16 %v1352
    %v3662 = vunpack.c.l.b16 %v1353
    %v3663 = vunpack.c.l.b16 %v1354
    %v3664 = vunpack.c.l.b16 %v1355
    %v3665 = vunpack.c.l.b16 %v1356
    %v3666 = vunpack.c.l.b16 %v1357
    %v3667 = vunpack.c.l.b16 %v1358
    %v3668 = vunpack.c.l.b16 %v1359
    %v3669 = vunpack.c.l.b16 %v1360
    %v3670 = vunpack.c.l.b16 %v1361
    %v3671 = vunpack.c.l.b16 %v1362
    %v3672 = vunpack.c.l.b16 %v1363
    %v3673 = vunpack.c.l.b16 %v1364
    %v3674 = vunpack.c.l.b16 %v1365
    %v3675 = vunpack.c.l.b16 %v1366
    %v3676 = vunpack.c.l.b16 %v1367
    %v3677 = vunpack.c.l.b16 %v1368
    %v3678 = vunpack.c.l.b16 %v1369
    %v3679 = vunpack.c.l.b16 %v1370
    %v3680 = vunpack.c.l.b16 %v1371
    %v3681 = vunpack.c.l.b16 %v1372
    %v3682 = vunpack.c.l.b16 %v1373
    %v3683 = vunpack.c.l.b16 %v1374
    %v3684 = vunpack.c.l.b16 %v1375
    %v3685 = vunpack.c.l.b16 %v1376
    %v3686 = vunpack.c.l.b16 %v1377
    %v3687 = vunpack.c.l.b16 %v1378
    %v3688 = vunpack.c.l.b16 %v1379
    %v3689 = vunpack.c.l.b16 %v1380
    %v3690 = vunpack.c.l.b16 %v1381
    %v3691 = vunpack.c.l.b16 %v1382
    %v3692 = vunpack.c.l.b16 %v1383
    %v3693 = vunpack.c.l.b16 %v1384
    %v3694 = vunpack.c.l.b16 %v1385
    %v3695 = vunpack.c.l.b16 %v1386
    %v3696 = vunpack.c.l.b16 %v1387
    %v3697 = vunpack.c.l.b16 %v1388
    %v3698 = vunpack.c.l.b16 %v1389
    %v3699 = vunpack.c.l.b16 %v1390
    %v3700 = vunpack.c.l.b16 %v1391
    %v3701 = vunpack.c.l.b16 %v1392
    %v3702 = vunpack.c.l.b16 %v1393
    %v3703 = vunpack.c.l.b16 %v1394
    %v3704 = vunpack.c.l.b16 %v1395
    %v3705 = vunpack.c.l.b16 %v1396
    %v3706 = vunpack.c.l.b16 %v1397
    %v3707 = vunpack.c.l.b16 %v1398
    %v3708 = vunpack.c.l.b16 %v1399
    %v3709 = vunpack.c.l.b16 %v1400
    %v3710 = vunpack.c.l.b16 %v1401
    %v3711 = vunpack.c.l.b16 %v1402
    %v3712 = vunpack.c.l.b16 %v1403
    %v3713 = vunpack.c.l.b16 %v1404
    %v3714 = vunpack.c.l.b16 %v1405
    %v3715 = vunpack.c.l.b16 %v1406
    %v3716 = vunpack.c.l.b16 %v1407
    %v3717 = vunpack.c.l.b16 %v1408
    %v3718 = vunpack.c.l.b16 %v1409
    %v3719 = vunpack.c.l.b16 %v1410
    %v3720 = vunpack.c.l.b16 %v1411
    %v3721 = vunpack.c.l.b16 %v1412
    %v3722 = vunpack.c.l.b16 %v1413
    %v3723 = vunpack.c.l.b16 %v1414
    %v3724 = vunpack.c.l.b16 %v1415
    %v3725 = vunpack.c.l.b16 %v1416
    %v3726 = vunpack.c.l.b16 %v1417
    %v3727 = vunpack.c.l.b16 %v1418
    %v3728 = vunpack.c.l.b16 %v1419
    %v3729 = vunpack.c.l.b16 %v1420
    %v3730 = vunpack.c.l.b16 %v1421
    %v3731 = vunpack.c.l.b16 %v1422
    %v3732 = vunpack.c.l.b16 %v1423
    %v3733 = vunpack.c.l.b16 %v1424
    %v3734 = vunpack.c.l.b16 %v1425
    %v3735 = vunpack.c.l.b16 %v1426
    %v3736 = vunpack.c.l.b16 %v1427
    %v3737 = vunpack.c.l.b16 %v1428
    %v3738 = vunpack.c.l.b16 %v1429
    %v3739 = vunpack.c.l.b16 %v1430
    %v3740 = vunpack.c.l.b16 %v1431
    %v3741 = vunpack.c.l.b16 %v1432
    %v3742 = vunpack.c.l.b16 %v1433
    %v3743 = vunpack.c.l.b16 %v1434
    %v3744 = vunpack.c.l.b16 %v1435
    %v3745 = vunpack.c.l.b16 %v1436
    %v3746 = vunpack.c.l.b16 %v1437
    %v3747 = vunpack.c.l.b16 %v1438
    %v3748 = vunpack.c.l.b16 %v1439
    %v3749 = vunpack.c.l.b16 %v1440
    %v3750 = vunpack.c.l.b16 %v1441
    %v3751 = vunpack.c.l.b16 %v1442
    %v3752 = vunpack.c.l.b16 %v1443
    %v3753 = vunpack.c.l.b16 %v1444
    %v3754 = vunpack.c.l.b16 %v1445
    %v3755 = vunpack.c.l.b16 %v1446
    %v3756 = vunpack.c.l.b16 %v1447
    %v3757 = vunpack.c.l.b16 %v1448
    %v3758 = vunpack.c.l.b16 %v1449
    %v3759 = vunpack.c.l.b16 %v1450
    %v3760 = vunpack.c.l.b16 %v1451
    %v3761 = vunpack.c.l.b16 %v1452
    %v3762 = vunpack.c.l.b16 %v1453
    %v3763 = vunpack.c.l.b16 %v1454
    %v3764 = vunpack.c.l.b16 %v1455
    %v3765 = vunpack.c.l.b16 %v1456
    %v3766 = vunpack.c.l.b16 %v1457
    %v3767 = vunpack.c.l.b16 %v1458
    %v3768 = vunpack.c.l.b16 %v1459
    %v3769 = vunpack.c.l.b16 %v1460
    %v3770 = vunpack.c.l.b16 %v1461
    %v3771 = vunpack.c.l.b16 %v1462
    %v3772 = vunpack.c.l.b16 %v1463
    %v3773 = vunpack.c.l.b16 %v1464
    %v3774 = vunpack.c.l.b16 %v1465
    %v3775 = vunpack.c.l.b16 %v1466
    %v3776 = vunpack.c.l.b16 %v1467
    %v3777 = vunpack.c.l.b16 %v1468
    %v3778 = vunpack.c.l.b16 %v1469
    %v3779 = vunpack.c.l.b16 %v1470
    %v3780 = vunpack.c.l.b16 %v1471
    %v3781 = vunpack.c.l.b16 %v1472
    %v3782 = vunpack.c.l.b16 %v1473
    %v3783 = vunpack.c.l.b16 %v1474
    %v3784 = vunpack.c.l.b16 %v1475
    %v3785 = vunpack.c.l.b16 %v1476
    %v3786 = vunpack.c.l.b16 %v1477
    %v3787 = vunpack.c.l.b16 %v1478
    %v3788 = vunpack.c.l.b16 %v1479
    %v3789 = vunpack.c.l.b16 %v1480
    %v3790 = vunpack.c.l.b16 %v1481
    %v3791 = vunpack.c.l.b16 %v1482
    %v3792 = vunpack.c.l.b16 %v1483
    %v3793 = vunpack.c.l.b16 %v1484
    %v3794 = vunpack.c.l.b16 %v1485
    %v3795 = vunpack.c.l.b16 %v1486
    %v3796 = vunpack.c.l.b16 %v1487
    %v3797 = vunpack.c.l.b16 %v1488
    %v3798 = vunpack.c.l.b16 %v1489
    %v3799 = vunpack.c.l.b16 %v1490
    %v3800 = vunpack.c.l.b16 %v1491
    %v3801 = vunpack.c.l.b16 %v1492
    %v3802 = vunpack.c.l.b16 %v1493
    %v3803 = vunpack.c.l.b16 %v1494
    %v3804 = vunpack.c.l.b16 %v1495
    %v3805 = vunpack.c.l.b16 %v1496
    %v3806 = vunpack.c.l.b16 %v1497
    %v3807 = vunpack.c.l.b16 %v1498
    %v3808 = vunpack.c.l.b16 %v1499
    %v3809 = vunpack.c.l.b16 %v1500
    %v3810 = vunpack.c.l.b16 %v1501
    %v3811 = vunpack.c.l.b16 %v1502
    %v3812 = vunpack.c.l.b16 %v1503
    %v3813 = vunpack.c.l.b16 %v1504
    %v3814 = vunpack.c.l.b16 %v1505
    %v3815 = vunpack.c.l.b16 %v1506
    %v3816 = vunpack.c.l.b16 %v1507
    %v3817 = vunpack.c.l.b16 %v1508
    %v3818 = vunpack.c.l.b16 %v1509
    %v3819 = vunpack.c.l.b16 %v1510
    %v3820 = vunpack.c.l.b16 %v1511
    %v3821 = vunpack.c.l.b16 %v1512
    %v3822 = vunpack.c.l.b16 %v1513
    %v3823 = vunpack.c.l.b16 %v1514
    %v3824 = vunpack.c.l.b16 %v1515
    %v3825 = vunpack.c.l.b16 %v1516
    %v3826 = vunpack.c.l.b16 %v1517
    %v3827 = vunpack.c.l.b16 %v1518
    %v3828 = vunpack.c.l.b16 %v1519
    %v3829 = vunpack.c.l.b16 %v1520
    %v3830 = vunpack.c.l.b16 %v1521
    %v3831 = vunpack.c.l.b16 %v1522
    %v3832 = vunpack.c.l.b16 %v1523
    %v3833 = vunpack.c.l.b16 %v1524
    %v3834 = vunpack.c.l.b16 %v1525
    %v3835 = vunpack.c.l.b16 %v1526
    %v3836 = vunpack.c.l.b16 %v1527
    %v3837 = vunpack.c.l.b16 %v1528
    %v3838 = vunpack.c.l.b16 %v1529
    %v3839 = vunpack.c.l.b16 %v1530
    %v3840 = vunpack.c.l.b16 %v1531
    %v3841 = vunpack.c.l.b16 %v1532
    %v3842 = vunpack.c.l.b16 %v1533
    %v3843 = vunpack.c.l.b16 %v1534
    %v3844 = vunpack.c.l.b16 %v1535
    %v3845 = vunpack.c.l.b16 %v1536
    %v3846 = vunpack.c.l.b16 %v1537
    %v3847 = vunpack.c.l.b16 %v1538
    %v3848 = vunpack.c.l.b16 %v1539
    %v3849 = vunpack.c.l.b16 %v1540
    %v3850 = vunpack.c.l.b16 %v1541
    %v3851 = vunpack.c.l.b16 %v1542
    %v3852 = vunpack.c.l.b16 %v1543
    %v3853 = vunpack.c.l.b16 %v1544
    %v3854 = vunpack.c.l.b16 %v1545
    %v3855 = vunpack.c.l.b16 %v1546
    %v3856 = vunpack.c.l.b16 %v1547
    %v3857 = vunpack.c.l.b16 %v1548
    %v3858 = vunpack.c.l.b16 %v1549
    %v3859 = vunpack.c.l.b16 %v1550
    %v3860 = vunpack.c.l.b16 %v1551
    %v3861 = vunpack.c.l.b16 %v1552
    %v3862 = vunpack.c.l.b16 %v1553
    %v3863 = vunpack.c.l.b16 %v1554
    %v3864 = vunpack.c.l.b16 %v1555
    %v3865 = vunpack.c.l.b16 %v1556
    %v3866 = vunpack.c.l.b16 %v1557
    %v3867 = vunpack.c.l.b16 %v1558
    %v3868 = vunpack.c.l.b16 %v1559
    %v3869 = vunpack.c.l.b16 %v1560
    %v3870 = vunpack.c.l.b16 %v1561
    %v3871 = vunpack.c.l.b16 %v1562
    %v3872 = vunpack.c.l.b16 %v1563
    %v3873 = vunpack.c.l.b16 %v1564
    %v3874 = vunpack.c.l.b16 %v1565
    %v3875 = vunpack.c.l.b16 %v1566
    %v3876 = vunpack.c.l.b16 %v1567
    %v3877 = vunpack.c.l.b16 %v1568
    %v3878 = vunpack.c.l.b16 %v1569
    %v3879 = vunpack.c.l.b16 %v1570
    %v3880 = vunpack.c.l.b16 %v1571
    %v3881 = vunpack.c.l.b16 %v1572
    %v3882 = vunpack.c.l.b16 %v1573
    %v3883 = vunpack.c.l.b16 %v1574
    %v3884 = vunpack.c.l.b16 %v1575
    %v3885 = vunpack.c.l.b16 %v1576
    %v3886 = vunpack.c.l.b16 %v1577
    %v3887 = vunpack.c.l.b16 %v1578
    %v3888 = vunpack.c.l.b16 %v1579
    %v3889 = vunpack.c.l.b16 %v1580
    %v3890 = vunpack.c.l.b16 %v1581
    %v3891 = vunpack.c.l.b16 %v1582
    %v3892 = vunpack.c.l.b16 %v1583
    %v3893 = vunpack.c.l.b16 %v1584
    %v3894 = vunpack.c.l.b16 %v1585
    %v3895 = vunpack.c.l.b16 %v1586
    %v3896 = vunpack.c.l.b16 %v1587
    %v3897 = vunpack.c.l.b16 %v1588
    %v3898 = vunpack.c.l.b16 %v1589
    %v3899 = vunpack.c.l.b16 %v1590
    %v3900 = vunpack.c.l.b16 %v1591
    %v3901 = vunpack.c.l.b16 %v1592
    %v3902 = vunpack.c.l.b16 %v1593
    %v3903 = vunpack.c.l.b16 %v1594
    %v3904 = vunpack.c.l.b16 %v1595
    %v3905 = vunpack.c.l.b16 %v1596
    %v3906 = vunpack.c.l.b16 %v1597
    %v3907 = vunpack.c.l.b16 %v1598
    %v3908 = vunpack.c.l.b16 %v1599
    %v3909 = vunpack.c.l.b16 %v1600
    %v3910 = vunpack.c.l.b16 %v1601
    %v3911 = vunpack.c.l.b16 %v1602
    %v3912 = vunpack.c.l.b16 %v1603
    %v3913 = vunpack.c.l.b16 %v1604
    %v3914 = vunpack.c.l.b16 %v1605
    %v3915 = vunpack.c.l.b16 %v1606
    %v3916 = vunpack.c.l.b16 %v1607
    %v3917 = vunpack.c.l.b16 %v1608
    %v3918 = vunpack.c.l.b16 %v1609
    %v3919 = vunpack.c.l.b16 %v1610
    %v3920 = vunpack.c.l.b16 %v1611
    %v3921 = vunpack.c.l.b16 %v1612
    %v3922 = vunpack.c.l.b16 %v1613
    %v3923 = vunpack.c.l.b16 %v1614
    %v3924 = vunpack.c.l.b16 %v1615
    %v3925 = vunpack.c.l.b16 %v1616
    %v3926 = vunpack.c.l.b16 %v1617
    %v3927 = vunpack.c.l.b16 %v1618
    %v3928 = vunpack.c.l.b16 %v1619
    %v3929 = vunpack.c.l.b16 %v1620
    %v3930 = vunpack.c.l.b16 %v1621
    %v3931 = vunpack.c.l.b16 %v1622
    %v3932 = vunpack.c.l.b16 %v1623
    %v3933 = vunpack.c.l.b16 %v1624
    %v3934 = vunpack.c.l.b16 %v1625
    %v3935 = vunpack.c.l.b16 %v1626
    %v3936 = vunpack.c.l.b16 %v1627
    %v3937 = vunpack.c.l.b16 %v1628
    %v3938 = vunpack.c.l.b16 %v1629
    %v3939 = vunpack.c.l.b16 %v1630
    %v3940 = vunpack.c.l.b16 %v1631
    %v3941 = vunpack.c.l.b16 %v1632
    %v3942 = vunpack.c.l.b16 %v1633
    %v3943 = vunpack.c.l.b16 %v1634
    %v3944 = vunpack.c.l.b16 %v1635
    %v3945 = vunpack.c.l.b16 %v1636
    %v3946 = vunpack.c.l.b16 %v1637
    %v3947 = vunpack.c.l.b16 %v1638
    %v3948 = vunpack.c.l.b16 %v1639
    %v3949 = vunpack.c.l.b16 %v1640
    %v3950 = vunpack.c.l.b16 %v1641
    %v3951 = vunpack.c.l.b16 %v1642
    %v3952 = vunpack.c.l.b16 %v1643
    %v3953 = vunpack.c.l.b16 %v1644
    %v3954 = vunpack.c.l.b16 %v1645
    %v3955 = vunpack.c.l.b16 %v1646
    %v3956 = vunpack.c.l.b16 %v1647
    %v3957 = vunpack.c.l.b16 %v1648
    %v3958 = vunpack.c.l.b16 %v1649
    %v3959 = vunpack.c.l.b16 %v1650
    %v3960 = vunpack.c.l.b16 %v1651
    %v3961 = vunpack.c.l.b16 %v1652
    %v3962 = vunpack.c.l.b16 %v1653
    %v3963 = vunpack.c.l.b16 %v1654
    %v3964 = vunpack.c.l.b16 %v1655
    %v3965 = vunpack.c.l.b16 %v1656
    %v3966 = vunpack.c.l.b16 %v1657
    %v3967 = vunpack.c.l.b16 %v1658
    %v3968 = vunpack.c.l.b16 %v1659
    %v3969 = vunpack.c.l.b16 %v1660
    %v3970 = vunpack.c.l.b16 %v1661
    %v3971 = vunpack.c.l.b16 %v1662
    %v3972 = vunpack.c.l.b16 %v1663
    %v3973 = vunpack.c.l.b16 %v1664
    %v3974 = vunpack.c.l.b16 %v1665
    %v3975 = vunpack.c.l.b16 %v1666
    %v3976 = vunpack.c.l.b16 %v1667
    %v3977 = vunpack.c.l.b16 %v1668
    %v3978 = vunpack.c.l.b16 %v1669
    %v3979 = vunpack.c.l.b16 %v1670
    %v3980 = vunpack.c.l.b16 %v1671
    %v3981 = vunpack.c.l.b16 %v1672
    %v3982 = vunpack.c.l.b16 %v1673
    %v3983 = vunpack.c.l.b16 %v1674
    %v3984 = vunpack.c.l.b16 %v1675
    %v3985 = vunpack.c.l.b16 %v1676
    %v3986 = vunpack.c.l.b16 %v1677
    %v3987 = vunpack.c.l.b16 %v1678
    %v3988 = vunpack.c.l.b16 %v1679
    %v3989 = vunpack.c.l.b16 %v1680
    %v3990 = vunpack.c.l.b16 %v1681
    %v3991 = vunpack.c.l.b16 %v1682
    %v3992 = vunpack.c.l.b16 %v1683
    %v3993 = vunpack.c.l.b16 %v1684
    %v3994 = vunpack.c.l.b16 %v1685
    %v3995 = vunpack.c.l.b16 %v1686
    %v3996 = vunpack.c.l.b16 %v1687
    %v3997 = vunpack.c.l.b16 %v1688
    %v3998 = vunpack.c.l.b16 %v1689
    %v3999 = vunpack.c.l.b16 %v1690
    %v4000 = vunpack.c.l.b16 %v1691
    %v4001 = vunpack.c.l.b16 %v1692
    %v4002 = vunpack.c.l.b16 %v1693
    %v4003 = vunpack.c.l.b16 %v1694
    %v4004 = vunpack.c.l.b16 %v1695
    %v4005 = vpack.c.b16 %v2854, %v2853
    %v4006 = vpack.c.b16 %v2856, %v2855
    %v4007 = vpack.c.b16 %v2858, %v2857
    %v4008 = vpack.c.b16 %v2860, %v2859
    %v4009 = vpack.c.b16 %v2862, %v2861
    %v4010 = vpack.c.b16 %v2864, %v2863
    %v4011 = vpack.c.b16 %v2866, %v2865
    %v4012 = vpack.c.b16 %v2868, %v2867
    %v4013 = vpack.c.b16 %v2870, %v2869
    %v4014 = vpack.c.b16 %v2872, %v2871
    %v4015 = vpack.c.b16 %v2874, %v2873
    %v4016 = vpack.c.b16 %v2876, %v2875
    %v4017 = vpack.c.b16 %v2878, %v2877
    %v4018 = vpack.c.b16 %v2880, %v2879
    %v4019 = vpack.c.b16 %v2882, %v2881
    %v4020 = vpack.c.b16 %v2884, %v2883
    %v4021 = vpack.c.b16 %v2886, %v2885
    %v4022 = vpack.c.b16 %v2888, %v2887
    %v4023 = vpack.c.b16 %v2890, %v2889
    %v4024 = vpack.c.b16 %v2892, %v2891
    %v4025 = vpack.c.b16 %v2894, %v2893
    %v4026 = vpack.c.b16 %v2896, %v2895
    %v4027 = vpack.c.b16 %v2898, %v2897
    %v4028 = vpack.c.b16 %v2900, %v2899
    %v4029 = vpack.c.b16 %v2902, %v2901
    %v4030 = vpack.c.b16 %v2904, %v2903
    %v4031 = vpack.c.b16 %v2906, %v2905
    %v4032 = vpack.c.b16 %v2908, %v2907
    %v4033 = vpack.c.b16 %v2910, %v2909
    %v4034 = vpack.c.b16 %v2912, %v2911
    %v4035 = vpack.c.b16 %v2914, %v2913
    %v4036 = vpack.c.b16 %v2916, %v2915
    %v4037 = vpack.c.b16 %v2918, %v2917
    %v4038 = vpack.c.b16 %v2920, %v2919
    %v4039 = vpack.c.b16 %v2922, %v2921
    %v4040 = vpack.c.b16 %v2924, %v2923
    %v4041 = vpack.c.b16 %v2926, %v2925
    %v4042 = vpack.c.b16 %v2928, %v2927
    %v4043 = vpack.c.b16 %v2930, %v2929
    %v4044 = vpack.c.b16 %v2932, %v2931
    %v4045 = vpack.c.b16 %v2934, %v2933
    %v4046 = vpack.c.b16 %v2936, %v2935
    %v4047 = vpack.c.b16 %v2938, %v2937
    %v4048 = vpack.c.b16 %v2940, %v2939
    %v4049 = vpack.c.b16 %v2942, %v2941
    %v4050 = vpack.c.b16 %v2944, %v2943
    %v4051 = vpack.c.b16 %v2946, %v2945
    %v4052 = vpack.c.b16 %v2948, %v2947
    %v4053 = vpack.c.b16 %v2950, %v2949
    %v4054 = vpack.c.b16 %v2952, %v2951
    %v4055 = vpack.c.b16 %v2954, %v2953
    %v4056 = vpack.c.b16 %v2956, %v2955
    %v4057 = vpack.c.b16 %v2958, %v2957
    %v4058 = vpack.c.b16 %v2960, %v2959
    %v4059 = vpack.c.b16 %v2962, %v2961
    %v4060 = vpack.c.b16 %v2964, %v2963
    %v4061 = vpack.c.b16 %v2966, %v2965
    %v4062 = vpack.c.b16 %v2968, %v2967
    %v4063 = vpack.c.b16 %v2970, %v2969
    %v4064 = vpack.c.b16 %v2972, %v2971
    %v4065 = vpack.c.b16 %v2974, %v2973
    %v4066 = vpack.c.b16 %v2976, %v2975
    %v4067 = vpack.c.b16 %v2978, %v2977
    %v4068 = vpack.c.b16 %v2980, %v2979
    %v4069 = vpack.c.b16 %v2982, %v2981
    %v4070 = vpack.c.b16 %v2984, %v2983
    %v4071 = vpack.c.b16 %v2986, %v2985
    %v4072 = vpack.c.b16 %v2988, %v2987
    %v4073 = vpack.c.b16 %v2990, %v2989
    %v4074 = vpack.c.b16 %v2992, %v2991
    %v4075 = vpack.c.b16 %v2994, %v2993
    %v4076 = vpack.c.b16 %v2996, %v2995
    %v4077 = vpack.c.b16 %v2998, %v2997
    %v4078 = vpack.c.b16 %v3000, %v2999
    %v4079 = vpack.c.b16 %v3002, %v3001
    %v4080 = vpack.c.b16 %v3004, %v3003
    %v4081 = vpack.c.b16 %v3006, %v3005
    %v4082 = vpack.c.b16 %v3008, %v3007
    %v4083 = vpack.c.b16 %v3010, %v3009
    %v4084 = vpack.c.b16 %v3012, %v3011
    %v4085 = vpack.c.b16 %v3014, %v3013
    %v4086 = vpack.c.b16 %v3016, %v3015
    %v4087 = vpack.c.b16 %v3018, %v3017
    %v4088 = vpack.c.b16 %v3020, %v3019
    %v4089 = vpack.c.b16 %v3022, %v3021
    %v4090 = vpack.c.b16 %v3024, %v3023
    %v4091 = vpack.c.b16 %v3026, %v3025
    %v4092 = vpack.c.b16 %v3028, %v3027
    %v4093 = vpack.c.b16 %v3030, %v3029
    %v4094 = vpack.c.b16 %v3032, %v3031
    %v4095 = vpack.c.b16 %v3034, %v3033
    %v4096 = vpack.c.b16 %v3036, %v3035
    %v4097 = vpack.c.b16 %v3038, %v3037
    %v4098 = vpack.c.b16 %v3040, %v3039
    %v4099 = vpack.c.b16 %v3042, %v3041
    %v4100 = vpack.c.b16 %v3044, %v3043
    %v4101 = vpack.c.b16 %v3046, %v3045
    %v4102 = vpack.c.b16 %v3048, %v3047
    %v4103 = vpack.c.b16 %v3050, %v3049
    %v4104 = vpack.c.b16 %v3052, %v3051
    %v4105 = vpack.c.b16 %v3054, %v3053
    %v4106 = vpack.c.b16 %v3056, %v3055
    %v4107 = vpack.c.b16 %v3058, %v3057
    %v4108 = vpack.c.b16 %v3060, %v3059
    %v4109 = vpack.c.b16 %v3062, %v3061
    %v4110 = vpack.c.b16 %v3064, %v3063
    %v4111 = vpack.c.b16 %v3066, %v3065
    %v4112 = vpack.c.b16 %v3068, %v3067
    %v4113 = vpack.c.b16 %v3070, %v3069
    %v4114 = vpack.c.b16 %v3072, %v3071
    %v4115 = vpack.c.b16 %v3074, %v3073
    %v4116 = vpack.c.b16 %v3076, %v3075
    %v4117 = vpack.c.b16 %v3078, %v3077
    %v4118 = vpack.c.b16 %v3080, %v3079
    %v4119 = vpack.c.b16 %v3082, %v3081
    %v4120 = vpack.c.b16 %v3084, %v3083
    %v4121 = vpack.c.b16 %v3086, %v3085
    %v4122 = vpack.c.b16 %v3088, %v3087
    %v4123 = vpack.c.b16 %v3090, %v3089
    %v4124 = vpack.c.b16 %v3092, %v3091
    %v4125 = vpack.c.b16 %v3094, %v3093
    %v4126 = vpack.c.b16 %v3096, %v3095
    %v4127 = vpack.c.b16 %v3098, %v3097
    %v4128 = vpack.c.b16 %v3100, %v3099
    %v4129 = vpack.c.b16 %v3102, %v3101
    %v4130 = vpack.c.b16 %v3104, %v3103
    %v4131 = vpack.c.b16 %v3106, %v3105
    %v4132 = vpack.c.b16 %v3108, %v3107
    %v4133 = vpack.c.b16 %v3110, %v3109
    %v4134 = vpack.c.b16 %v3112, %v3111
    %v4135 = vpack.c.b16 %v3114, %v3113
    %v4136 = vpack.c.b16 %v3116, %v3115
    %v4137 = vpack.c.b16 %v3118, %v3117
    %v4138 = vpack.c.b16 %v3120, %v3119
    %v4139 = vpack.c.b16 %v3122, %v3121
    %v4140 = vpack.c.b16 %v3124, %v3123
    %v4141 = vpack.c.b16 %v3126, %v3125
    %v4142 = vpack.c.b16 %v3128, %v3127
    %v4143 = vpack.c.b16 %v3130, %v3129
    %v4144 = vpack.c.b16 %v3132, %v3131
    %v4145 = vpack.c.b16 %v3134, %v3133
    %v4146 = vpack.c.b16 %v3136, %v3135
    %v4147 = vpack.c.b16 %v3138, %v3137
    %v4148 = vpack.c.b16 %v3140, %v3139
    %v4149 = vpack.c.b16 %v3142, %v3141
    %v4150 = vpack.c.b16 %v3144, %v3143
    %v4151 = vpack.c.b16 %v3146, %v3145
    %v4152 = vpack.c.b16 %v3148, %v3147
    %v4153 = vpack.c.b16 %v3150, %v3149
    %v4154 = vpack.c.b16 %v3152, %v3151
    %v4155 = vpack.c.b16 %v3154, %v3153
    %v4156 = vpack.c.b16 %v3156, %v3155
    %v4157 = vpack.c.b16 %v3158, %v3157
    %v4158 = vpack.c.b16 %v3160, %v3159
    %v4159 = vpack.c.b16 %v3162, %v3161
    %v4160 = vpack.c.b16 %v3164, %v3163
    %v4161 = vpack.c.b16 %v3166, %v3165
    %v4162 = vpack.c.b16 %v3168, %v3167
    %v4163 = vpack.c.b16 %v3170, %v3169
    %v4164 = vpack.c.b16 %v3172, %v3171
    %v4165 = vpack.c.b16 %v3174, %v3173
    %v4166 = vpack.c.b16 %v3176, %v3175
    %v4167 = vpack.c.b16 %v3178, %v3177
    %v4168 = vpack.c.b16 %v3180, %v3179
    %v4169 = vpack.c.b16 %v3182, %v3181
    %v4170 = vpack.c.b16 %v3184, %v3183
    %v4171 = vpack.c.b16 %v3186, %v3185
    %v4172 = vpack.c.b16 %v3188, %v3187
    %v4173 = vpack.c.b16 %v3190, %v3189
    %v4174 = vpack.c.b16 %v3192, %v3191
    %v4175 = vpack.c.b16 %v3194, %v3193
    %v4176 = vpack.c.b16 %v3196, %v3195
    %v4177 = vpack.c.b16 %v3198, %v3197
    %v4178 = vpack.c.b16 %v3200, %v3199
    %v4179 = vpack.c.b16 %v3202, %v3201
    %v4180 = vpack.c.b16 %v3204, %v3203
    %v4181 = vpack.c.b16 %v3206, %v3205
    %v4182 = vpack.c.b16 %v3208, %v3207
    %v4183 = vpack.c.b16 %v3210, %v3209
    %v4184 = vpack.c.b16 %v3212, %v3211
    %v4185 = vpack.c.b16 %v3214, %v3213
    %v4186 = vpack.c.b16 %v3216, %v3215
    %v4187 = vpack.c.b16 %v3218, %v3217
    %v4188 = vpack.c.b16 %v3220, %v3219
    %v4189 = vpack.c.b16 %v3222, %v3221
    %v4190 = vpack.c.b16 %v3224, %v3223
    %v4191 = vpack.c.b16 %v3226, %v3225
    %v4192 = vpack.c.b16 %v3228, %v3227
    %v4193 = vpack.c.b16 %v3230, %v3229
    %v4194 = vpack.c.b16 %v3232, %v3231
    %v4195 = vpack.c.b16 %v3234, %v3233
    %v4196 = vpack.c.b16 %v3236, %v3235
    %v4197 = vpack.c.b16 %v3238, %v3237
    %v4198 = vpack.c.b16 %v3240, %v3239
    %v4199 = vpack.c.b16 %v3242, %v3241
    %v4200 = vpack.c.b16 %v3244, %v3243
    %v4201 = vpack.c.b16 %v3246, %v3245
    %v4202 = vpack.c.b16 %v3248, %v3247
    %v4203 = vpack.c.b16 %v3250, %v3249
    %v4204 = vpack.c.b16 %v3252, %v3251
    %v4205 = vpack.c.b16 %v3254, %v3253
    %v4206 = vpack.c.b16 %v3256, %v3255
    %v4207 = vpack.c.b16 %v3258, %v3257
    %v4208 = vpack.c.b16 %v3260, %v3259
    %v4209 = vpack.c.b16 %v3262, %v3261
    %v4210 = vpack.c.b16 %v3264, %v3263
    %v4211 = vpack.c.b16 %v3266, %v3265
    %v4212 = vpack.c.b16 %v3268, %v3267
    %v4213 = vpack.c.b16 %v3270, %v3269
    %v4214 = vpack.c.b16 %v3272, %v3271
    %v4215 = vpack.c.b16 %v3274, %v3273
    %v4216 = vpack.c.b16 %v3276, %v3275
    %v4217 = vpack.c.b16 %v3278, %v3277
    %v4218 = vpack.c.b16 %v3280, %v3279
    %v4219 = vpack.c.b16 %v3282, %v3281
    %v4220 = vpack.c.b16 %v3284, %v3283
    %v4221 = vpack.c.b16 %v3286, %v3285
    %v4222 = vpack.c.b16 %v3288, %v3287
    %v4223 = vpack.c.b16 %v3290, %v3289
    %v4224 = vpack.c.b16 %v3292, %v3291
    %v4225 = vpack.c.b16 %v3294, %v3293
    %v4226 = vpack.c.b16 %v3296, %v3295
    %v4227 = vpack.c.b16 %v3298, %v3297
    %v4228 = vpack.c.b16 %v3300, %v3299
    %v4229 = vpack.c.b16 %v3302, %v3301
    %v4230 = vpack.c.b16 %v3304, %v3303
    %v4231 = vpack.c.b16 %v3306, %v3305
    %v4232 = vpack.c.b16 %v3308, %v3307
    %v4233 = vpack.c.b16 %v3310, %v3309
    %v4234 = vpack.c.b16 %v3312, %v3311
    %v4235 = vpack.c.b16 %v3314, %v3313
    %v4236 = vpack.c.b16 %v3316, %v3315
    %v4237 = vpack.c.b16 %v3318, %v3317
    %v4238 = vpack.c.b16 %v3320, %v3319
    %v4239 = vpack.c.b16 %v3322, %v3321
    %v4240 = vpack.c.b16 %v3324, %v3323
    %v4241 = vpack.c.b16 %v3326, %v3325
    %v4242 = vpack.c.b16 %v3328, %v3327
    %v4243 = vpack.c.b16 %v3330, %v3329
    %v4244 = vpack.c.b16 %v3332, %v3331
    %v4245 = vpack.c.b16 %v3334, %v3333
    %v4246 = vpack.c.b16 %v3336, %v3335
    %v4247 = vpack.c.b16 %v3338, %v3337
    %v4248 = vpack.c.b16 %v3340, %v3339
    %v4249 = vpack.c.b16 %v3342, %v3341
    %v4250 = vpack.c.b16 %v3344, %v3343
    %v4251 = vpack.c.b16 %v3346, %v3345
    %v4252 = vpack.c.b16 %v3348, %v3347
    %v4253 = vpack.c.b16 %v3350, %v3349
    %v4254 = vpack.c.b16 %v3352, %v3351
    %v4255 = vpack.c.b16 %v3354, %v3353
    %v4256 = vpack.c.b16 %v3356, %v3355
    %v4257 = vpack.c.b16 %v3358, %v3357
    %v4258 = vpack.c.b16 %v3360, %v3359
    %v4259 = vpack.c.b16 %v3362, %v3361
    %v4260 = vpack.c.b16 %v3364, %v3363
    %v4261 = vpack.c.b16 %v3366, %v3365
    %v4262 = vpack.c.b16 %v3368, %v3367
    %v4263 = vpack.c.b16 %v3370, %v3369
    %v4264 = vpack.c.b16 %v3372, %v3371
    %v4265 = vpack.c.b16 %v3374, %v3373
    %v4266 = vpack.c.b16 %v3376, %v3375
    %v4267 = vpack.c.b16 %v3378, %v3377
    %v4268 = vpack.c.b16 %v3380, %v3379
    %v4269 = vpack.c.b16 %v3382, %v3381
    %v4270 = vpack.c.b16 %v3384, %v3383
    %v4271 = vpack.c.b16 %v3386, %v3385
    %v4272 = vpack.c.b16 %v3388, %v3387
    %v4273 = vpack.c.b16 %v3390, %v3389
    %v4274 = vpack.c.b16 %v3392, %v3391
    %v4275 = vpack.c.b16 %v3394, %v3393
    %v4276 = vpack.c.b16 %v3396, %v3395
    %v4277 = vpack.c.b16 %v3398, %v3397
    %v4278 = vpack.c.b16 %v3400, %v3399
    %v4279 = vpack.c.b16 %v3402, %v3401
    %v4280 = vpack.c.b16 %v3404, %v3403
    %v4281 = vpack.c.b16 %v3406, %v3405
    %v4282 = vpack.c.b16 %v3408, %v3407
    %v4283 = vpack.c.b16 %v3410, %v3409
    %v4284 = vpack.c.b16 %v3412, %v3411
    %v4285 = vpack.c.b16 %v3414, %v3413
    %v4286 = vpack.c.b16 %v3416, %v3415
    %v4287 = vpack.c.b16 %v3418, %v3417
    %v4288 = vpack.c.b16 %v3420, %v3419
    %v4289 = vpack.c.b16 %v3422, %v3421
    %v4290 = vpack.c.b16 %v3424, %v3423
    %v4291 = vpack.c.b16 %v3426, %v3425
    %v4292 = vpack.c.b16 %v3428, %v3427
    %v4293 = vpack.c.b16 %v3430, %v3429
    %v4294 = vpack.c.b16 %v3432, %v3431
    %v4295 = vpack.c.b16 %v3434, %v3433
    %v4296 = vpack.c.b16 %v3436, %v3435
    %v4297 = vpack.c.b16 %v3438, %v3437
    %v4298 = vpack.c.b16 %v3440, %v3439
    %v4299 = vpack.c.b16 %v3442, %v3441
    %v4300 = vpack.c.b16 %v3444, %v3443
    %v4301 = vpack.c.b16 %v3446, %v3445
    %v4302 = vpack.c.b16 %v3448, %v3447
    %v4303 = vpack.c.b16 %v3450, %v3449
    %v4304 = vpack.c.b16 %v3452, %v3451
    %v4305 = vpack.c.b16 %v3454, %v3453
    %v4306 = vpack.c.b16 %v3456, %v3455
    %v4307 = vpack.c.b16 %v3458, %v3457
    %v4308 = vpack.c.b16 %v3460, %v3459
    %v4309 = vpack.c.b16 %v3462, %v3461
    %v4310 = vpack.c.b16 %v3464, %v3463
    %v4311 = vpack.c.b16 %v3466, %v3465
    %v4312 = vpack.c.b16 %v3468, %v3467
    %v4313 = vpack.c.b16 %v3470, %v3469
    %v4314 = vpack.c.b16 %v3472, %v3471
    %v4315 = vpack.c.b16 %v3474, %v3473
    %v4316 = vpack.c.b16 %v3476, %v3475
    %v4317 = vpack.c.b16 %v3478, %v3477
    %v4318 = vpack.c.b16 %v3480, %v3479
    %v4319 = vpack.c.b16 %v3482, %v3481
    %v4320 = vpack.c.b16 %v3484, %v3483
    %v4321 = vpack.c.b16 %v3486, %v3485
    %v4322 = vpack.c.b16 %v3488, %v3487
    %v4323 = vpack.c.b16 %v3490, %v3489
    %v4324 = vpack.c.b16 %v3492, %v3491
    %v4325 = vpack.c.b16 %v3494, %v3493
    %v4326 = vpack.c.b16 %v3496, %v3495
    %v4327 = vpack.c.b16 %v3498, %v3497
    %v4328 = vpack.c.b16 %v3500, %v3499
    %v4329 = vpack.c.b16 %v3502, %v3501
    %v4330 = vpack.c.b16 %v3504, %v3503
    %v4331 = vpack.c.b16 %v3506, %v3505
    %v4332 = vpack.c.b16 %v3508, %v3507
    %v4333 = vpack.c.b16 %v3510, %v3509
    %v4334 = vpack.c.b16 %v3512, %v3511
    %v4335 = vpack.c.b16 %v3514, %v3513
    %v4336 = vpack.c.b16 %v3516, %v3515
    %v4337 = vpack.c.b16 %v3518, %v3517
    %v4338 = vpack.c.b16 %v3520, %v3519
    %v4339 = vpack.c.b16 %v3522, %v3521
    %v4340 = vpack.c.b16 %v3524, %v3523
    %v4341 = vpack.c.b16 %v3526, %v3525
    %v4342 = vpack.c.b16 %v3528, %v3527
    %v4343 = vpack.c.b16 %v3530, %v3529
    %v4344 = vpack.c.b16 %v3532, %v3531
    %v4345 = vpack.c.b16 %v3534, %v3533
    %v4346 = vpack.c.b16 %v3536, %v3535
    %v4347 = vpack.c.b16 %v3538, %v3537
    %v4348 = vpack.c.b16 %v3540, %v3539
    %v4349 = vpack.c.b16 %v3542, %v3541
    %v4350 = vpack.c.b16 %v3544, %v3543
    %v4351 = vpack.c.b16 %v3546, %v3545
    %v4352 = vpack.c.b16 %v3548, %v3547
    %v4353 = vpack.c.b16 %v3550, %v3549
    %v4354 = vpack.c.b16 %v3552, %v3551
    %v4355 = vpack.c.b16 %v3554, %v3553
    %v4356 = vpack.c.b16 %v3556, %v3555
    %v4357 = vpack.c.b16 %v3558, %v3557
    %v4358 = vpack.c.b16 %v3560, %v3559
    %v4359 = vpack.c.b16 %v3562, %v3561
    %v4360 = vpack.c.b16 %v3564, %v3563
    %v4361 = vpack.c.b16 %v3566, %v3565
    %v4362 = vpack.c.b16 %v3568, %v3567
    %v4363 = vpack.c.b16 %v3570, %v3569
    %v4364 = vpack.c.b16 %v3572, %v3571
    %v4365 = vpack.c.b16 %v3574, %v3573
    %v4366 = vpack.c.b16 %v3576, %v3575
    %v4367 = vpack.c.b16 %v3578, %v3577
    %v4368 = vpack.c.b16 %v3580, %v3579
    %v4369 = vpack.c.b16 %v3582, %v3581
    %v4370 = vpack.c.b16 %v3584, %v3583
    %v4371 = vpack.c.b16 %v3586, %v3585
    %v4372 = vpack.c.b16 %v3588, %v3587
    %v4373 = vpack.c.b16 %v3590, %v3589
    %v4374 = vpack.c.b16 %v3592, %v3591
    %v4375 = vpack.c.b16 %v3594, %v3593
    %v4376 = vpack.c.b16 %v3596, %v3595
    %v4377 = vpack.c.b16 %v3598, %v3597
    %v4378 = vpack.c.b16 %v3600, %v3599
    %v4379 = vpack.c.b16 %v3602, %v3601
    %v4380 = vpack.c.b16 %v3604, %v3603
    %v4381 = vpack.c.b16 %v3606, %v3605
    %v4382 = vpack.c.b16 %v3608, %v3607
    %v4383 = vpack.c.b16 %v3610, %v3609
    %v4384 = vpack.c.b16 %v3612, %v3611
    %v4385 = vpack.c.b16 %v3614, %v3613
    %v4386 = vpack.c.b16 %v3616, %v3615
    %v4387 = vpack.c.b16 %v3618, %v3617
    %v4388 = vpack.c.b16 %v3620, %v3619
    %v4389 = vpack.c.b16 %v3622, %v3621
    %v4390 = vpack.c.b16 %v3624, %v3623
    %v4391 = vpack.c.b16 %v3626, %v3625
    %v4392 = vpack.c.b16 %v3628, %v3627
    %v4393 = vpack.c.b16 %v3630, %v3629
    %v4394 = vpack.c.b16 %v3632, %v3631
    %v4395 = vpack.c.b16 %v3634, %v3633
    %v4396 = vpack.c.b16 %v3636, %v3635
    %v4397 = vpack.c.b16 %v3638, %v3637
    %v4398 = vpack.c.b16 %v3640, %v3639
    %v4399 = vpack.c.b16 %v3642, %v3641
    %v4400 = vpack.c.b16 %v3644, %v3643
    %v4401 = vpack.c.b16 %v3646, %v3645
    %v4402 = vpack.c.b16 %v3648, %v3647
    %v4403 = vpack.c.b16 %v3650, %v3649
    %v4404 = vpack.c.b16 %v3652, %v3651
    %v4405 = vpack.c.b16 %v3654, %v3653
    %v4406 = vpack.c.b16 %v3656, %v3655
    %v4407 = vpack.c.b16 %v3658, %v3657
    %v4408 = vpack.c.b16 %v3660, %v3659
    %v4409 = vpack.c.b16 %v3662, %v3661
    %v4410 = vpack.c.b16 %v3664, %v3663
    %v4411 = vpack.c.b16 %v3666, %v3665
    %v4412 = vpack.c.b16 %v3668, %v3667
    %v4413 = vpack.c.b16 %v3670, %v3669
    %v4414 = vpack.c.b16 %v3672, %v3671
    %v4415 = vpack.c.b16 %v3674, %v3673
    %v4416 = vpack.c.b16 %v3676, %v3675
    %v4417 = vpack.c.b16 %v3678, %v3677
    %v4418 = vpack.c.b16 %v3680, %v3679
    %v4419 = vpack.c.b16 %v3682, %v3681
    %v4420 = vpack.c.b16 %v3684, %v3683
    %v4421 = vpack.c.b16 %v3686, %v3685
    %v4422 = vpack.c.b16 %v3688, %v3687
    %v4423 = vpack.c.b16 %v3690, %v3689
    %v4424 = vpack.c.b16 %v3692, %v3691
    %v4425 = vpack.c.b16 %v3694, %v3693
    %v4426 = vpack.c.b16 %v3696, %v3695
    %v4427 = vpack.c.b16 %v3698, %v3697
    %v4428 = vpack.c.b16 %v3700, %v3699
    %v4429 = vpack.c.b16 %v3702, %v3701
    %v4430 = vpack.c.b16 %v3704, %v3703
    %v4431 = vpack.c.b16 %v3706, %v3705
    %v4432 = vpack.c.b16 %v3708, %v3707
    %v4433 = vpack.c.b16 %v3710, %v3709
    %v4434 = vpack.c.b16 %v3712, %v3711
    %v4435 = vpack.c.b16 %v3714, %v3713
    %v4436 = vpack.c.b16 %v3716, %v3715
    %v4437 = vpack.c.b16 %v3718, %v3717
    %v4438 = vpack.c.b16 %v3720, %v3719
    %v4439 = vpack.c.b16 %v3722, %v3721
    %v4440 = vpack.c.b16 %v3724, %v3723
    %v4441 = vpack.c.b16 %v3726, %v3725
    %v4442 = vpack.c.b16 %v3728, %v3727
    %v4443 = vpack.c.b16 %v3730, %v3729
    %v4444 = vpack.c.b16 %v3732, %v3731
    %v4445 = vpack.c.b16 %v3734, %v3733
    %v4446 = vpack.c.b16 %v3736, %v3735
    %v4447 = vpack.c.b16 %v3738, %v3737
    %v4448 = vpack.c.b16 %v3740, %v3739
    %v4449 = vpack.c.b16 %v3742, %v3741
    %v4450 = vpack.c.b16 %v3744, %v3743
    %v4451 = vpack.c.b16 %v3746, %v3745
    %v4452 = vpack.c.b16 %v3748, %v3747
    %v4453 = vpack.c.b16 %v3750, %v3749
    %v4454 = vpack.c.b16 %v3752, %v3751
    %v4455 = vpack.c.b16 %v3754, %v3753
    %v4456 = vpack.c.b16 %v3756, %v3755
    %v4457 = vpack.c.b16 %v3758, %v3757
    %v4458 = vpack.c.b16 %v3760, %v3759
    %v4459 = vpack.c.b16 %v3762, %v3761
    %v4460 = vpack.c.b16 %v3764, %v3763
    %v4461 = vpack.c.b16 %v3766, %v3765
    %v4462 = vpack.c.b16 %v3768, %v3767
    %v4463 = vpack.c.b16 %v3770, %v3769
    %v4464 = vpack.c.b16 %v3772, %v3771
    %v4465 = vpack.c.b16 %v3774, %v3773
    %v4466 = vpack.c.b16 %v3776, %v3775
    %v4467 = vpack.c.b16 %v3778, %v3777
    %v4468 = vpack.c.b16 %v3780, %v3779
    %v4469 = vpack.c.b16 %v3782, %v3781
    %v4470 = vpack.c.b16 %v3784, %v3783
    %v4471 = vpack.c.b16 %v3786, %v3785
    %v4472 = vpack.c.b16 %v3788, %v3787
    %v4473 = vpack.c.b16 %v3790, %v3789
    %v4474 = vpack.c.b16 %v3792, %v3791
    %v4475 = vpack.c.b16 %v3794, %v3793
    %v4476 = vpack.c.b16 %v3796, %v3795
    %v4477 = vpack.c.b16 %v3798, %v3797
    %v4478 = vpack.c.b16 %v3800, %v3799
    %v4479 = vpack.c.b16 %v3802, %v3801
    %v4480 = vpack.c.b16 %v3804, %v3803
    %v4481 = vpack.c.b16 %v3806, %v3805
    %v4482 = vpack.c.b16 %v3808, %v3807
    %v4483 = vpack.c.b16 %v3810, %v3809
    %v4484 = vpack.c.b16 %v3812, %v3811
    %v4485 = vpack.c.b16 %v3814, %v3813
    %v4486 = vpack.c.b16 %v3816, %v3815
    %v4487 = vpack.c.b16 %v3818, %v3817
    %v4488 = vpack.c.b16 %v3820, %v3819
    %v4489 = vpack.c.b16 %v3822, %v3821
    %v4490 = vpack.c.b16 %v3824, %v3823
    %v4491 = vpack.c.b16 %v3826, %v3825
    %v4492 = vpack.c.b16 %v3828, %v3827
    %v4493 = vpack.c.b16 %v3830, %v3829
    %v4494 = vpack.c.b16 %v3832, %v3831
    %v4495 = vpack.c.b16 %v3834, %v3833
    %v4496 = vpack.c.b16 %v3836, %v3835
    %v4497 = vpack.c.b16 %v3838, %v3837
    %v4498 = vpack.c.b16 %v3840, %v3839
    %v4499 = vpack.c.b16 %v3842, %v3841
    %v4500 = vpack.c.b16 %v3844, %v3843
    %v4501 = vpack.c.b16 %v3846, %v3845
    %v4502 = vpack.c.b16 %v3848, %v3847
    %v4503 = vpack.c.b16 %v3850, %v3849
    %v4504 = vpack.c.b16 %v3852, %v3851
    %v4505 = vpack.c.b16 %v3854, %v3853
    %v4506 = vpack.c.b16 %v3856, %v3855
    %v4507 = vpack.c.b16 %v3858, %v3857
    %v4508 = vpack.c.b16 %v3860, %v3859
    %v4509 = vpack.c.b16 %v3862, %v3861
    %v4510 = vpack.c.b16 %v3864, %v3863
    %v4511 = vpack.c.b16 %v3866, %v3865
    %v4512 = vpack.c.b16 %v3868, %v3867
    %v4513 = vpack.c.b16 %v3870, %v3869
    %v4514 = vpack.c.b16 %v3872, %v3871
    %v4515 = vpack.c.b16 %v3874, %v3873
    %v4516 = vpack.c.b16 %v3876, %v3875
    %v4517 = vpack.c.b16 %v3878, %v3877
    %v4518 = vpack.c.b16 %v3880, %v3879
    %v4519 = vpack.c.b16 %v3882, %v3881
    %v4520 = vpack.c.b16 %v3884, %v3883
    %v4521 = vpack.c.b16 %v3886, %v3885
    %v4522 = vpack.c.b16 %v3888, %v3887
    %v4523 = vpack.c.b16 %v3890, %v3889
    %v4524 = vpack.c.b16 %v3892, %v3891
    %v4525 = vpack.c.b16 %v3894, %v3893
    %v4526 = vpack.c.b16 %v3896, %v3895
    %v4527 = vpack.c.b16 %v3898, %v3897
    %v4528 = vpack.c.b16 %v3900, %v3899
    %v4529 = vpack.c.b16 %v3902, %v3901
    %v4530 = vpack.c.b16 %v3904, %v3903
    %v4531 = vpack.c.b16 %v3906, %v3905
    %v4532 = vpack.c.b16 %v3908, %v3907
    %v4533 = vpack.c.b16 %v3910, %v3909
    %v4534 = vpack.c.b16 %v3912, %v3911
    %v4535 = vpack.c.b16 %v3914, %v3913
    %v4536 = vpack.c.b16 %v3916, %v3915
    %v4537 = vpack.c.b16 %v3918, %v3917
    %v4538 = vpack.c.b16 %v3920, %v3919
    %v4539 = vpack.c.b16 %v3922, %v3921
    %v4540 = vpack.c.b16 %v3924, %v3923
    %v4541 = vpack.c.b16 %v3926, %v3925
    %v4542 = vpack.c.b16 %v3928, %v3927
    %v4543 = vpack.c.b16 %v3930, %v3929
    %v4544 = vpack.c.b16 %v3932, %v3931
    %v4545 = vpack.c.b16 %v3934, %v3933
    %v4546 = vpack.c.b16 %v3936, %v3935
    %v4547 = vpack.c.b16 %v3938, %v3937
    %v4548 = vpack.c.b16 %v3940, %v3939
    %v4549 = vpack.c.b16 %v3942, %v3941
    %v4550 = vpack.c.b16 %v3944, %v3943
    %v4551 = vpack.c.b16 %v3946, %v3945
    %v4552 = vpack.c.b16 %v3948, %v3947
    %v4553 = vpack.c.b16 %v3950, %v3949
    %v4554 = vpack.c.b16 %v3952, %v3951
    %v4555 = vpack.c.b16 %v3954, %v3953
    %v4556 = vpack.c.b16 %v3956, %v3955
    %v4557 = vpack.c.b16 %v3958, %v3957
    %v4558 = vpack.c.b16 %v3960, %v3959
    %v4559 = vpack.c.b16 %v3962, %v3961
    %v4560 = vpack.c.b16 %v3964, %v3963
    %v4561 = vpack.c.b16 %v3966, %v3965
    %v4562 = vpack.c.b16 %v3968, %v3967
    %v4563 = vpack.c.b16 %v3970, %v3969
    %v4564 = vpack.c.b16 %v3972, %v3971
    %v4565 = vpack.c.b16 %v3974, %v3973
    %v4566 = vpack.c.b16 %v3976, %v3975
    %v4567 = vpack.c.b16 %v3978, %v3977
    %v4568 = vpack.c.b16 %v3980, %v3979
    %v4569 = vpack.c.b16 %v3982, %v3981
    %v4570 = vpack.c.b16 %v3984, %v3983
    %v4571 = vpack.c.b16 %v3986, %v3985
    %v4572 = vpack.c.b16 %v3988, %v3987
    %v4573 = vpack.c.b16 %v3990, %v3989
    %v4574 = vpack.c.b16 %v3992, %v3991
    %v4575 = vpack.c.b16 %v3994, %v3993
    %v4576 = vpack.c.b16 %v3996, %v3995
    %v4577 = vpack.c.b16 %v3998, %v3997
    %v4578 = vpack.c.b16 %v4000, %v3999
    %v4579 = vpack.c.b16 %v4002, %v4001
    %v4580 = vpack.c.b16 %v4004, %v4003
    %5157 = vmatprep.subr.bf16.mxu0 0
    %5158 = vmatpush1.bf16.msra.mxu0 %v4012
    %5159 = vmatprep.subr.bf16.mxu0 0
    %5160 = vmatpush1.bf16.msra.mxu0 %v4011
    %5161 = vmatprep.subr.bf16.mxu0 0
    %5162 = vmatpush1.bf16.msra.mxu0 %v4010
    %5163 = vmatprep.subr.bf16.mxu0 0
    %5164 = vmatpush1.bf16.msra.mxu0 %v4009
    %5165 = vmatprep.subr.bf16.mxu0 0
    %5166 = vmatpush1.bf16.msra.mxu0 %v4008
    %5167 = vmatprep.subr.bf16.mxu0 0
    %5168 = vmatpush1.bf16.msra.mxu0 %v4007
    %5169 = vmatprep.subr.bf16.mxu0 0
    %5170 = vmatpush1.bf16.msra.mxu0 %v4006
    %5171 = vmatprep.subr.bf16.mxu0 0
    %5172 = vmatpush1.bf16.msra.mxu0 %v4005
    %5173 = vmatprep.subr.bf16.mxu0 0
    %5174 = vmatpush2.bf16.msra.mxu0 %v4020
    %5175 = vmatprep.subr.bf16.mxu0 0
    %5176 = vmatpush2.bf16.msra.mxu0 %v4019
    %5177 = vmatprep.subr.bf16.mxu0 0
    %5178 = vmatpush2.bf16.msra.mxu0 %v4018
    %5179 = vmatprep.subr.bf16.mxu0 0
    %5180 = vmatpush2.bf16.msra.mxu0 %v4017
    %5181 = vmatprep.subr.bf16.mxu0 0
    %5182 = vmatpush2.bf16.msra.mxu0 %v4016
    %5183 = vmatprep.subr.bf16.mxu0 0
    %5184 = vmatpush2.bf16.msra.mxu0 %v4015
    %5185 = vmatprep.subr.bf16.mxu0 0
    %5186 = vmatpush2.bf16.msra.mxu0 %v4014
    %5187 = vmatprep.subr.bf16.mxu0 0
    %5188 = vmatpush2.bf16.msra.mxu0 %v4013
    %5189 = vmatprep.mubr.bf16.mxu0 %v473
    %5190 = vmatmul.mubr.bf16.gmra.mxu0 %v472
    %v5191 = vpop.f32.mrf.mxu0
    %v5192 = vadd.f32 %v1700, %v5191
    %v5193 = vpop.f32.mrf.mxu0
    %v5194 = vpop.f32.mrf.mxu0
    %v5195 = vpop.f32.mrf.mxu0
    %5196 = vdwg.mxu0
    %5197 = vmatprep.subr.bf16.mxu0 0
    %5198 = vmatpush1.bf16.msra.mxu0 %v4028
    %5199 = vmatprep.subr.bf16.mxu0 0
    %5200 = vmatpush1.bf16.msra.mxu0 %v4027
    %5201 = vmatprep.subr.bf16.mxu0 0
    %5202 = vmatpush1.bf16.msra.mxu0 %v4026
    %5203 = vmatprep.subr.bf16.mxu0 0
    %5204 = vmatpush1.bf16.msra.mxu0 %v4025
    %5205 = vmatprep.subr.bf16.mxu0 0
    %5206 = vmatpush1.bf16.msra.mxu0 %v4024
    %5207 = vmatprep.subr.bf16.mxu0 0
    %5208 = vmatpush1.bf16.msra.mxu0 %v4023
    %5209 = vmatprep.subr.bf16.mxu0 0
    %5210 = vmatpush1.bf16.msra.mxu0 %v4022
    %5211 = vmatprep.subr.bf16.mxu0 0
    %5212 = vmatpush1.bf16.msra.mxu0 %v4021
    %5213 = vmatprep.subr.bf16.mxu0 0
    %5214 = vmatpush2.bf16.msra.mxu0 %v4036
    %5215 = vmatprep.subr.bf16.mxu0 0
    %5216 = vmatpush2.bf16.msra.mxu0 %v4035
    %5217 = vmatprep.subr.bf16.mxu0 0
    %5218 = vmatpush2.bf16.msra.mxu0 %v4034
    %5219 = vmatprep.subr.bf16.mxu0 0
    %5220 = vmatpush2.bf16.msra.mxu0 %v4033
    %5221 = vmatprep.subr.bf16.mxu0 0
    %5222 = vmatpush2.bf16.msra.mxu0 %v4032
    %5223 = vmatprep.subr.bf16.mxu0 0
    %5224 = vmatpush2.bf16.msra.mxu0 %v4031
    %5225 = vmatprep.subr.bf16.mxu0 0
    %5226 = vmatpush2.bf16.msra.mxu0 %v4030
    %5227 = vmatprep.subr.bf16.mxu0 0
    %5228 = vmatpush2.bf16.msra.mxu0 %v4029
    %5229 = vmatprep.mubr.bf16.mxu0 %v475
    %5230 = vmatmul.mubr.bf16.gmra.mxu0 %v474
    %v5231 = vpop.f32.mrf.mxu0
    %v5232 = vadd.f32 %v5192, %v5231
    %v5233 = vpop.f32.mrf.mxu0
    %v5234 = vpop.f32.mrf.mxu0
    %v5235 = vpop.f32.mrf.mxu0
    %5236 = vdwg.mxu0
    %5237 = vmatprep.subr.bf16.mxu0 0
    %5238 = vmatpush1.bf16.msra.mxu0 %v4044
    %5239 = vmatprep.subr.bf16.mxu0 0
    %5240 = vmatpush1.bf16.msra.mxu0 %v4043
    %5241 = vmatprep.subr.bf16.mxu0 0
    %5242 = vmatpush1.bf16.msra.mxu0 %v4042
    %5243 = vmatprep.subr.bf16.mxu0 0
    %5244 = vmatpush1.bf16.msra.mxu0 %v4041
    %5245 = vmatprep.subr.bf16.mxu0 0
    %5246 = vmatpush1.bf16.msra.mxu0 %v4040
    %5247 = vmatprep.subr.bf16.mxu0 0
    %5248 = vmatpush1.bf16.msra.mxu0 %v4039
    %5249 = vmatprep.subr.bf16.mxu0 0
    %5250 = vmatpush1.bf16.msra.mxu0 %v4038
    %5251 = vmatprep.subr.bf16.mxu0 0
    %5252 = vmatpush1.bf16.msra.mxu0 %v4037
    %5253 = vmatprep.subr.bf16.mxu0 0
    %5254 = vmatpush2.bf16.msra.mxu0 %v4052
    %5255 = vmatprep.subr.bf16.mxu0 0
    %5256 = vmatpush2.bf16.msra.mxu0 %v4051
    %5257 = vmatprep.subr.bf16.mxu0 0
    %5258 = vmatpush2.bf16.msra.mxu0 %v4050
    %5259 = vmatprep.subr.bf16.mxu0 0
    %5260 = vmatpush2.bf16.msra.mxu0 %v4049
    %5261 = vmatprep.subr.bf16.mxu0 0
    %5262 = vmatpush2.bf16.msra.mxu0 %v4048
    %5263 = vmatprep.subr.bf16.mxu0 0
    %5264 = vmatpush2.bf16.msra.mxu0 %v4047
    %5265 = vmatprep.subr.bf16.mxu0 0
    %5266 = vmatpush2.bf16.msra.mxu0 %v4046
    %5267 = vmatprep.subr.bf16.mxu0 0
    %5268 = vmatpush2.bf16.msra.mxu0 %v4045
    %5269 = vmatprep.mubr.bf16.mxu0 %v477
    %5270 = vmatmul.mubr.bf16.gmra.mxu0 %v476
    %v5271 = vpop.f32.mrf.mxu0
    %v5272 = vadd.f32 %v5232, %v5271
    %v5273 = vpop.f32.mrf.mxu0
    %v5274 = vpop.f32.mrf.mxu0
    %v5275 = vpop.f32.mrf.mxu0
    %5276 = vdwg.mxu0
    %5277 = vmatprep.subr.bf16.mxu0 0
    %5278 = vmatpush1.bf16.msra.mxu0 %v4060
    %5279 = vmatprep.subr.bf16.mxu0 0
    %5280 = vmatpush1.bf16.msra.mxu0 %v4059
    %5281 = vmatprep.subr.bf16.mxu0 0
    %5282 = vmatpush1.bf16.msra.mxu0 %v4058
    %5283 = vmatprep.subr.bf16.mxu0 0
    %5284 = vmatpush1.bf16.msra.mxu0 %v4057
    %5285 = vmatprep.subr.bf16.mxu0 0
    %5286 = vmatpush1.bf16.msra.mxu0 %v4056
    %5287 = vmatprep.subr.bf16.mxu0 0
    %5288 = vmatpush1.bf16.msra.mxu0 %v4055
    %5289 = vmatprep.subr.bf16.mxu0 0
    %5290 = vmatpush1.bf16.msra.mxu0 %v4054
    %5291 = vmatprep.subr.bf16.mxu0 0
    %5292 = vmatpush1.bf16.msra.mxu0 %v4053
    %5293 = vmatprep.subr.bf16.mxu0 0
    %5294 = vmatpush2.bf16.msra.mxu0 %v4068
    %5295 = vmatprep.subr.bf16.mxu0 0
    %5296 = vmatpush2.bf16.msra.mxu0 %v4067
    %5297 = vmatprep.subr.bf16.mxu0 0
    %5298 = vmatpush2.bf16.msra.mxu0 %v4066
    %5299 = vmatprep.subr.bf16.mxu0 0
    %5300 = vmatpush2.bf16.msra.mxu0 %v4065
    %5301 = vmatprep.subr.bf16.mxu0 0
    %5302 = vmatpush2.bf16.msra.mxu0 %v4064
    %5303 = vmatprep.subr.bf16.mxu0 0
    %5304 = vmatpush2.bf16.msra.mxu0 %v4063
    %5305 = vmatprep.subr.bf16.mxu0 0
    %5306 = vmatpush2.bf16.msra.mxu0 %v4062
    %5307 = vmatprep.subr.bf16.mxu0 0
    %5308 = vmatpush2.bf16.msra.mxu0 %v4061
    %5309 = vmatprep.mubr.bf16.mxu0 %v479
    %5310 = vmatmul.mubr.bf16.gmra.mxu0 %v478
    %v5311 = vpop.f32.mrf.mxu0
    %v5312 = vadd.f32 %v5272, %v5311
    %v5313 = vpop.f32.mrf.mxu0
    %v5314 = vpop.f32.mrf.mxu0
    %v5315 = vpop.f32.mrf.mxu0
    %5316 = vdwg.mxu0
    %5317 = vmatprep.subr.bf16.mxu0 0
    %5318 = vmatpush1.bf16.msra.mxu0 %v4076
    %5319 = vmatprep.subr.bf16.mxu0 0
    %5320 = vmatpush1.bf16.msra.mxu0 %v4075
    %5321 = vmatprep.subr.bf16.mxu0 0
    %5322 = vmatpush1.bf16.msra.mxu0 %v4074
    %5323 = vmatprep.subr.bf16.mxu0 0
    %5324 = vmatpush1.bf16.msra.mxu0 %v4073
    %5325 = vmatprep.subr.bf16.mxu0 0
    %5326 = vmatpush1.bf16.msra.mxu0 %v4072
    %5327 = vmatprep.subr.bf16.mxu0 0
    %5328 = vmatpush1.bf16.msra.mxu0 %v4071
    %5329 = vmatprep.subr.bf16.mxu0 0
    %5330 = vmatpush1.bf16.msra.mxu0 %v4070
    %5331 = vmatprep.subr.bf16.mxu0 0
    %5332 = vmatpush1.bf16.msra.mxu0 %v4069
    %5333 = vmatprep.subr.bf16.mxu0 0
    %5334 = vmatpush2.bf16.msra.mxu0 %v4084
    %5335 = vmatprep.subr.bf16.mxu0 0
    %5336 = vmatpush2.bf16.msra.mxu0 %v4083
    %5337 = vmatprep.subr.bf16.mxu0 0
    %5338 = vmatpush2.bf16.msra.mxu0 %v4082
    %5339 = vmatprep.subr.bf16.mxu0 0
    %5340 = vmatpush2.bf16.msra.mxu0 %v4081
    %5341 = vmatprep.subr.bf16.mxu0 0
    %5342 = vmatpush2.bf16.msra.mxu0 %v4080
    %5343 = vmatprep.subr.bf16.mxu0 0
    %5344 = vmatpush2.bf16.msra.mxu0 %v4079
    %5345 = vmatprep.subr.bf16.mxu0 0
    %5346 = vmatpush2.bf16.msra.mxu0 %v4078
    %5347 = vmatprep.subr.bf16.mxu0 0
    %5348 = vmatpush2.bf16.msra.mxu0 %v4077
    %5349 = vmatprep.mubr.bf16.mxu0 %v481
    %5350 = vmatmul.mubr.bf16.gmra.mxu0 %v480
    %v5351 = vpop.f32.mrf.mxu0
    %v5352 = vadd.f32 %v5312, %v5351
    %v5353 = vpop.f32.mrf.mxu0
    %v5354 = vpop.f32.mrf.mxu0
    %v5355 = vpop.f32.mrf.mxu0
    %5356 = vdwg.mxu0
    %5357 = vmatprep.subr.bf16.mxu0 0
    %5358 = vmatpush1.bf16.msra.mxu0 %v4092
    %5359 = vmatprep.subr.bf16.mxu0 0
    %5360 = vmatpush1.bf16.msra.mxu0 %v4091
    %5361 = vmatprep.subr.bf16.mxu0 0
    %5362 = vmatpush1.bf16.msra.mxu0 %v4090
    %5363 = vmatprep.subr.bf16.mxu0 0
    %5364 = vmatpush1.bf16.msra.mxu0 %v4089
    %5365 = vmatprep.subr.bf16.mxu0 0
    %5366 = vmatpush1.bf16.msra.mxu0 %v4088
    %5367 = vmatprep.subr.bf16.mxu0 0
    %5368 = vmatpush1.bf16.msra.mxu0 %v4087
    %5369 = vmatprep.subr.bf16.mxu0 0
    %5370 = vmatpush1.bf16.msra.mxu0 %v4086
    %5371 = vmatprep.subr.bf16.mxu0 0
    %5372 = vmatpush1.bf16.msra.mxu0 %v4085
    %5373 = vmatprep.subr.bf16.mxu0 0
    %5374 = vmatpush2.bf16.msra.mxu0 %v4100
    %5375 = vmatprep.subr.bf16.mxu0 0
    %5376 = vmatpush2.bf16.msra.mxu0 %v4099
    %5377 = vmatprep.subr.bf16.mxu0 0
    %5378 = vmatpush2.bf16.msra.mxu0 %v4098
    %5379 = vmatprep.subr.bf16.mxu0 0
    %5380 = vmatpush2.bf16.msra.mxu0 %v4097
    %5381 = vmatprep.subr.bf16.mxu0 0
    %5382 = vmatpush2.bf16.msra.mxu0 %v4096
    %5383 = vmatprep.subr.bf16.mxu0 0
    %5384 = vmatpush2.bf16.msra.mxu0 %v4095
    %5385 = vmatprep.subr.bf16.mxu0 0
    %5386 = vmatpush2.bf16.msra.mxu0 %v4094
    %5387 = vmatprep.subr.bf16.mxu0 0
    %5388 = vmatpush2.bf16.msra.mxu0 %v4093
    %5389 = vmatprep.mubr.bf16.mxu0 %v483
    %5390 = vmatmul.mubr.bf16.gmra.mxu0 %v482
    %v5391 = vpop.f32.mrf.mxu0
    %v5392 = vadd.f32 %v5352, %v5391
    %v5393 = vpop.f32.mrf.mxu0
    %v5394 = vpop.f32.mrf.mxu0
    %v5395 = vpop.f32.mrf.mxu0
    %5396 = vdwg.mxu0
    %5397 = vmatprep.subr.bf16.mxu0 0
    %5398 = vmatpush1.bf16.msra.mxu0 %v4108
    %5399 = vmatprep.subr.bf16.mxu0 0
    %5400 = vmatpush1.bf16.msra.mxu0 %v4107
    %5401 = vmatprep.subr.bf16.mxu0 0
    %5402 = vmatpush1.bf16.msra.mxu0 %v4106
    %5403 = vmatprep.subr.bf16.mxu0 0
    %5404 = vmatpush1.bf16.msra.mxu0 %v4105
    %5405 = vmatprep.subr.bf16.mxu0 0
    %5406 = vmatpush1.bf16.msra.mxu0 %v4104
    %5407 = vmatprep.subr.bf16.mxu0 0
    %5408 = vmatpush1.bf16.msra.mxu0 %v4103
    %5409 = vmatprep.subr.bf16.mxu0 0
    %5410 = vmatpush1.bf16.msra.mxu0 %v4102
    %5411 = vmatprep.subr.bf16.mxu0 0
    %5412 = vmatpush1.bf16.msra.mxu0 %v4101
    %5413 = vmatprep.subr.bf16.mxu0 0
    %5414 = vmatpush2.bf16.msra.mxu0 %v4116
    %5415 = vmatprep.subr.bf16.mxu0 0
    %5416 = vmatpush2.bf16.msra.mxu0 %v4115
    %5417 = vmatprep.subr.bf16.mxu0 0
    %5418 = vmatpush2.bf16.msra.mxu0 %v4114
    %5419 = vmatprep.subr.bf16.mxu0 0
    %5420 = vmatpush2.bf16.msra.mxu0 %v4113
    %5421 = vmatprep.subr.bf16.mxu0 0
    %5422 = vmatpush2.bf16.msra.mxu0 %v4112
    %5423 = vmatprep.subr.bf16.mxu0 0
    %5424 = vmatpush2.bf16.msra.mxu0 %v4111
    %5425 = vmatprep.subr.bf16.mxu0 0
    %5426 = vmatpush2.bf16.msra.mxu0 %v4110
    %5427 = vmatprep.subr.bf16.mxu0 0
    %5428 = vmatpush2.bf16.msra.mxu0 %v4109
    %5429 = vmatprep.mubr.bf16.mxu0 %v485
    %5430 = vmatmul.mubr.bf16.gmra.mxu0 %v484
    %v5431 = vpop.f32.mrf.mxu0
    %v5432 = vadd.f32 %v5392, %v5431
    %v5433 = vpop.f32.mrf.mxu0
    %v5434 = vpop.f32.mrf.mxu0
    %v5435 = vpop.f32.mrf.mxu0
    %5436 = vdwg.mxu0
    %5437 = vmatprep.subr.bf16.mxu0 0
    %5438 = vmatpush1.bf16.msra.mxu0 %v4124
    %5439 = vmatprep.subr.bf16.mxu0 0
    %5440 = vmatpush1.bf16.msra.mxu0 %v4123
    %5441 = vmatprep.subr.bf16.mxu0 0
    %5442 = vmatpush1.bf16.msra.mxu0 %v4122
    %5443 = vmatprep.subr.bf16.mxu0 0
    %5444 = vmatpush1.bf16.msra.mxu0 %v4121
    %5445 = vmatprep.subr.bf16.mxu0 0
    %5446 = vmatpush1.bf16.msra.mxu0 %v4120
    %5447 = vmatprep.subr.bf16.mxu0 0
    %5448 = vmatpush1.bf16.msra.mxu0 %v4119
    %5449 = vmatprep.subr.bf16.mxu0 0
    %5450 = vmatpush1.bf16.msra.mxu0 %v4118
    %5451 = vmatprep.subr.bf16.mxu0 0
    %5452 = vmatpush1.bf16.msra.mxu0 %v4117
    %5453 = vmatprep.subr.bf16.mxu0 0
    %5454 = vmatpush2.bf16.msra.mxu0 %v4132
    %5455 = vmatprep.subr.bf16.mxu0 0
    %5456 = vmatpush2.bf16.msra.mxu0 %v4131
    %5457 = vmatprep.subr.bf16.mxu0 0
    %5458 = vmatpush2.bf16.msra.mxu0 %v4130
    %5459 = vmatprep.subr.bf16.mxu0 0
    %5460 = vmatpush2.bf16.msra.mxu0 %v4129
    %5461 = vmatprep.subr.bf16.mxu0 0
    %5462 = vmatpush2.bf16.msra.mxu0 %v4128
    %5463 = vmatprep.subr.bf16.mxu0 0
    %5464 = vmatpush2.bf16.msra.mxu0 %v4127
    %5465 = vmatprep.subr.bf16.mxu0 0
    %5466 = vmatpush2.bf16.msra.mxu0 %v4126
    %5467 = vmatprep.subr.bf16.mxu0 0
    %5468 = vmatpush2.bf16.msra.mxu0 %v4125
    %5469 = vmatprep.mubr.bf16.mxu0 %v487
    %5470 = vmatmul.mubr.bf16.gmra.mxu0 %v486
    %v5471 = vpop.f32.mrf.mxu0
    %v5472 = vadd.f32 %v5432, %v5471
    %v5473 = vpop.f32.mrf.mxu0
    %v5474 = vpop.f32.mrf.mxu0
    %v5475 = vpop.f32.mrf.mxu0
    %5476 = vdwg.mxu0
    %5477 = vmatprep.subr.bf16.mxu0 0
    %5478 = vmatpush1.bf16.msra.mxu0 %v4140
    %5479 = vmatprep.subr.bf16.mxu0 0
    %5480 = vmatpush1.bf16.msra.mxu0 %v4139
    %5481 = vmatprep.subr.bf16.mxu0 0
    %5482 = vmatpush1.bf16.msra.mxu0 %v4138
    %5483 = vmatprep.subr.bf16.mxu0 0
    %5484 = vmatpush1.bf16.msra.mxu0 %v4137
    %5485 = vmatprep.subr.bf16.mxu0 0
    %5486 = vmatpush1.bf16.msra.mxu0 %v4136
    %5487 = vmatprep.subr.bf16.mxu0 0
    %5488 = vmatpush1.bf16.msra.mxu0 %v4135
    %5489 = vmatprep.subr.bf16.mxu0 0
    %5490 = vmatpush1.bf16.msra.mxu0 %v4134
    %5491 = vmatprep.subr.bf16.mxu0 0
    %5492 = vmatpush1.bf16.msra.mxu0 %v4133
    %5493 = vmatprep.subr.bf16.mxu0 0
    %5494 = vmatpush2.bf16.msra.mxu0 %v4148
    %5495 = vmatprep.subr.bf16.mxu0 0
    %5496 = vmatpush2.bf16.msra.mxu0 %v4147
    %5497 = vmatprep.subr.bf16.mxu0 0
    %5498 = vmatpush2.bf16.msra.mxu0 %v4146
    %5499 = vmatprep.subr.bf16.mxu0 0
    %5500 = vmatpush2.bf16.msra.mxu0 %v4145
    %5501 = vmatprep.subr.bf16.mxu0 0
    %5502 = vmatpush2.bf16.msra.mxu0 %v4144
    %5503 = vmatprep.subr.bf16.mxu0 0
    %5504 = vmatpush2.bf16.msra.mxu0 %v4143
    %5505 = vmatprep.subr.bf16.mxu0 0
    %5506 = vmatpush2.bf16.msra.mxu0 %v4142
    %5507 = vmatprep.subr.bf16.mxu0 0
    %5508 = vmatpush2.bf16.msra.mxu0 %v4141
    %5509 = vmatprep.mubr.bf16.mxu0 %v489
    %5510 = vmatmul.mubr.bf16.gmra.mxu0 %v488
    %v5511 = vpop.f32.mrf.mxu0
    %v5512 = vadd.f32 %v5472, %v5511
    %v5513 = vpop.f32.mrf.mxu0
    %v5514 = vpop.f32.mrf.mxu0
    %v5515 = vpop.f32.mrf.mxu0
    %5516 = vdwg.mxu0
    %5517 = vmatprep.subr.bf16.mxu0 0
    %5518 = vmatpush1.bf16.msra.mxu0 %v4156
    %5519 = vmatprep.subr.bf16.mxu0 0
    %5520 = vmatpush1.bf16.msra.mxu0 %v4155
    %5521 = vmatprep.subr.bf16.mxu0 0
    %5522 = vmatpush1.bf16.msra.mxu0 %v4154
    %5523 = vmatprep.subr.bf16.mxu0 0
    %5524 = vmatpush1.bf16.msra.mxu0 %v4153
    %5525 = vmatprep.subr.bf16.mxu0 0
    %5526 = vmatpush1.bf16.msra.mxu0 %v4152
    %5527 = vmatprep.subr.bf16.mxu0 0
    %5528 = vmatpush1.bf16.msra.mxu0 %v4151
    %5529 = vmatprep.subr.bf16.mxu0 0
    %5530 = vmatpush1.bf16.msra.mxu0 %v4150
    %5531 = vmatprep.subr.bf16.mxu0 0
    %5532 = vmatpush1.bf16.msra.mxu0 %v4149
    %5533 = vmatprep.subr.bf16.mxu0 0
    %5534 = vmatpush2.bf16.msra.mxu0 %v4164
    %5535 = vmatprep.subr.bf16.mxu0 0
    %5536 = vmatpush2.bf16.msra.mxu0 %v4163
    %5537 = vmatprep.subr.bf16.mxu0 0
    %5538 = vmatpush2.bf16.msra.mxu0 %v4162
    %5539 = vmatprep.subr.bf16.mxu0 0
    %5540 = vmatpush2.bf16.msra.mxu0 %v4161
    %5541 = vmatprep.subr.bf16.mxu0 0
    %5542 = vmatpush2.bf16.msra.mxu0 %v4160
    %5543 = vmatprep.subr.bf16.mxu0 0
    %5544 = vmatpush2.bf16.msra.mxu0 %v4159
    %5545 = vmatprep.subr.bf16.mxu0 0
    %5546 = vmatpush2.bf16.msra.mxu0 %v4158
    %5547 = vmatprep.subr.bf16.mxu0 0
    %5548 = vmatpush2.bf16.msra.mxu0 %v4157
    %5549 = vmatprep.mubr.bf16.mxu0 %v491
    %5550 = vmatmul.mubr.bf16.gmra.mxu0 %v490
    %v5551 = vpop.f32.mrf.mxu0
    %v5552 = vadd.f32 %v5512, %v5551
    %v5553 = vpop.f32.mrf.mxu0
    %v5554 = vpop.f32.mrf.mxu0
    %v5555 = vpop.f32.mrf.mxu0
    %5556 = vdwg.mxu0
    %5557 = vmatprep.subr.bf16.mxu0 0
    %5558 = vmatpush1.bf16.msra.mxu0 %v4172
    %5559 = vmatprep.subr.bf16.mxu0 0
    %5560 = vmatpush1.bf16.msra.mxu0 %v4171
    %5561 = vmatprep.subr.bf16.mxu0 0
    %5562 = vmatpush1.bf16.msra.mxu0 %v4170
    %5563 = vmatprep.subr.bf16.mxu0 0
    %5564 = vmatpush1.bf16.msra.mxu0 %v4169
    %5565 = vmatprep.subr.bf16.mxu0 0
    %5566 = vmatpush1.bf16.msra.mxu0 %v4168
    %5567 = vmatprep.subr.bf16.mxu0 0
    %5568 = vmatpush1.bf16.msra.mxu0 %v4167
    %5569 = vmatprep.subr.bf16.mxu0 0
    %5570 = vmatpush1.bf16.msra.mxu0 %v4166
    %5571 = vmatprep.subr.bf16.mxu0 0
    %5572 = vmatpush1.bf16.msra.mxu0 %v4165
    %5573 = vmatprep.subr.bf16.mxu0 0
    %5574 = vmatpush2.bf16.msra.mxu0 %v4180
    %5575 = vmatprep.subr.bf16.mxu0 0
    %5576 = vmatpush2.bf16.msra.mxu0 %v4179
    %5577 = vmatprep.subr.bf16.mxu0 0
    %5578 = vmatpush2.bf16.msra.mxu0 %v4178
    %5579 = vmatprep.subr.bf16.mxu0 0
    %5580 = vmatpush2.bf16.msra.mxu0 %v4177
    %5581 = vmatprep.subr.bf16.mxu0 0
    %5582 = vmatpush2.bf16.msra.mxu0 %v4176
    %5583 = vmatprep.subr.bf16.mxu0 0
    %5584 = vmatpush2.bf16.msra.mxu0 %v4175
    %5585 = vmatprep.subr.bf16.mxu0 0
    %5586 = vmatpush2.bf16.msra.mxu0 %v4174
    %5587 = vmatprep.subr.bf16.mxu0 0
    %5588 = vmatpush2.bf16.msra.mxu0 %v4173
    %5589 = vmatprep.mubr.bf16.mxu0 %v493
    %5590 = vmatmul.mubr.bf16.gmra.mxu0 %v492
    %v5591 = vpop.f32.mrf.mxu0
    %v5592 = vadd.f32 %v5552, %v5591
    %v5593 = vpop.f32.mrf.mxu0
    %v5594 = vpop.f32.mrf.mxu0
    %v5595 = vpop.f32.mrf.mxu0
    %5596 = vdwg.mxu0
    %5597 = vmatprep.subr.bf16.mxu0 0
    %5598 = vmatpush1.bf16.msra.mxu0 %v4188
    %5599 = vmatprep.subr.bf16.mxu0 0
    %5600 = vmatpush1.bf16.msra.mxu0 %v4187
    %5601 = vmatprep.subr.bf16.mxu0 0
    %5602 = vmatpush1.bf16.msra.mxu0 %v4186
    %5603 = vmatprep.subr.bf16.mxu0 0
    %5604 = vmatpush1.bf16.msra.mxu0 %v4185
    %5605 = vmatprep.subr.bf16.mxu0 0
    %5606 = vmatpush1.bf16.msra.mxu0 %v4184
    %5607 = vmatprep.subr.bf16.mxu0 0
    %5608 = vmatpush1.bf16.msra.mxu0 %v4183
    %5609 = vmatprep.subr.bf16.mxu0 0
    %5610 = vmatpush1.bf16.msra.mxu0 %v4182
    %5611 = vmatprep.subr.bf16.mxu0 0
    %5612 = vmatpush1.bf16.msra.mxu0 %v4181
    %5613 = vmatprep.subr.bf16.mxu0 0
    %5614 = vmatpush2.bf16.msra.mxu0 %v4196
    %5615 = vmatprep.subr.bf16.mxu0 0
    %5616 = vmatpush2.bf16.msra.mxu0 %v4195
    %5617 = vmatprep.subr.bf16.mxu0 0
    %5618 = vmatpush2.bf16.msra.mxu0 %v4194
    %5619 = vmatprep.subr.bf16.mxu0 0
    %5620 = vmatpush2.bf16.msra.mxu0 %v4193
    %5621 = vmatprep.subr.bf16.mxu0 0
    %5622 = vmatpush2.bf16.msra.mxu0 %v4192
    %5623 = vmatprep.subr.bf16.mxu0 0
    %5624 = vmatpush2.bf16.msra.mxu0 %v4191
    %5625 = vmatprep.subr.bf16.mxu0 0
    %5626 = vmatpush2.bf16.msra.mxu0 %v4190
    %5627 = vmatprep.subr.bf16.mxu0 0
    %5628 = vmatpush2.bf16.msra.mxu0 %v4189
    %5629 = vmatprep.mubr.bf16.mxu0 %v495
    %5630 = vmatmul.mubr.bf16.gmra.mxu0 %v494
    %v5631 = vpop.f32.mrf.mxu0
    %v5632 = vadd.f32 %v5592, %v5631
    %v5633 = vpop.f32.mrf.mxu0
    %v5634 = vpop.f32.mrf.mxu0
    %v5635 = vpop.f32.mrf.mxu0
    %5636 = vdwg.mxu0
    %5637 = vmatprep.subr.bf16.mxu0 0
    %5638 = vmatpush1.bf16.msra.mxu0 %v4204
    %5639 = vmatprep.subr.bf16.mxu0 0
    %5640 = vmatpush1.bf16.msra.mxu0 %v4203
    %5641 = vmatprep.subr.bf16.mxu0 0
    %5642 = vmatpush1.bf16.msra.mxu0 %v4202
    %5643 = vmatprep.subr.bf16.mxu0 0
    %5644 = vmatpush1.bf16.msra.mxu0 %v4201
    %5645 = vmatprep.subr.bf16.mxu0 0
    %5646 = vmatpush1.bf16.msra.mxu0 %v4200
    %5647 = vmatprep.subr.bf16.mxu0 0
    %5648 = vmatpush1.bf16.msra.mxu0 %v4199
    %5649 = vmatprep.subr.bf16.mxu0 0
    %5650 = vmatpush1.bf16.msra.mxu0 %v4198
    %5651 = vmatprep.subr.bf16.mxu0 0
    %5652 = vmatpush1.bf16.msra.mxu0 %v4197
    %5653 = vmatprep.subr.bf16.mxu0 0
    %5654 = vmatpush2.bf16.msra.mxu0 %v4212
    %5655 = vmatprep.subr.bf16.mxu0 0
    %5656 = vmatpush2.bf16.msra.mxu0 %v4211
    %5657 = vmatprep.subr.bf16.mxu0 0
    %5658 = vmatpush2.bf16.msra.mxu0 %v4210
    %5659 = vmatprep.subr.bf16.mxu0 0
    %5660 = vmatpush2.bf16.msra.mxu0 %v4209
    %5661 = vmatprep.subr.bf16.mxu0 0
    %5662 = vmatpush2.bf16.msra.mxu0 %v4208
    %5663 = vmatprep.subr.bf16.mxu0 0
    %5664 = vmatpush2.bf16.msra.mxu0 %v4207
    %5665 = vmatprep.subr.bf16.mxu0 0
    %5666 = vmatpush2.bf16.msra.mxu0 %v4206
    %5667 = vmatprep.subr.bf16.mxu0 0
    %5668 = vmatpush2.bf16.msra.mxu0 %v4205
    %5669 = vmatprep.mubr.bf16.mxu0 %v497
    %5670 = vmatmul.mubr.bf16.gmra.mxu0 %v496
    %v5671 = vpop.f32.mrf.mxu0
    %v5672 = vadd.f32 %v5632, %v5671
    %v5673 = vpop.f32.mrf.mxu0
    %v5674 = vpop.f32.mrf.mxu0
    %v5675 = vpop.f32.mrf.mxu0
    %5676 = vdwg.mxu0
    %5677 = vmatprep.subr.bf16.mxu0 0
    %5678 = vmatpush1.bf16.msra.mxu0 %v4220
    %5679 = vmatprep.subr.bf16.mxu0 0
    %5680 = vmatpush1.bf16.msra.mxu0 %v4219
    %5681 = vmatprep.subr.bf16.mxu0 0
    %5682 = vmatpush1.bf16.msra.mxu0 %v4218
    %5683 = vmatprep.subr.bf16.mxu0 0
    %5684 = vmatpush1.bf16.msra.mxu0 %v4217
    %5685 = vmatprep.subr.bf16.mxu0 0
    %5686 = vmatpush1.bf16.msra.mxu0 %v4216
    %5687 = vmatprep.subr.bf16.mxu0 0
    %5688 = vmatpush1.bf16.msra.mxu0 %v4215
    %5689 = vmatprep.subr.bf16.mxu0 0
    %5690 = vmatpush1.bf16.msra.mxu0 %v4214
    %5691 = vmatprep.subr.bf16.mxu0 0
    %5692 = vmatpush1.bf16.msra.mxu0 %v4213
    %5693 = vmatprep.subr.bf16.mxu0 0
    %5694 = vmatpush2.bf16.msra.mxu0 %v4228
    %5695 = vmatprep.subr.bf16.mxu0 0
    %5696 = vmatpush2.bf16.msra.mxu0 %v4227
    %5697 = vmatprep.subr.bf16.mxu0 0
    %5698 = vmatpush2.bf16.msra.mxu0 %v4226
    %5699 = vmatprep.subr.bf16.mxu0 0
    %5700 = vmatpush2.bf16.msra.mxu0 %v4225
    %5701 = vmatprep.subr.bf16.mxu0 0
    %5702 = vmatpush2.bf16.msra.mxu0 %v4224
    %5703 = vmatprep.subr.bf16.mxu0 0
    %5704 = vmatpush2.bf16.msra.mxu0 %v4223
    %5705 = vmatprep.subr.bf16.mxu0 0
    %5706 = vmatpush2.bf16.msra.mxu0 %v4222
    %5707 = vmatprep.subr.bf16.mxu0 0
    %5708 = vmatpush2.bf16.msra.mxu0 %v4221
    %5709 = vmatprep.mubr.bf16.mxu0 %v499
    %5710 = vmatmul.mubr.bf16.gmra.mxu0 %v498
    %v5711 = vpop.f32.mrf.mxu0
    %v5712 = vadd.f32 %v5672, %v5711
    %v5713 = vpop.f32.mrf.mxu0
    %v5714 = vpop.f32.mrf.mxu0
    %v5715 = vpop.f32.mrf.mxu0
    %5716 = vdwg.mxu0
    %5717 = vmatprep.subr.bf16.mxu0 0
    %5718 = vmatpush1.bf16.msra.mxu0 %v4236
    %5719 = vmatprep.subr.bf16.mxu0 0
    %5720 = vmatpush1.bf16.msra.mxu0 %v4235
    %5721 = vmatprep.subr.bf16.mxu0 0
    %5722 = vmatpush1.bf16.msra.mxu0 %v4234
    %5723 = vmatprep.subr.bf16.mxu0 0
    %5724 = vmatpush1.bf16.msra.mxu0 %v4233
    %5725 = vmatprep.subr.bf16.mxu0 0
    %5726 = vmatpush1.bf16.msra.mxu0 %v4232
    %5727 = vmatprep.subr.bf16.mxu0 0
    %5728 = vmatpush1.bf16.msra.mxu0 %v4231
    %5729 = vmatprep.subr.bf16.mxu0 0
    %5730 = vmatpush1.bf16.msra.mxu0 %v4230
    %5731 = vmatprep.subr.bf16.mxu0 0
    %5732 = vmatpush1.bf16.msra.mxu0 %v4229
    %5733 = vmatprep.subr.bf16.mxu0 0
    %5734 = vmatpush2.bf16.msra.mxu0 %v4244
    %5735 = vmatprep.subr.bf16.mxu0 0
    %5736 = vmatpush2.bf16.msra.mxu0 %v4243
    %5737 = vmatprep.subr.bf16.mxu0 0
    %5738 = vmatpush2.bf16.msra.mxu0 %v4242
    %5739 = vmatprep.subr.bf16.mxu0 0
    %5740 = vmatpush2.bf16.msra.mxu0 %v4241
    %5741 = vmatprep.subr.bf16.mxu0 0
    %5742 = vmatpush2.bf16.msra.mxu0 %v4240
    %5743 = vmatprep.subr.bf16.mxu0 0
    %5744 = vmatpush2.bf16.msra.mxu0 %v4239
    %5745 = vmatprep.subr.bf16.mxu0 0
    %5746 = vmatpush2.bf16.msra.mxu0 %v4238
    %5747 = vmatprep.subr.bf16.mxu0 0
    %5748 = vmatpush2.bf16.msra.mxu0 %v4237
    %5749 = vmatprep.mubr.bf16.mxu0 %v501
    %5750 = vmatmul.mubr.bf16.gmra.mxu0 %v500
    %v5751 = vpop.f32.mrf.mxu0
    %v5752 = vadd.f32 %v5712, %v5751
    %v5753 = vpop.f32.mrf.mxu0
    %v5754 = vpop.f32.mrf.mxu0
    %v5755 = vpop.f32.mrf.mxu0
    %5756 = vdwg.mxu0
    %5757 = vmatprep.subr.bf16.mxu0 0
    %5758 = vmatpush1.bf16.msra.mxu0 %v4252
    %5759 = vmatprep.subr.bf16.mxu0 0
    %5760 = vmatpush1.bf16.msra.mxu0 %v4251
    %5761 = vmatprep.subr.bf16.mxu0 0
    %5762 = vmatpush1.bf16.msra.mxu0 %v4250
    %5763 = vmatprep.subr.bf16.mxu0 0
    %5764 = vmatpush1.bf16.msra.mxu0 %v4249
    %5765 = vmatprep.subr.bf16.mxu0 0
    %5766 = vmatpush1.bf16.msra.mxu0 %v4248
    %5767 = vmatprep.subr.bf16.mxu0 0
    %5768 = vmatpush1.bf16.msra.mxu0 %v4247
    %5769 = vmatprep.subr.bf16.mxu0 0
    %5770 = vmatpush1.bf16.msra.mxu0 %v4246
    %5771 = vmatprep.subr.bf16.mxu0 0
    %5772 = vmatpush1.bf16.msra.mxu0 %v4245
    %5773 = vmatprep.subr.bf16.mxu0 0
    %5774 = vmatpush2.bf16.msra.mxu0 %v4260
    %5775 = vmatprep.subr.bf16.mxu0 0
    %5776 = vmatpush2.bf16.msra.mxu0 %v4259
    %5777 = vmatprep.subr.bf16.mxu0 0
    %5778 = vmatpush2.bf16.msra.mxu0 %v4258
    %5779 = vmatprep.subr.bf16.mxu0 0
    %5780 = vmatpush2.bf16.msra.mxu0 %v4257
    %5781 = vmatprep.subr.bf16.mxu0 0
    %5782 = vmatpush2.bf16.msra.mxu0 %v4256
    %5783 = vmatprep.subr.bf16.mxu0 0
    %5784 = vmatpush2.bf16.msra.mxu0 %v4255
    %5785 = vmatprep.subr.bf16.mxu0 0
    %5786 = vmatpush2.bf16.msra.mxu0 %v4254
    %5787 = vmatprep.subr.bf16.mxu0 0
    %5788 = vmatpush2.bf16.msra.mxu0 %v4253
    %5789 = vmatprep.mubr.bf16.mxu0 %v503
    %5790 = vmatmul.mubr.bf16.gmra.mxu0 %v502
    %v5791 = vpop.f32.mrf.mxu0
    %v5792 = vadd.f32 %v5752, %v5791
    %v5793 = vpop.f32.mrf.mxu0
    %v5794 = vpop.f32.mrf.mxu0
    %v5795 = vpop.f32.mrf.mxu0
    %5796 = vdwg.mxu0
    %5797 = vmatprep.subr.bf16.mxu0 0
    %5798 = vmatpush1.bf16.msra.mxu0 %v4268
    %5799 = vmatprep.subr.bf16.mxu0 0
    %5800 = vmatpush1.bf16.msra.mxu0 %v4267
    %5801 = vmatprep.subr.bf16.mxu0 0
    %5802 = vmatpush1.bf16.msra.mxu0 %v4266
    %5803 = vmatprep.subr.bf16.mxu0 0
    %5804 = vmatpush1.bf16.msra.mxu0 %v4265
    %5805 = vmatprep.subr.bf16.mxu0 0
    %5806 = vmatpush1.bf16.msra.mxu0 %v4264
    %5807 = vmatprep.subr.bf16.mxu0 0
    %5808 = vmatpush1.bf16.msra.mxu0 %v4263
    %5809 = vmatprep.subr.bf16.mxu0 0
    %5810 = vmatpush1.bf16.msra.mxu0 %v4262
    %5811 = vmatprep.subr.bf16.mxu0 0
    %5812 = vmatpush1.bf16.msra.mxu0 %v4261
    %5813 = vmatprep.subr.bf16.mxu0 0
    %5814 = vmatpush2.bf16.msra.mxu0 %v4276
    %5815 = vmatprep.subr.bf16.mxu0 0
    %5816 = vmatpush2.bf16.msra.mxu0 %v4275
    %5817 = vmatprep.subr.bf16.mxu0 0
    %5818 = vmatpush2.bf16.msra.mxu0 %v4274
    %5819 = vmatprep.subr.bf16.mxu0 0
    %5820 = vmatpush2.bf16.msra.mxu0 %v4273
    %5821 = vmatprep.subr.bf16.mxu0 0
    %5822 = vmatpush2.bf16.msra.mxu0 %v4272
    %5823 = vmatprep.subr.bf16.mxu0 0
    %5824 = vmatpush2.bf16.msra.mxu0 %v4271
    %5825 = vmatprep.subr.bf16.mxu0 0
    %5826 = vmatpush2.bf16.msra.mxu0 %v4270
    %5827 = vmatprep.subr.bf16.mxu0 0
    %5828 = vmatpush2.bf16.msra.mxu0 %v4269
    %5829 = vmatprep.mubr.bf16.mxu0 %v505
    %5830 = vmatmul.mubr.bf16.gmra.mxu0 %v504
    %v5831 = vpop.f32.mrf.mxu0
    %v5832 = vadd.f32 %v5792, %v5831
    %v5833 = vpop.f32.mrf.mxu0
    %v5834 = vpop.f32.mrf.mxu0
    %v5835 = vpop.f32.mrf.mxu0
    %5836 = vdwg.mxu0
    %5837 = vmatprep.subr.bf16.mxu0 0
    %5838 = vmatpush1.bf16.msra.mxu0 %v4284
    %5839 = vmatprep.subr.bf16.mxu0 0
    %5840 = vmatpush1.bf16.msra.mxu0 %v4283
    %5841 = vmatprep.subr.bf16.mxu0 0
    %5842 = vmatpush1.bf16.msra.mxu0 %v4282
    %5843 = vmatprep.subr.bf16.mxu0 0
    %5844 = vmatpush1.bf16.msra.mxu0 %v4281
    %5845 = vmatprep.subr.bf16.mxu0 0
    %5846 = vmatpush1.bf16.msra.mxu0 %v4280
    %5847 = vmatprep.subr.bf16.mxu0 0
    %5848 = vmatpush1.bf16.msra.mxu0 %v4279
    %5849 = vmatprep.subr.bf16.mxu0 0
    %5850 = vmatpush1.bf16.msra.mxu0 %v4278
    %5851 = vmatprep.subr.bf16.mxu0 0
    %5852 = vmatpush1.bf16.msra.mxu0 %v4277
    %5853 = vmatprep.subr.bf16.mxu0 0
    %5854 = vmatpush2.bf16.msra.mxu0 %v4292
    %5855 = vmatprep.subr.bf16.mxu0 0
    %5856 = vmatpush2.bf16.msra.mxu0 %v4291
    %5857 = vmatprep.subr.bf16.mxu0 0
    %5858 = vmatpush2.bf16.msra.mxu0 %v4290
    %5859 = vmatprep.subr.bf16.mxu0 0
    %5860 = vmatpush2.bf16.msra.mxu0 %v4289
    %5861 = vmatprep.subr.bf16.mxu0 0
    %5862 = vmatpush2.bf16.msra.mxu0 %v4288
    %5863 = vmatprep.subr.bf16.mxu0 0
    %5864 = vmatpush2.bf16.msra.mxu0 %v4287
    %5865 = vmatprep.subr.bf16.mxu0 0
    %5866 = vmatpush2.bf16.msra.mxu0 %v4286
    %5867 = vmatprep.subr.bf16.mxu0 0
    %5868 = vmatpush2.bf16.msra.mxu0 %v4285
    %5869 = vmatprep.mubr.bf16.mxu0 %v507
    %5870 = vmatmul.mubr.bf16.gmra.mxu0 %v506
    %v5871 = vpop.f32.mrf.mxu0
    %v5872 = vadd.f32 %v5832, %v5871
    %v5873 = vpop.f32.mrf.mxu0
    %v5874 = vpop.f32.mrf.mxu0
    %v5875 = vpop.f32.mrf.mxu0
    %5876 = vdwg.mxu0
    %5877 = vmatprep.subr.bf16.mxu0 0
    %5878 = vmatpush1.bf16.msra.mxu0 %v4300
    %5879 = vmatprep.subr.bf16.mxu0 0
    %5880 = vmatpush1.bf16.msra.mxu0 %v4299
    %5881 = vmatprep.subr.bf16.mxu0 0
    %5882 = vmatpush1.bf16.msra.mxu0 %v4298
    %5883 = vmatprep.subr.bf16.mxu0 0
    %5884 = vmatpush1.bf16.msra.mxu0 %v4297
    %5885 = vmatprep.subr.bf16.mxu0 0
    %5886 = vmatpush1.bf16.msra.mxu0 %v4296
    %5887 = vmatprep.subr.bf16.mxu0 0
    %5888 = vmatpush1.bf16.msra.mxu0 %v4295
    %5889 = vmatprep.subr.bf16.mxu0 0
    %5890 = vmatpush1.bf16.msra.mxu0 %v4294
    %5891 = vmatprep.subr.bf16.mxu0 0
    %5892 = vmatpush1.bf16.msra.mxu0 %v4293
    %5893 = vmatprep.subr.bf16.mxu0 0
    %5894 = vmatpush2.bf16.msra.mxu0 %v4308
    %5895 = vmatprep.subr.bf16.mxu0 0
    %5896 = vmatpush2.bf16.msra.mxu0 %v4307
    %5897 = vmatprep.subr.bf16.mxu0 0
    %5898 = vmatpush2.bf16.msra.mxu0 %v4306
    %5899 = vmatprep.subr.bf16.mxu0 0
    %5900 = vmatpush2.bf16.msra.mxu0 %v4305
    %5901 = vmatprep.subr.bf16.mxu0 0
    %5902 = vmatpush2.bf16.msra.mxu0 %v4304
    %5903 = vmatprep.subr.bf16.mxu0 0
    %5904 = vmatpush2.bf16.msra.mxu0 %v4303
    %5905 = vmatprep.subr.bf16.mxu0 0
    %5906 = vmatpush2.bf16.msra.mxu0 %v4302
    %5907 = vmatprep.subr.bf16.mxu0 0
    %5908 = vmatpush2.bf16.msra.mxu0 %v4301
    %5909 = vmatprep.mubr.bf16.mxu0 %v509
    %5910 = vmatmul.mubr.bf16.gmra.mxu0 %v508
    %v5911 = vpop.f32.mrf.mxu0
    %v5912 = vadd.f32 %v5872, %v5911
    %v5913 = vpop.f32.mrf.mxu0
    %v5914 = vpop.f32.mrf.mxu0
    %v5915 = vpop.f32.mrf.mxu0
    %5916 = vdwg.mxu0
    %5917 = vmatprep.subr.bf16.mxu0 0
    %5918 = vmatpush1.bf16.msra.mxu0 %v4316
    %5919 = vmatprep.subr.bf16.mxu0 0
    %5920 = vmatpush1.bf16.msra.mxu0 %v4315
    %5921 = vmatprep.subr.bf16.mxu0 0
    %5922 = vmatpush1.bf16.msra.mxu0 %v4314
    %5923 = vmatprep.subr.bf16.mxu0 0
    %5924 = vmatpush1.bf16.msra.mxu0 %v4313
    %5925 = vmatprep.subr.bf16.mxu0 0
    %5926 = vmatpush1.bf16.msra.mxu0 %v4312
    %5927 = vmatprep.subr.bf16.mxu0 0
    %5928 = vmatpush1.bf16.msra.mxu0 %v4311
    %5929 = vmatprep.subr.bf16.mxu0 0
    %5930 = vmatpush1.bf16.msra.mxu0 %v4310
    %5931 = vmatprep.subr.bf16.mxu0 0
    %5932 = vmatpush1.bf16.msra.mxu0 %v4309
    %5933 = vmatprep.subr.bf16.mxu0 0
    %5934 = vmatpush2.bf16.msra.mxu0 %v4324
    %5935 = vmatprep.subr.bf16.mxu0 0
    %5936 = vmatpush2.bf16.msra.mxu0 %v4323
    %5937 = vmatprep.subr.bf16.mxu0 0
    %5938 = vmatpush2.bf16.msra.mxu0 %v4322
    %5939 = vmatprep.subr.bf16.mxu0 0
    %5940 = vmatpush2.bf16.msra.mxu0 %v4321
    %5941 = vmatprep.subr.bf16.mxu0 0
    %5942 = vmatpush2.bf16.msra.mxu0 %v4320
    %5943 = vmatprep.subr.bf16.mxu0 0
    %5944 = vmatpush2.bf16.msra.mxu0 %v4319
    %5945 = vmatprep.subr.bf16.mxu0 0
    %5946 = vmatpush2.bf16.msra.mxu0 %v4318
    %5947 = vmatprep.subr.bf16.mxu0 0
    %5948 = vmatpush2.bf16.msra.mxu0 %v4317
    %5949 = vmatprep.mubr.bf16.mxu0 %v511
    %5950 = vmatmul.mubr.bf16.gmra.mxu0 %v510
    %v5951 = vpop.f32.mrf.mxu0
    %v5952 = vadd.f32 %v5912, %v5951
    %v5953 = vpop.f32.mrf.mxu0
    %v5954 = vpop.f32.mrf.mxu0
    %v5955 = vpop.f32.mrf.mxu0
    %5956 = vdwg.mxu0
    %5957 = vmatprep.subr.bf16.mxu0 0
    %5958 = vmatpush1.bf16.msra.mxu0 %v4332
    %5959 = vmatprep.subr.bf16.mxu0 0
    %5960 = vmatpush1.bf16.msra.mxu0 %v4331
    %5961 = vmatprep.subr.bf16.mxu0 0
    %5962 = vmatpush1.bf16.msra.mxu0 %v4330
    %5963 = vmatprep.subr.bf16.mxu0 0
    %5964 = vmatpush1.bf16.msra.mxu0 %v4329
    %5965 = vmatprep.subr.bf16.mxu0 0
    %5966 = vmatpush1.bf16.msra.mxu0 %v4328
    %5967 = vmatprep.subr.bf16.mxu0 0
    %5968 = vmatpush1.bf16.msra.mxu0 %v4327
    %5969 = vmatprep.subr.bf16.mxu0 0
    %5970 = vmatpush1.bf16.msra.mxu0 %v4326
    %5971 = vmatprep.subr.bf16.mxu0 0
    %5972 = vmatpush1.bf16.msra.mxu0 %v4325
    %5973 = vmatprep.subr.bf16.mxu0 0
    %5974 = vmatpush2.bf16.msra.mxu0 %v4340
    %5975 = vmatprep.subr.bf16.mxu0 0
    %5976 = vmatpush2.bf16.msra.mxu0 %v4339
    %5977 = vmatprep.subr.bf16.mxu0 0
    %5978 = vmatpush2.bf16.msra.mxu0 %v4338
    %5979 = vmatprep.subr.bf16.mxu0 0
    %5980 = vmatpush2.bf16.msra.mxu0 %v4337
    %5981 = vmatprep.subr.bf16.mxu0 0
    %5982 = vmatpush2.bf16.msra.mxu0 %v4336
    %5983 = vmatprep.subr.bf16.mxu0 0
    %5984 = vmatpush2.bf16.msra.mxu0 %v4335
    %5985 = vmatprep.subr.bf16.mxu0 0
    %5986 = vmatpush2.bf16.msra.mxu0 %v4334
    %5987 = vmatprep.subr.bf16.mxu0 0
    %5988 = vmatpush2.bf16.msra.mxu0 %v4333
    %5989 = vmatprep.mubr.bf16.mxu0 %v513
    %5990 = vmatmul.mubr.bf16.gmra.mxu0 %v512
    %v5991 = vpop.f32.mrf.mxu0
    %v5992 = vadd.f32 %v5952, %v5991
    %v5993 = vpop.f32.mrf.mxu0
    %v5994 = vpop.f32.mrf.mxu0
    %v5995 = vpop.f32.mrf.mxu0
    %5996 = vdwg.mxu0
    %5997 = vmatprep.subr.bf16.mxu0 0
    %5998 = vmatpush1.bf16.msra.mxu0 %v4348
    %5999 = vmatprep.subr.bf16.mxu0 0
    %6000 = vmatpush1.bf16.msra.mxu0 %v4347
    %6001 = vmatprep.subr.bf16.mxu0 0
    %6002 = vmatpush1.bf16.msra.mxu0 %v4346
    %6003 = vmatprep.subr.bf16.mxu0 0
    %6004 = vmatpush1.bf16.msra.mxu0 %v4345
    %6005 = vmatprep.subr.bf16.mxu0 0
    %6006 = vmatpush1.bf16.msra.mxu0 %v4344
    %6007 = vmatprep.subr.bf16.mxu0 0
    %6008 = vmatpush1.bf16.msra.mxu0 %v4343
    %6009 = vmatprep.subr.bf16.mxu0 0
    %6010 = vmatpush1.bf16.msra.mxu0 %v4342
    %6011 = vmatprep.subr.bf16.mxu0 0
    %6012 = vmatpush1.bf16.msra.mxu0 %v4341
    %6013 = vmatprep.subr.bf16.mxu0 0
    %6014 = vmatpush2.bf16.msra.mxu0 %v4356
    %6015 = vmatprep.subr.bf16.mxu0 0
    %6016 = vmatpush2.bf16.msra.mxu0 %v4355
    %6017 = vmatprep.subr.bf16.mxu0 0
    %6018 = vmatpush2.bf16.msra.mxu0 %v4354
    %6019 = vmatprep.subr.bf16.mxu0 0
    %6020 = vmatpush2.bf16.msra.mxu0 %v4353
    %6021 = vmatprep.subr.bf16.mxu0 0
    %6022 = vmatpush2.bf16.msra.mxu0 %v4352
    %6023 = vmatprep.subr.bf16.mxu0 0
    %6024 = vmatpush2.bf16.msra.mxu0 %v4351
    %6025 = vmatprep.subr.bf16.mxu0 0
    %6026 = vmatpush2.bf16.msra.mxu0 %v4350
    %6027 = vmatprep.subr.bf16.mxu0 0
    %6028 = vmatpush2.bf16.msra.mxu0 %v4349
    %6029 = vmatprep.mubr.bf16.mxu0 %v515
    %6030 = vmatmul.mubr.bf16.gmra.mxu0 %v514
    %v6031 = vpop.f32.mrf.mxu0
    %v6032 = vadd.f32 %v5992, %v6031
    %v6033 = vpop.f32.mrf.mxu0
    %v6034 = vpop.f32.mrf.mxu0
    %v6035 = vpop.f32.mrf.mxu0
    %6036 = vdwg.mxu0
    %6037 = vmatprep.subr.bf16.mxu0 0
    %6038 = vmatpush1.bf16.msra.mxu0 %v4364
    %6039 = vmatprep.subr.bf16.mxu0 0
    %6040 = vmatpush1.bf16.msra.mxu0 %v4363
    %6041 = vmatprep.subr.bf16.mxu0 0
    %6042 = vmatpush1.bf16.msra.mxu0 %v4362
    %6043 = vmatprep.subr.bf16.mxu0 0
    %6044 = vmatpush1.bf16.msra.mxu0 %v4361
    %6045 = vmatprep.subr.bf16.mxu0 0
    %6046 = vmatpush1.bf16.msra.mxu0 %v4360
    %6047 = vmatprep.subr.bf16.mxu0 0
    %6048 = vmatpush1.bf16.msra.mxu0 %v4359
    %6049 = vmatprep.subr.bf16.mxu0 0
    %6050 = vmatpush1.bf16.msra.mxu0 %v4358
    %6051 = vmatprep.subr.bf16.mxu0 0
    %6052 = vmatpush1.bf16.msra.mxu0 %v4357
    %6053 = vmatprep.subr.bf16.mxu0 0
    %6054 = vmatpush2.bf16.msra.mxu0 %v4372
    %6055 = vmatprep.subr.bf16.mxu0 0
    %6056 = vmatpush2.bf16.msra.mxu0 %v4371
    %6057 = vmatprep.subr.bf16.mxu0 0
    %6058 = vmatpush2.bf16.msra.mxu0 %v4370
    %6059 = vmatprep.subr.bf16.mxu0 0
    %6060 = vmatpush2.bf16.msra.mxu0 %v4369
    %6061 = vmatprep.subr.bf16.mxu0 0
    %6062 = vmatpush2.bf16.msra.mxu0 %v4368
    %6063 = vmatprep.subr.bf16.mxu0 0
    %6064 = vmatpush2.bf16.msra.mxu0 %v4367
    %6065 = vmatprep.subr.bf16.mxu0 0
    %6066 = vmatpush2.bf16.msra.mxu0 %v4366
    %6067 = vmatprep.subr.bf16.mxu0 0
    %6068 = vmatpush2.bf16.msra.mxu0 %v4365
    %6069 = vmatprep.mubr.bf16.mxu0 %v517
    %6070 = vmatmul.mubr.bf16.gmra.mxu0 %v516
    %v6071 = vpop.f32.mrf.mxu0
    %v6072 = vadd.f32 %v6032, %v6071
    %v6073 = vpop.f32.mrf.mxu0
    %v6074 = vpop.f32.mrf.mxu0
    %v6075 = vpop.f32.mrf.mxu0
    %6076 = vdwg.mxu0
    %6077 = vmatprep.subr.bf16.mxu0 0
    %6078 = vmatpush1.bf16.msra.mxu0 %v4380
    %6079 = vmatprep.subr.bf16.mxu0 0
    %6080 = vmatpush1.bf16.msra.mxu0 %v4379
    %6081 = vmatprep.subr.bf16.mxu0 0
    %6082 = vmatpush1.bf16.msra.mxu0 %v4378
    %6083 = vmatprep.subr.bf16.mxu0 0
    %6084 = vmatpush1.bf16.msra.mxu0 %v4377
    %6085 = vmatprep.subr.bf16.mxu0 0
    %6086 = vmatpush1.bf16.msra.mxu0 %v4376
    %6087 = vmatprep.subr.bf16.mxu0 0
    %6088 = vmatpush1.bf16.msra.mxu0 %v4375
    %6089 = vmatprep.subr.bf16.mxu0 0
    %6090 = vmatpush1.bf16.msra.mxu0 %v4374
    %6091 = vmatprep.subr.bf16.mxu0 0
    %6092 = vmatpush1.bf16.msra.mxu0 %v4373
    %6093 = vmatprep.subr.bf16.mxu0 0
    %6094 = vmatpush2.bf16.msra.mxu0 %v4388
    %6095 = vmatprep.subr.bf16.mxu0 0
    %6096 = vmatpush2.bf16.msra.mxu0 %v4387
    %6097 = vmatprep.subr.bf16.mxu0 0
    %6098 = vmatpush2.bf16.msra.mxu0 %v4386
    %6099 = vmatprep.subr.bf16.mxu0 0
    %6100 = vmatpush2.bf16.msra.mxu0 %v4385
    %6101 = vmatprep.subr.bf16.mxu0 0
    %6102 = vmatpush2.bf16.msra.mxu0 %v4384
    %6103 = vmatprep.subr.bf16.mxu0 0
    %6104 = vmatpush2.bf16.msra.mxu0 %v4383
    %6105 = vmatprep.subr.bf16.mxu0 0
    %6106 = vmatpush2.bf16.msra.mxu0 %v4382
    %6107 = vmatprep.subr.bf16.mxu0 0
    %6108 = vmatpush2.bf16.msra.mxu0 %v4381
    %6109 = vmatprep.mubr.bf16.mxu0 %v519
    %6110 = vmatmul.mubr.bf16.gmra.mxu0 %v518
    %v6111 = vpop.f32.mrf.mxu0
    %v6112 = vadd.f32 %v6072, %v6111
    %v6113 = vpop.f32.mrf.mxu0
    %v6114 = vpop.f32.mrf.mxu0
    %v6115 = vpop.f32.mrf.mxu0
    %6116 = vdwg.mxu0
    %6117 = vmatprep.subr.bf16.mxu0 0
    %6118 = vmatpush1.bf16.msra.mxu0 %v4396
    %6119 = vmatprep.subr.bf16.mxu0 0
    %6120 = vmatpush1.bf16.msra.mxu0 %v4395
    %6121 = vmatprep.subr.bf16.mxu0 0
    %6122 = vmatpush1.bf16.msra.mxu0 %v4394
    %6123 = vmatprep.subr.bf16.mxu0 0
    %6124 = vmatpush1.bf16.msra.mxu0 %v4393
    %6125 = vmatprep.subr.bf16.mxu0 0
    %6126 = vmatpush1.bf16.msra.mxu0 %v4392
    %6127 = vmatprep.subr.bf16.mxu0 0
    %6128 = vmatpush1.bf16.msra.mxu0 %v4391
    %6129 = vmatprep.subr.bf16.mxu0 0
    %6130 = vmatpush1.bf16.msra.mxu0 %v4390
    %6131 = vmatprep.subr.bf16.mxu0 0
    %6132 = vmatpush1.bf16.msra.mxu0 %v4389
    %6133 = vmatprep.subr.bf16.mxu0 0
    %6134 = vmatpush2.bf16.msra.mxu0 %v4404
    %6135 = vmatprep.subr.bf16.mxu0 0
    %6136 = vmatpush2.bf16.msra.mxu0 %v4403
    %6137 = vmatprep.subr.bf16.mxu0 0
    %6138 = vmatpush2.bf16.msra.mxu0 %v4402
    %6139 = vmatprep.subr.bf16.mxu0 0
    %6140 = vmatpush2.bf16.msra.mxu0 %v4401
    %6141 = vmatprep.subr.bf16.mxu0 0
    %6142 = vmatpush2.bf16.msra.mxu0 %v4400
    %6143 = vmatprep.subr.bf16.mxu0 0
    %6144 = vmatpush2.bf16.msra.mxu0 %v4399
    %6145 = vmatprep.subr.bf16.mxu0 0
    %6146 = vmatpush2.bf16.msra.mxu0 %v4398
    %6147 = vmatprep.subr.bf16.mxu0 0
    %6148 = vmatpush2.bf16.msra.mxu0 %v4397
    %6149 = vmatprep.mubr.bf16.mxu0 %v521
    %6150 = vmatmul.mubr.bf16.gmra.mxu0 %v520
    %v6151 = vpop.f32.mrf.mxu0
    %v6152 = vadd.f32 %v6112, %v6151
    %v6153 = vpop.f32.mrf.mxu0
    %v6154 = vpop.f32.mrf.mxu0
    %v6155 = vpop.f32.mrf.mxu0
    %6156 = vdwg.mxu0
    %6157 = vmatprep.subr.bf16.mxu0 0
    %6158 = vmatpush1.bf16.msra.mxu0 %v4412
    %6159 = vmatprep.subr.bf16.mxu0 0
    %6160 = vmatpush1.bf16.msra.mxu0 %v4411
    %6161 = vmatprep.subr.bf16.mxu0 0
    %6162 = vmatpush1.bf16.msra.mxu0 %v4410
    %6163 = vmatprep.subr.bf16.mxu0 0
    %6164 = vmatpush1.bf16.msra.mxu0 %v4409
    %6165 = vmatprep.subr.bf16.mxu0 0
    %6166 = vmatpush1.bf16.msra.mxu0 %v4408
    %6167 = vmatprep.subr.bf16.mxu0 0
    %6168 = vmatpush1.bf16.msra.mxu0 %v4407
    %6169 = vmatprep.subr.bf16.mxu0 0
    %6170 = vmatpush1.bf16.msra.mxu0 %v4406
    %6171 = vmatprep.subr.bf16.mxu0 0
    %6172 = vmatpush1.bf16.msra.mxu0 %v4405
    %6173 = vmatprep.subr.bf16.mxu0 0
    %6174 = vmatpush2.bf16.msra.mxu0 %v4420
    %6175 = vmatprep.subr.bf16.mxu0 0
    %6176 = vmatpush2.bf16.msra.mxu0 %v4419
    %6177 = vmatprep.subr.bf16.mxu0 0
    %6178 = vmatpush2.bf16.msra.mxu0 %v4418
    %6179 = vmatprep.subr.bf16.mxu0 0
    %6180 = vmatpush2.bf16.msra.mxu0 %v4417
    %6181 = vmatprep.subr.bf16.mxu0 0
    %6182 = vmatpush2.bf16.msra.mxu0 %v4416
    %6183 = vmatprep.subr.bf16.mxu0 0
    %6184 = vmatpush2.bf16.msra.mxu0 %v4415
    %6185 = vmatprep.subr.bf16.mxu0 0
    %6186 = vmatpush2.bf16.msra.mxu0 %v4414
    %6187 = vmatprep.subr.bf16.mxu0 0
    %6188 = vmatpush2.bf16.msra.mxu0 %v4413
    %6189 = vmatprep.mubr.bf16.mxu0 %v523
    %6190 = vmatmul.mubr.bf16.gmra.mxu0 %v522
    %v6191 = vpop.f32.mrf.mxu0
    %v6192 = vadd.f32 %v6152, %v6191
    %v6193 = vpop.f32.mrf.mxu0
    %v6194 = vpop.f32.mrf.mxu0
    %v6195 = vpop.f32.mrf.mxu0
    %6196 = vdwg.mxu0
    %6197 = vmatprep.subr.bf16.mxu0 0
    %6198 = vmatpush1.bf16.msra.mxu0 %v4428
    %6199 = vmatprep.subr.bf16.mxu0 0
    %6200 = vmatpush1.bf16.msra.mxu0 %v4427
    %6201 = vmatprep.subr.bf16.mxu0 0
    %6202 = vmatpush1.bf16.msra.mxu0 %v4426
    %6203 = vmatprep.subr.bf16.mxu0 0
    %6204 = vmatpush1.bf16.msra.mxu0 %v4425
    %6205 = vmatprep.subr.bf16.mxu0 0
    %6206 = vmatpush1.bf16.msra.mxu0 %v4424
    %6207 = vmatprep.subr.bf16.mxu0 0
    %6208 = vmatpush1.bf16.msra.mxu0 %v4423
    %6209 = vmatprep.subr.bf16.mxu0 0
    %6210 = vmatpush1.bf16.msra.mxu0 %v4422
    %6211 = vmatprep.subr.bf16.mxu0 0
    %6212 = vmatpush1.bf16.msra.mxu0 %v4421
    %6213 = vmatprep.subr.bf16.mxu0 0
    %6214 = vmatpush2.bf16.msra.mxu0 %v4436
    %6215 = vmatprep.subr.bf16.mxu0 0
    %6216 = vmatpush2.bf16.msra.mxu0 %v4435
    %6217 = vmatprep.subr.bf16.mxu0 0
    %6218 = vmatpush2.bf16.msra.mxu0 %v4434
    %6219 = vmatprep.subr.bf16.mxu0 0
    %6220 = vmatpush2.bf16.msra.mxu0 %v4433
    %6221 = vmatprep.subr.bf16.mxu0 0
    %6222 = vmatpush2.bf16.msra.mxu0 %v4432
    %6223 = vmatprep.subr.bf16.mxu0 0
    %6224 = vmatpush2.bf16.msra.mxu0 %v4431
    %6225 = vmatprep.subr.bf16.mxu0 0
    %6226 = vmatpush2.bf16.msra.mxu0 %v4430
    %6227 = vmatprep.subr.bf16.mxu0 0
    %6228 = vmatpush2.bf16.msra.mxu0 %v4429
    %6229 = vmatprep.mubr.bf16.mxu0 %v525
    %6230 = vmatmul.mubr.bf16.gmra.mxu0 %v524
    %v6231 = vpop.f32.mrf.mxu0
    %v6232 = vadd.f32 %v6192, %v6231
    %v6233 = vpop.f32.mrf.mxu0
    %v6234 = vpop.f32.mrf.mxu0
    %v6235 = vpop.f32.mrf.mxu0
    %6236 = vdwg.mxu0
    %6237 = vmatprep.subr.bf16.mxu0 0
    %6238 = vmatpush1.bf16.msra.mxu0 %v4444
    %6239 = vmatprep.subr.bf16.mxu0 0
    %6240 = vmatpush1.bf16.msra.mxu0 %v4443
    %6241 = vmatprep.subr.bf16.mxu0 0
    %6242 = vmatpush1.bf16.msra.mxu0 %v4442
    %6243 = vmatprep.subr.bf16.mxu0 0
    %6244 = vmatpush1.bf16.msra.mxu0 %v4441
    %6245 = vmatprep.subr.bf16.mxu0 0
    %6246 = vmatpush1.bf16.msra.mxu0 %v4440
    %6247 = vmatprep.subr.bf16.mxu0 0
    %6248 = vmatpush1.bf16.msra.mxu0 %v4439
    %6249 = vmatprep.subr.bf16.mxu0 0
    %6250 = vmatpush1.bf16.msra.mxu0 %v4438
    %6251 = vmatprep.subr.bf16.mxu0 0
    %6252 = vmatpush1.bf16.msra.mxu0 %v4437
    %6253 = vmatprep.subr.bf16.mxu0 0
    %6254 = vmatpush2.bf16.msra.mxu0 %v4452
    %6255 = vmatprep.subr.bf16.mxu0 0
    %6256 = vmatpush2.bf16.msra.mxu0 %v4451
    %6257 = vmatprep.subr.bf16.mxu0 0
    %6258 = vmatpush2.bf16.msra.mxu0 %v4450
    %6259 = vmatprep.subr.bf16.mxu0 0
    %6260 = vmatpush2.bf16.msra.mxu0 %v4449
    %6261 = vmatprep.subr.bf16.mxu0 0
    %6262 = vmatpush2.bf16.msra.mxu0 %v4448
    %6263 = vmatprep.subr.bf16.mxu0 0
    %6264 = vmatpush2.bf16.msra.mxu0 %v4447
    %6265 = vmatprep.subr.bf16.mxu0 0
    %6266 = vmatpush2.bf16.msra.mxu0 %v4446
    %6267 = vmatprep.subr.bf16.mxu0 0
    %6268 = vmatpush2.bf16.msra.mxu0 %v4445
    %6269 = vmatprep.mubr.bf16.mxu0 %v527
    %6270 = vmatmul.mubr.bf16.gmra.mxu0 %v526
    %v6271 = vpop.f32.mrf.mxu0
    %v6272 = vadd.f32 %v6232, %v6271
    %v6273 = vpop.f32.mrf.mxu0
    %v6274 = vpop.f32.mrf.mxu0
    %v6275 = vpop.f32.mrf.mxu0
    %6276 = vdwg.mxu0
    %6277 = vmatprep.subr.bf16.mxu0 0
    %6278 = vmatpush1.bf16.msra.mxu0 %v4460
    %6279 = vmatprep.subr.bf16.mxu0 0
    %6280 = vmatpush1.bf16.msra.mxu0 %v4459
    %6281 = vmatprep.subr.bf16.mxu0 0
    %6282 = vmatpush1.bf16.msra.mxu0 %v4458
    %6283 = vmatprep.subr.bf16.mxu0 0
    %6284 = vmatpush1.bf16.msra.mxu0 %v4457
    %6285 = vmatprep.subr.bf16.mxu0 0
    %6286 = vmatpush1.bf16.msra.mxu0 %v4456
    %6287 = vmatprep.subr.bf16.mxu0 0
    %6288 = vmatpush1.bf16.msra.mxu0 %v4455
    %6289 = vmatprep.subr.bf16.mxu0 0
    %6290 = vmatpush1.bf16.msra.mxu0 %v4454
    %6291 = vmatprep.subr.bf16.mxu0 0
    %6292 = vmatpush1.bf16.msra.mxu0 %v4453
    %6293 = vmatprep.subr.bf16.mxu0 0
    %6294 = vmatpush2.bf16.msra.mxu0 %v4468
    %6295 = vmatprep.subr.bf16.mxu0 0
    %6296 = vmatpush2.bf16.msra.mxu0 %v4467
    %6297 = vmatprep.subr.bf16.mxu0 0
    %6298 = vmatpush2.bf16.msra.mxu0 %v4466
    %6299 = vmatprep.subr.bf16.mxu0 0
    %6300 = vmatpush2.bf16.msra.mxu0 %v4465
    %6301 = vmatprep.subr.bf16.mxu0 0
    %6302 = vmatpush2.bf16.msra.mxu0 %v4464
    %6303 = vmatprep.subr.bf16.mxu0 0
    %6304 = vmatpush2.bf16.msra.mxu0 %v4463
    %6305 = vmatprep.subr.bf16.mxu0 0
    %6306 = vmatpush2.bf16.msra.mxu0 %v4462
    %6307 = vmatprep.subr.bf16.mxu0 0
    %6308 = vmatpush2.bf16.msra.mxu0 %v4461
    %6309 = vmatprep.mubr.bf16.mxu0 %v529
    %6310 = vmatmul.mubr.bf16.gmra.mxu0 %v528
    %v6311 = vpop.f32.mrf.mxu0
    %v6312 = vadd.f32 %v6272, %v6311
    %v6313 = vpop.f32.mrf.mxu0
    %v6314 = vpop.f32.mrf.mxu0
    %v6315 = vpop.f32.mrf.mxu0
    %6316 = vdwg.mxu0
    %6317 = vmatprep.subr.bf16.mxu0 0
    %6318 = vmatpush1.bf16.msra.mxu0 %v4476
    %6319 = vmatprep.subr.bf16.mxu0 0
    %6320 = vmatpush1.bf16.msra.mxu0 %v4475
    %6321 = vmatprep.subr.bf16.mxu0 0
    %6322 = vmatpush1.bf16.msra.mxu0 %v4474
    %6323 = vmatprep.subr.bf16.mxu0 0
    %6324 = vmatpush1.bf16.msra.mxu0 %v4473
    %6325 = vmatprep.subr.bf16.mxu0 0
    %6326 = vmatpush1.bf16.msra.mxu0 %v4472
    %6327 = vmatprep.subr.bf16.mxu0 0
    %6328 = vmatpush1.bf16.msra.mxu0 %v4471
    %6329 = vmatprep.subr.bf16.mxu0 0
    %6330 = vmatpush1.bf16.msra.mxu0 %v4470
    %6331 = vmatprep.subr.bf16.mxu0 0
    %6332 = vmatpush1.bf16.msra.mxu0 %v4469
    %6333 = vmatprep.subr.bf16.mxu0 0
    %6334 = vmatpush2.bf16.msra.mxu0 %v4484
    %6335 = vmatprep.subr.bf16.mxu0 0
    %6336 = vmatpush2.bf16.msra.mxu0 %v4483
    %6337 = vmatprep.subr.bf16.mxu0 0
    %6338 = vmatpush2.bf16.msra.mxu0 %v4482
    %6339 = vmatprep.subr.bf16.mxu0 0
    %6340 = vmatpush2.bf16.msra.mxu0 %v4481
    %6341 = vmatprep.subr.bf16.mxu0 0
    %6342 = vmatpush2.bf16.msra.mxu0 %v4480
    %6343 = vmatprep.subr.bf16.mxu0 0
    %6344 = vmatpush2.bf16.msra.mxu0 %v4479
    %6345 = vmatprep.subr.bf16.mxu0 0
    %6346 = vmatpush2.bf16.msra.mxu0 %v4478
    %6347 = vmatprep.subr.bf16.mxu0 0
    %6348 = vmatpush2.bf16.msra.mxu0 %v4477
    %6349 = vmatprep.mubr.bf16.mxu0 %v531
    %6350 = vmatmul.mubr.bf16.gmra.mxu0 %v530
    %v6351 = vpop.f32.mrf.mxu0
    %v6352 = vadd.f32 %v6312, %v6351
    %v6353 = vpop.f32.mrf.mxu0
    %v6354 = vpop.f32.mrf.mxu0
    %v6355 = vpop.f32.mrf.mxu0
    %6356 = vdwg.mxu0
    %6357 = vmatprep.subr.bf16.mxu0 0
    %6358 = vmatpush1.bf16.msra.mxu0 %v4492
    %6359 = vmatprep.subr.bf16.mxu0 0
    %6360 = vmatpush1.bf16.msra.mxu0 %v4491
    %6361 = vmatprep.subr.bf16.mxu0 0
    %6362 = vmatpush1.bf16.msra.mxu0 %v4490
    %6363 = vmatprep.subr.bf16.mxu0 0
    %6364 = vmatpush1.bf16.msra.mxu0 %v4489
    %6365 = vmatprep.subr.bf16.mxu0 0
    %6366 = vmatpush1.bf16.msra.mxu0 %v4488
    %6367 = vmatprep.subr.bf16.mxu0 0
    %6368 = vmatpush1.bf16.msra.mxu0 %v4487
    %6369 = vmatprep.subr.bf16.mxu0 0
    %6370 = vmatpush1.bf16.msra.mxu0 %v4486
    %6371 = vmatprep.subr.bf16.mxu0 0
    %6372 = vmatpush1.bf16.msra.mxu0 %v4485
    %6373 = vmatprep.subr.bf16.mxu0 0
    %6374 = vmatpush2.bf16.msra.mxu0 %v4500
    %6375 = vmatprep.subr.bf16.mxu0 0
    %6376 = vmatpush2.bf16.msra.mxu0 %v4499
    %6377 = vmatprep.subr.bf16.mxu0 0
    %6378 = vmatpush2.bf16.msra.mxu0 %v4498
    %6379 = vmatprep.subr.bf16.mxu0 0
    %6380 = vmatpush2.bf16.msra.mxu0 %v4497
    %6381 = vmatprep.subr.bf16.mxu0 0
    %6382 = vmatpush2.bf16.msra.mxu0 %v4496
    %6383 = vmatprep.subr.bf16.mxu0 0
    %6384 = vmatpush2.bf16.msra.mxu0 %v4495
    %6385 = vmatprep.subr.bf16.mxu0 0
    %6386 = vmatpush2.bf16.msra.mxu0 %v4494
    %6387 = vmatprep.subr.bf16.mxu0 0
    %6388 = vmatpush2.bf16.msra.mxu0 %v4493
    %6389 = vmatprep.mubr.bf16.mxu0 %v533
    %6390 = vmatmul.mubr.bf16.gmra.mxu0 %v532
    %v6391 = vpop.f32.mrf.mxu0
    %v6392 = vadd.f32 %v6352, %v6391
    %v6393 = vpop.f32.mrf.mxu0
    %v6394 = vpop.f32.mrf.mxu0
    %v6395 = vpop.f32.mrf.mxu0
    %6396 = vdwg.mxu0
    %6397 = vmatprep.subr.bf16.mxu0 0
    %6398 = vmatpush1.bf16.msra.mxu0 %v4508
    %6399 = vmatprep.subr.bf16.mxu0 0
    %6400 = vmatpush1.bf16.msra.mxu0 %v4507
    %6401 = vmatprep.subr.bf16.mxu0 0
    %6402 = vmatpush1.bf16.msra.mxu0 %v4506
    %6403 = vmatprep.subr.bf16.mxu0 0
    %6404 = vmatpush1.bf16.msra.mxu0 %v4505
    %6405 = vmatprep.subr.bf16.mxu0 0
    %6406 = vmatpush1.bf16.msra.mxu0 %v4504
    %6407 = vmatprep.subr.bf16.mxu0 0
    %6408 = vmatpush1.bf16.msra.mxu0 %v4503
    %6409 = vmatprep.subr.bf16.mxu0 0
    %6410 = vmatpush1.bf16.msra.mxu0 %v4502
    %6411 = vmatprep.subr.bf16.mxu0 0
    %6412 = vmatpush1.bf16.msra.mxu0 %v4501
    %6413 = vmatprep.subr.bf16.mxu0 0
    %6414 = vmatpush2.bf16.msra.mxu0 %v4516
    %6415 = vmatprep.subr.bf16.mxu0 0
    %6416 = vmatpush2.bf16.msra.mxu0 %v4515
    %6417 = vmatprep.subr.bf16.mxu0 0
    %6418 = vmatpush2.bf16.msra.mxu0 %v4514
    %6419 = vmatprep.subr.bf16.mxu0 0
    %6420 = vmatpush2.bf16.msra.mxu0 %v4513
    %6421 = vmatprep.subr.bf16.mxu0 0
    %6422 = vmatpush2.bf16.msra.mxu0 %v4512
    %6423 = vmatprep.subr.bf16.mxu0 0
    %6424 = vmatpush2.bf16.msra.mxu0 %v4511
    %6425 = vmatprep.subr.bf16.mxu0 0
    %6426 = vmatpush2.bf16.msra.mxu0 %v4510
    %6427 = vmatprep.subr.bf16.mxu0 0
    %6428 = vmatpush2.bf16.msra.mxu0 %v4509
    %6429 = vmatprep.mubr.bf16.mxu0 %v535
    %6430 = vmatmul.mubr.bf16.gmra.mxu0 %v534
    %v6431 = vpop.f32.mrf.mxu0
    %v6432 = vadd.f32 %v6392, %v6431
    %v6433 = vpop.f32.mrf.mxu0
    %v6434 = vpop.f32.mrf.mxu0
    %v6435 = vpop.f32.mrf.mxu0
    %6436 = vdwg.mxu0
    %6437 = vmatprep.subr.bf16.mxu0 0
    %6438 = vmatpush1.bf16.msra.mxu0 %v4524
    %6439 = vmatprep.subr.bf16.mxu0 0
    %6440 = vmatpush1.bf16.msra.mxu0 %v4523
    %6441 = vmatprep.subr.bf16.mxu0 0
    %6442 = vmatpush1.bf16.msra.mxu0 %v4522
    %6443 = vmatprep.subr.bf16.mxu0 0
    %6444 = vmatpush1.bf16.msra.mxu0 %v4521
    %6445 = vmatprep.subr.bf16.mxu0 0
    %6446 = vmatpush1.bf16.msra.mxu0 %v4520
    %6447 = vmatprep.subr.bf16.mxu0 0
    %6448 = vmatpush1.bf16.msra.mxu0 %v4519
    %6449 = vmatprep.subr.bf16.mxu0 0
    %6450 = vmatpush1.bf16.msra.mxu0 %v4518
    %6451 = vmatprep.subr.bf16.mxu0 0
    %6452 = vmatpush1.bf16.msra.mxu0 %v4517
    %6453 = vmatprep.subr.bf16.mxu0 0
    %6454 = vmatpush2.bf16.msra.mxu0 %v4532
    %6455 = vmatprep.subr.bf16.mxu0 0
    %6456 = vmatpush2.bf16.msra.mxu0 %v4531
    %6457 = vmatprep.subr.bf16.mxu0 0
    %6458 = vmatpush2.bf16.msra.mxu0 %v4530
    %6459 = vmatprep.subr.bf16.mxu0 0
    %6460 = vmatpush2.bf16.msra.mxu0 %v4529
    %6461 = vmatprep.subr.bf16.mxu0 0
    %6462 = vmatpush2.bf16.msra.mxu0 %v4528
    %6463 = vmatprep.subr.bf16.mxu0 0
    %6464 = vmatpush2.bf16.msra.mxu0 %v4527
    %6465 = vmatprep.subr.bf16.mxu0 0
    %6466 = vmatpush2.bf16.msra.mxu0 %v4526
    %6467 = vmatprep.subr.bf16.mxu0 0
    %6468 = vmatpush2.bf16.msra.mxu0 %v4525
    %6469 = vmatprep.mubr.bf16.mxu0 %v537
    %6470 = vmatmul.mubr.bf16.gmra.mxu0 %v536
    %v6471 = vpop.f32.mrf.mxu0
    %v6472 = vadd.f32 %v6432, %v6471
    %v6473 = vpop.f32.mrf.mxu0
    %v6474 = vpop.f32.mrf.mxu0
    %v6475 = vpop.f32.mrf.mxu0
    %6476 = vdwg.mxu0
    %6477 = vmatprep.subr.bf16.mxu0 0
    %6478 = vmatpush1.bf16.msra.mxu0 %v4540
    %6479 = vmatprep.subr.bf16.mxu0 0
    %6480 = vmatpush1.bf16.msra.mxu0 %v4539
    %6481 = vmatprep.subr.bf16.mxu0 0
    %6482 = vmatpush1.bf16.msra.mxu0 %v4538
    %6483 = vmatprep.subr.bf16.mxu0 0
    %6484 = vmatpush1.bf16.msra.mxu0 %v4537
    %6485 = vmatprep.subr.bf16.mxu0 0
    %6486 = vmatpush1.bf16.msra.mxu0 %v4536
    %6487 = vmatprep.subr.bf16.mxu0 0
    %6488 = vmatpush1.bf16.msra.mxu0 %v4535
    %6489 = vmatprep.subr.bf16.mxu0 0
    %6490 = vmatpush1.bf16.msra.mxu0 %v4534
    %6491 = vmatprep.subr.bf16.mxu0 0
    %6492 = vmatpush1.bf16.msra.mxu0 %v4533
    %6493 = vmatprep.subr.bf16.mxu0 0
    %6494 = vmatpush2.bf16.msra.mxu0 %v4548
    %6495 = vmatprep.subr.bf16.mxu0 0
    %6496 = vmatpush2.bf16.msra.mxu0 %v4547
    %6497 = vmatprep.subr.bf16.mxu0 0
    %6498 = vmatpush2.bf16.msra.mxu0 %v4546
    %6499 = vmatprep.subr.bf16.mxu0 0
    %6500 = vmatpush2.bf16.msra.mxu0 %v4545
    %6501 = vmatprep.subr.bf16.mxu0 0
    %6502 = vmatpush2.bf16.msra.mxu0 %v4544
    %6503 = vmatprep.subr.bf16.mxu0 0
    %6504 = vmatpush2.bf16.msra.mxu0 %v4543
    %6505 = vmatprep.subr.bf16.mxu0 0
    %6506 = vmatpush2.bf16.msra.mxu0 %v4542
    %6507 = vmatprep.subr.bf16.mxu0 0
    %6508 = vmatpush2.bf16.msra.mxu0 %v4541
    %6509 = vmatprep.mubr.bf16.mxu0 %v539
    %6510 = vmatmul.mubr.bf16.gmra.mxu0 %v538
    %v6511 = vpop.f32.mrf.mxu0
    %v6512 = vadd.f32 %v6472, %v6511
    %v6513 = vpop.f32.mrf.mxu0
    %v6514 = vpop.f32.mrf.mxu0
    %v6515 = vpop.f32.mrf.mxu0
    %6516 = vdwg.mxu0
    %6517 = vmatprep.subr.bf16.mxu0 0
    %6518 = vmatpush1.bf16.msra.mxu0 %v4556
    %6519 = vmatprep.subr.bf16.mxu0 0
    %6520 = vmatpush1.bf16.msra.mxu0 %v4555
    %6521 = vmatprep.subr.bf16.mxu0 0
    %6522 = vmatpush1.bf16.msra.mxu0 %v4554
    %6523 = vmatprep.subr.bf16.mxu0 0
    %6524 = vmatpush1.bf16.msra.mxu0 %v4553
    %6525 = vmatprep.subr.bf16.mxu0 0
    %6526 = vmatpush1.bf16.msra.mxu0 %v4552
    %6527 = vmatprep.subr.bf16.mxu0 0
    %6528 = vmatpush1.bf16.msra.mxu0 %v4551
    %6529 = vmatprep.subr.bf16.mxu0 0
    %6530 = vmatpush1.bf16.msra.mxu0 %v4550
    %6531 = vmatprep.subr.bf16.mxu0 0
    %6532 = vmatpush1.bf16.msra.mxu0 %v4549
    %6533 = vmatprep.subr.bf16.mxu0 0
    %6534 = vmatpush2.bf16.msra.mxu0 %v4564
    %6535 = vmatprep.subr.bf16.mxu0 0
    %6536 = vmatpush2.bf16.msra.mxu0 %v4563
    %6537 = vmatprep.subr.bf16.mxu0 0
    %6538 = vmatpush2.bf16.msra.mxu0 %v4562
    %6539 = vmatprep.subr.bf16.mxu0 0
    %6540 = vmatpush2.bf16.msra.mxu0 %v4561
    %6541 = vmatprep.subr.bf16.mxu0 0
    %6542 = vmatpush2.bf16.msra.mxu0 %v4560
    %6543 = vmatprep.subr.bf16.mxu0 0
    %6544 = vmatpush2.bf16.msra.mxu0 %v4559
    %6545 = vmatprep.subr.bf16.mxu0 0
    %6546 = vmatpush2.bf16.msra.mxu0 %v4558
    %6547 = vmatprep.subr.bf16.mxu0 0
    %6548 = vmatpush2.bf16.msra.mxu0 %v4557
    %6549 = vmatprep.mubr.bf16.mxu0 %v541
    %6550 = vmatmul.mubr.bf16.gmra.mxu0 %v540
    %v6551 = vpop.f32.mrf.mxu0
    %v6552 = vadd.f32 %v6512, %v6551
    %v6553 = vpop.f32.mrf.mxu0
    %v6554 = vpop.f32.mrf.mxu0
    %v6555 = vpop.f32.mrf.mxu0
    %6556 = vdwg.mxu0
    %6557 = vmatprep.subr.bf16.mxu0 0
    %6558 = vmatpush1.bf16.msra.mxu0 %v4572
    %6559 = vmatprep.subr.bf16.mxu0 0
    %6560 = vmatpush1.bf16.msra.mxu0 %v4571
    %6561 = vmatprep.subr.bf16.mxu0 0
    %6562 = vmatpush1.bf16.msra.mxu0 %v4570
    %6563 = vmatprep.subr.bf16.mxu0 0
    %6564 = vmatpush1.bf16.msra.mxu0 %v4569
    %6565 = vmatprep.subr.bf16.mxu0 0
    %6566 = vmatpush1.bf16.msra.mxu0 %v4568
    %6567 = vmatprep.subr.bf16.mxu0 0
    %6568 = vmatpush1.bf16.msra.mxu0 %v4567
    %6569 = vmatprep.subr.bf16.mxu0 0
    %6570 = vmatpush1.bf16.msra.mxu0 %v4566
    %6571 = vmatprep.subr.bf16.mxu0 0
    %6572 = vmatpush1.bf16.msra.mxu0 %v4565
    %6573 = vmatprep.subr.bf16.mxu0 0
    %6574 = vmatpush2.bf16.msra.mxu0 %v4580
    %6575 = vmatprep.subr.bf16.mxu0 0
    %6576 = vmatpush2.bf16.msra.mxu0 %v4579
    %6577 = vmatprep.subr.bf16.mxu0 0
    %6578 = vmatpush2.bf16.msra.mxu0 %v4578
    %6579 = vmatprep.subr.bf16.mxu0 0
    %6580 = vmatpush2.bf16.msra.mxu0 %v4577
    %6581 = vmatprep.subr.bf16.mxu0 0
    %6582 = vmatpush2.bf16.msra.mxu0 %v4576
    %6583 = vmatprep.subr.bf16.mxu0 0
    %6584 = vmatpush2.bf16.msra.mxu0 %v4575
    %6585 = vmatprep.subr.bf16.mxu0 0
    %6586 = vmatpush2.bf16.msra.mxu0 %v4574
    %6587 = vmatprep.subr.bf16.mxu0 0
    %6588 = vmatpush2.bf16.msra.mxu0 %v4573
    %6589 = vmatprep.mubr.bf16.mxu0 %v543
    %6590 = vmatmul.mubr.bf16.gmra.mxu0 %v542
    %v6591 = vpop.f32.mrf.mxu0
    %v6592 = vadd.f32 %v6552, %v6591
    %v6593 = vpop.f32.mrf.mxu0
    %v6594 = vpop.f32.mrf.mxu0
    %v6595 = vpop.f32.mrf.mxu0
    %6596 = vdwg.mxu0
    %v6597 = vmax.f32 %v6592, 0.0
    %v6598 = vld [vmem:[#allocation5 + $0x1] sm:$0x1]
    %v6599 = vld [vmem:[#allocation5 + $0x2] sm:$0x1]
    %v6600 = vld [vmem:[#allocation5 + $0x3] sm:$0x1]
    %v6601 = vld [vmem:[#allocation7] sm:$0xff]
    %v6602 = vld [vmem:[#allocation7 + $0x8] sm:$0xff]
    %v6603 = vld [vmem:[#allocation7 + $0x10] sm:$0xff]
    %v6604 = vld [vmem:[#allocation7 + $0x18] sm:$0xff]
    %v6605 = vld [vmem:[#allocation7 + $0x20] sm:$0xff]
    %v6606 = vld [vmem:[#allocation7 + $0x28] sm:$0xff]
    %v6607 = vld [vmem:[#allocation7 + $0x30] sm:$0xff]
    %v6608 = vld [vmem:[#allocation7 + $0x38] sm:$0xff]
    %v6609 = vld [vmem:[#allocation7 + $0x40] sm:$0xff]
    %v6610 = vld [vmem:[#allocation7 + $0x48] sm:$0xff]
    %v6611 = vld [vmem:[#allocation7 + $0x50] sm:$0xff]
    %v6612 = vld [vmem:[#allocation7 + $0x58] sm:$0xff]
    %v6613 = vld [vmem:[#allocation7 + $0x60] sm:$0xff]
    %v6614 = vld [vmem:[#allocation7 + $0x68] sm:$0xff]
    %v6615 = vld [vmem:[#allocation7 + $0x70] sm:$0xff]
    %v6616 = vld [vmem:[#allocation7 + $0x78] sm:$0xff]
    %v6617 = vlaneseq
    %v6618 = vshrl.u32 %v6617, 7
    %v6619 = vsub.s32 0, %v6618
    %v6620 = vrot.slane %v6598, %v6619
    %6621 = vmatprep.subr.mxu0 0.0
    %6622 = vmatpush1.msra.mxu0 %v6616
    %6623 = vmatprep.subr.mxu0 0.0
    %6624 = vmatpush1.msra.mxu0 %v6615
    %6625 = vmatprep.subr.mxu0 0.0
    %6626 = vmatpush1.msra.mxu0 %v6614
    %6627 = vmatprep.subr.mxu0 0.0
    %6628 = vmatpush1.msra.mxu0 %v6613
    %6629 = vmatprep.subr.mxu0 0.0
    %6630 = vmatpush1.msra.mxu0 %v6612
    %6631 = vmatprep.subr.mxu0 0.0
    %6632 = vmatpush1.msra.mxu0 %v6611
    %6633 = vmatprep.subr.mxu0 0.0
    %6634 = vmatpush1.msra.mxu0 %v6610
    %6635 = vmatprep.subr.mxu0 0.0
    %6636 = vmatpush1.msra.mxu0 %v6609
    %6637 = vmatprep.subr.mxu0 0.0
    %6638 = vmatpush1.msra.mxu0 %v6608
    %6639 = vmatprep.subr.mxu0 0.0
    %6640 = vmatpush1.msra.mxu0 %v6607
    %6641 = vmatprep.subr.mxu0 0.0
    %6642 = vmatpush1.msra.mxu0 %v6606
    %6643 = vmatprep.subr.mxu0 0.0
    %6644 = vmatpush1.msra.mxu0 %v6605
    %6645 = vmatprep.subr.mxu0 0.0
    %6646 = vmatpush1.msra.mxu0 %v6604
    %6647 = vmatprep.subr.mxu0 0.0
    %6648 = vmatpush1.msra.mxu0 %v6603
    %6649 = vmatprep.subr.mxu0 0.0
    %6650 = vmatpush1.msra.mxu0 %v6602
    %6651 = vmatprep.subr.mxu0 0.0
    %6652 = vmatpush1.msra.mxu0 %v6601
    %6653 = vmatprep.subr.mxu0 0.0
    %6654 = vmatpush2.msra.mxu0 0.0
    %6655 = vmatprep.subr.mxu0 0.0
    %6656 = vmatpush2.msra.mxu0 0.0
    %6657 = vmatprep.subr.mxu0 0.0
    %6658 = vmatpush2.msra.mxu0 0.0
    %6659 = vmatprep.subr.mxu0 0.0
    %6660 = vmatpush2.msra.mxu0 0.0
    %6661 = vmatprep.subr.mxu0 0.0
    %6662 = vmatpush2.msra.mxu0 0.0
    %6663 = vmatprep.subr.mxu0 0.0
    %6664 = vmatpush2.msra.mxu0 0.0
    %6665 = vmatprep.subr.mxu0 0.0
    %6666 = vmatpush2.msra.mxu0 0.0
    %6667 = vmatprep.subr.mxu0 0.0
    %6668 = vmatpush2.msra.mxu0 0.0
    %6669 = vmatprep.subr.mxu0 0.0
    %6670 = vmatpush2.msra.mxu0 0.0
    %6671 = vmatprep.subr.mxu0 0.0
    %6672 = vmatpush2.msra.mxu0 0.0
    %6673 = vmatprep.subr.mxu0 0.0
    %6674 = vmatpush2.msra.mxu0 0.0
    %6675 = vmatprep.subr.mxu0 0.0
    %6676 = vmatpush2.msra.mxu0 0.0
    %6677 = vmatprep.subr.mxu0 0.0
    %6678 = vmatpush2.msra.mxu0 0.0
    %6679 = vmatprep.subr.mxu0 0.0
    %6680 = vmatpush2.msra.mxu0 0.0
    %6681 = vmatprep.subr.mxu0 0.0
    %6682 = vmatpush2.msra.mxu0 0.0
    %6683 = vmatprep.subr.mxu0 0.0
    %6684 = vmatpush2.msra.mxu0 0.0
    %6685 = vmatprep.mubr.f32.mxu0 0.0
    %6686 = vmatmul.mubr.f32.gmra.mxu0 %v6597
    %v6687 = vpop.f32.mrf.mxu0
    %v6688 = vadd.f32 %v6620, %v6687
    %v6689 = vpop.f32.mrf.mxu0
    %6690 = vdwg.mxu0
    %vm6691 = vcmask 1041408
    %v6692 = vsel %vm6691, %v6688, 0.0
    %v6693 = vrot.slane %v6692, 4
    %v6694 = vadd.f32 %v6692, %v6693
    %v6695 = vrot.slane %v6694, 2
    %v6696 = vadd.f32 %v6694, %v6695
    %v6697 = vrot.slane %v6696, 1
    %v6698 = vadd.f32 %v6696, %v6697
    %v6699 = vrcp.pop 2.0
    %v6700 = vmul.f32 %v6698, %v6699
    %v6701 = vmul.f32 %v6688, %v6688
    %v6702 = vsel %vm6691, %v6701, 0.0
    %v6703 = vrot.slane %v6702, 4
    %v6704 = vadd.f32 %v6702, %v6703
    %v6705 = vrot.slane %v6704, 2
    %v6706 = vadd.f32 %v6704, %v6705
    %v6707 = vrot.slane %v6706, 1
    %v6708 = vadd.f32 %v6706, %v6707
    %v6709 = vmul.f32 %v6708, %v6699
    %v6710 = vmul.f32 %v6700, %v6700
    %v6711 = vsub.f32 %v6709, %v6710
    %v6712 = vadd.f32 %v6711, 1e-05
    %v6713 = vrsqrt.pop %v6712
    %v6714 = vsub.f32 %v6688, %v6700
    %v6715 = vmul.f32 %v6714, %v6713
    %v6716 = vlaneseq
    %v6717 = vshrl.u32 %v6716, 7
    %v6718 = vsub.s32 0, %v6717
    %v6719 = vrot.slane %v6599, %v6718
    %v6720 = vmul.f32 %v6715, %v6719
    %v6721 = vlaneseq
    %v6722 = vshrl.u32 %v6721, 7
    %v6723 = vsub.s32 0, %v6722
    %v6724 = vrot.slane %v6600, %v6723
    %v6725 = vadd.f32 %v6720, %v6724
    %v6726 = vmax.f32 %v6725, 0.0
    %v6727 = vld [vmem:[#allocation5 + $0x4] sm:$0x1]
    %v6728 = vld [vmem:[#allocation5 + $0x5] sm:$0x1]
    %v6729 = vld [vmem:[#allocation5 + $0x6] sm:$0x1]
    %s6730 = scalar_lea.vmem [#allocation7], 128
    %v6731 = vld [vmem:[%s6730] sm:$0xff]
    %v6732 = vld [vmem:[%s6730 + $0x8] sm:$0xff]
    %v6733 = vld [vmem:[%s6730 + $0x10] sm:$0xff]
    %v6734 = vld [vmem:[%s6730 + $0x18] sm:$0xff]
    %v6735 = vld [vmem:[%s6730 + $0x20] sm:$0xff]
    %v6736 = vld [vmem:[%s6730 + $0x28] sm:$0xff]
    %v6737 = vld [vmem:[%s6730 + $0x30] sm:$0xff]
    %v6738 = vld [vmem:[%s6730 + $0x38] sm:$0xff]
    %v6739 = vld [vmem:[%s6730 + $0x40] sm:$0xff]
    %v6740 = vld [vmem:[%s6730 + $0x48] sm:$0xff]
    %v6741 = vld [vmem:[%s6730 + $0x50] sm:$0xff]
    %v6742 = vld [vmem:[%s6730 + $0x58] sm:$0xff]
    %v6743 = vld [vmem:[%s6730 + $0x60] sm:$0xff]
    %v6744 = vld [vmem:[%s6730 + $0x68] sm:$0xff]
    %v6745 = vld [vmem:[%s6730 + $0x70] sm:$0xff]
    %v6746 = vld [vmem:[%s6730 + $0x78] sm:$0xff]
    %v6747 = vlaneseq
    %v6748 = vshrl.u32 %v6747, 7
    %v6749 = vsub.s32 0, %v6748
    %v6750 = vrot.slane %v6727, %v6749
    %6751 = vmatprep.subr.mxu0 0.0
    %6752 = vmatpush1.msra.mxu0 %v6746
    %6753 = vmatprep.subr.mxu0 0.0
    %6754 = vmatpush1.msra.mxu0 %v6745
    %6755 = vmatprep.subr.mxu0 0.0
    %6756 = vmatpush1.msra.mxu0 %v6744
    %6757 = vmatprep.subr.mxu0 0.0
    %6758 = vmatpush1.msra.mxu0 %v6743
    %6759 = vmatprep.subr.mxu0 0.0
    %6760 = vmatpush1.msra.mxu0 %v6742
    %6761 = vmatprep.subr.mxu0 0.0
    %6762 = vmatpush1.msra.mxu0 %v6741
    %6763 = vmatprep.subr.mxu0 0.0
    %6764 = vmatpush1.msra.mxu0 %v6740
    %6765 = vmatprep.subr.mxu0 0.0
    %6766 = vmatpush1.msra.mxu0 %v6739
    %6767 = vmatprep.subr.mxu0 0.0
    %6768 = vmatpush1.msra.mxu0 %v6738
    %6769 = vmatprep.subr.mxu0 0.0
    %6770 = vmatpush1.msra.mxu0 %v6737
    %6771 = vmatprep.subr.mxu0 0.0
    %6772 = vmatpush1.msra.mxu0 %v6736
    %6773 = vmatprep.subr.mxu0 0.0
    %6774 = vmatpush1.msra.mxu0 %v6735
    %6775 = vmatprep.subr.mxu0 0.0
    %6776 = vmatpush1.msra.mxu0 %v6734
    %6777 = vmatprep.subr.mxu0 0.0
    %6778 = vmatpush1.msra.mxu0 %v6733
    %6779 = vmatprep.subr.mxu0 0.0
    %6780 = vmatpush1.msra.mxu0 %v6732
    %6781 = vmatprep.subr.mxu0 0.0
    %6782 = vmatpush1.msra.mxu0 %v6731
    %6783 = vmatprep.subr.mxu0 0.0
    %6784 = vmatpush2.msra.mxu0 0.0
    %6785 = vmatprep.subr.mxu0 0.0
    %6786 = vmatpush2.msra.mxu0 0.0
    %6787 = vmatprep.subr.mxu0 0.0
    %6788 = vmatpush2.msra.mxu0 0.0
    %6789 = vmatprep.subr.mxu0 0.0
    %6790 = vmatpush2.msra.mxu0 0.0
    %6791 = vmatprep.subr.mxu0 0.0
    %6792 = vmatpush2.msra.mxu0 0.0
    %6793 = vmatprep.subr.mxu0 0.0
    %6794 = vmatpush2.msra.mxu0 0.0
    %6795 = vmatprep.subr.mxu0 0.0
    %6796 = vmatpush2.msra.mxu0 0.0
    %6797 = vmatprep.subr.mxu0 0.0
    %6798 = vmatpush2.msra.mxu0 0.0
    %6799 = vmatprep.subr.mxu0 0.0
    %6800 = vmatpush2.msra.mxu0 0.0
    %6801 = vmatprep.subr.mxu0 0.0
    %6802 = vmatpush2.msra.mxu0 0.0
    %6803 = vmatprep.subr.mxu0 0.0
    %6804 = vmatpush2.msra.mxu0 0.0
    %6805 = vmatprep.subr.mxu0 0.0
    %6806 = vmatpush2.msra.mxu0 0.0
    %6807 = vmatprep.subr.mxu0 0.0
    %6808 = vmatpush2.msra.mxu0 0.0
    %6809 = vmatprep.subr.mxu0 0.0
    %6810 = vmatpush2.msra.mxu0 0.0
    %6811 = vmatprep.subr.mxu0 0.0
    %6812 = vmatpush2.msra.mxu0 0.0
    %6813 = vmatprep.subr.mxu0 0.0
    %6814 = vmatpush2.msra.mxu0 0.0
    %6815 = vmatprep.mubr.f32.mxu0 0.0
    %6816 = vmatmul.mubr.f32.gmra.mxu0 %v6726
    %v6817 = vpop.f32.mrf.mxu0
    %v6818 = vadd.f32 %v6750, %v6817
    %v6819 = vpop.f32.mrf.mxu0
    %6820 = vdwg.mxu0
    %v6821 = vsel %vm6691, %v6818, 0.0
    %v6822 = vrot.slane %v6821, 4
    %v6823 = vadd.f32 %v6821, %v6822
    %v6824 = vrot.slane %v6823, 2
    %v6825 = vadd.f32 %v6823, %v6824
    %v6826 = vrot.slane %v6825, 1
    %v6827 = vadd.f32 %v6825, %v6826
    %v6828 = vmul.f32 %v6827, %v6699
    %v6829 = vmul.f32 %v6818, %v6818
    %v6830 = vsel %vm6691, %v6829, 0.0
    %v6831 = vrot.slane %v6830, 4
    %v6832 = vadd.f32 %v6830, %v6831
    %v6833 = vrot.slane %v6832, 2
    %v6834 = vadd.f32 %v6832, %v6833
    %v6835 = vrot.slane %v6834, 1
    %v6836 = vadd.f32 %v6834, %v6835
    %v6837 = vmul.f32 %v6836, %v6699
    %v6838 = vmul.f32 %v6828, %v6828
    %v6839 = vsub.f32 %v6837, %v6838
    %v6840 = vadd.f32 %v6839, 1e-05
    %v6841 = vrsqrt.pop %v6840
    %v6842 = vsub.f32 %v6818, %v6828
    %v6843 = vmul.f32 %v6842, %v6841
    %v6844 = vlaneseq
    %v6845 = vshrl.u32 %v6844, 7
    %v6846 = vsub.s32 0, %v6845
    %v6847 = vrot.slane %v6728, %v6846
    %v6848 = vmul.f32 %v6843, %v6847
    %v6849 = vlaneseq
    %v6850 = vshrl.u32 %v6849, 7
    %v6851 = vsub.s32 0, %v6850
    %v6852 = vrot.slane %v6729, %v6851
    %v6853 = vadd.f32 %v6848, %v6852
    %v6854 = vmax.f32 %v6853, 0.0
    %v6855 = vld [vmem:[#allocation5 + $0x7] sm:$0x1]
    %s6856 = scalar_lea.vmem [#allocation7], 256
    %v6857 = vld [vmem:[%s6856] sm:$0xff]
    %v6858 = vld [vmem:[%s6856 + $0x8] sm:$0xff]
    %v6859 = vld [vmem:[%s6856 + $0x10] sm:$0xff]
    %v6860 = vld [vmem:[%s6856 + $0x18] sm:$0xff]
    %v6861 = vld [vmem:[%s6856 + $0x20] sm:$0xff]
    %v6862 = vld [vmem:[%s6856 + $0x28] sm:$0xff]
    %v6863 = vld [vmem:[%s6856 + $0x30] sm:$0xff]
    %v6864 = vld [vmem:[%s6856 + $0x38] sm:$0xff]
    %v6865 = vld [vmem:[%s6856 + $0x40] sm:$0xff]
    %v6866 = vld [vmem:[%s6856 + $0x48] sm:$0xff]
    %v6867 = vld [vmem:[%s6856 + $0x50] sm:$0xff]
    %v6868 = vld [vmem:[%s6856 + $0x58] sm:$0xff]
    %v6869 = vld [vmem:[%s6856 + $0x60] sm:$0xff]
    %v6870 = vld [vmem:[%s6856 + $0x68] sm:$0xff]
    %v6871 = vld [vmem:[%s6856 + $0x70] sm:$0xff]
    %v6872 = vld [vmem:[%s6856 + $0x78] sm:$0xff]
    %v6873 = vlaneseq
    %v6874 = vshrl.u32 %v6873, 7
    %v6875 = vsub.s32 0, %v6874
    %v6876 = vrot.slane %v6855, %v6875
    %6877 = vmatprep.subr.mxu0 0.0
    %6878 = vmatpush1.msra.mxu0 %v6872
    %6879 = vmatprep.subr.mxu0 0.0
    %6880 = vmatpush1.msra.mxu0 %v6871
    %6881 = vmatprep.subr.mxu0 0.0
    %6882 = vmatpush1.msra.mxu0 %v6870
    %6883 = vmatprep.subr.mxu0 0.0
    %6884 = vmatpush1.msra.mxu0 %v6869
    %6885 = vmatprep.subr.mxu0 0.0
    %6886 = vmatpush1.msra.mxu0 %v6868
    %6887 = vmatprep.subr.mxu0 0.0
    %6888 = vmatpush1.msra.mxu0 %v6867
    %6889 = vmatprep.subr.mxu0 0.0
    %6890 = vmatpush1.msra.mxu0 %v6866
    %6891 = vmatprep.subr.mxu0 0.0
    %6892 = vmatpush1.msra.mxu0 %v6865
    %6893 = vmatprep.subr.mxu0 0.0
    %6894 = vmatpush1.msra.mxu0 %v6864
    %6895 = vmatprep.subr.mxu0 0.0
    %6896 = vmatpush1.msra.mxu0 %v6863
    %6897 = vmatprep.subr.mxu0 0.0
    %6898 = vmatpush1.msra.mxu0 %v6862
    %6899 = vmatprep.subr.mxu0 0.0
    %6900 = vmatpush1.msra.mxu0 %v6861
    %6901 = vmatprep.subr.mxu0 0.0
    %6902 = vmatpush1.msra.mxu0 %v6860
    %6903 = vmatprep.subr.mxu0 0.0
    %6904 = vmatpush1.msra.mxu0 %v6859
    %6905 = vmatprep.subr.mxu0 0.0
    %6906 = vmatpush1.msra.mxu0 %v6858
    %6907 = vmatprep.subr.mxu0 0.0
    %6908 = vmatpush1.msra.mxu0 %v6857
    %6909 = vmatprep.subr.mxu0 0.0
    %6910 = vmatpush2.msra.mxu0 0.0
    %6911 = vmatprep.subr.mxu0 0.0
    %6912 = vmatpush2.msra.mxu0 0.0
    %6913 = vmatprep.subr.mxu0 0.0
    %6914 = vmatpush2.msra.mxu0 0.0
    %6915 = vmatprep.subr.mxu0 0.0
    %6916 = vmatpush2.msra.mxu0 0.0
    %6917 = vmatprep.subr.mxu0 0.0
    %6918 = vmatpush2.msra.mxu0 0.0
    %6919 = vmatprep.subr.mxu0 0.0
    %6920 = vmatpush2.msra.mxu0 0.0
    %6921 = vmatprep.subr.mxu0 0.0
    %6922 = vmatpush2.msra.mxu0 0.0
    %6923 = vmatprep.subr.mxu0 0.0
    %6924 = vmatpush2.msra.mxu0 0.0
    %6925 = vmatprep.subr.mxu0 0.0
    %6926 = vmatpush2.msra.mxu0 0.0
    %6927 = vmatprep.subr.mxu0 0.0
    %6928 = vmatpush2.msra.mxu0 0.0
    %6929 = vmatprep.subr.mxu0 0.0
    %6930 = vmatpush2.msra.mxu0 0.0
    %6931 = vmatprep.subr.mxu0 0.0
    %6932 = vmatpush2.msra.mxu0 0.0
    %6933 = vmatprep.subr.mxu0 0.0
    %6934 = vmatpush2.msra.mxu0 0.0
    %6935 = vmatprep.subr.mxu0 0.0
    %6936 = vmatpush2.msra.mxu0 0.0
    %6937 = vmatprep.subr.mxu0 0.0
    %6938 = vmatpush2.msra.mxu0 0.0
    %6939 = vmatprep.subr.mxu0 0.0
    %6940 = vmatpush2.msra.mxu0 0.0
    %6941 = vmatprep.mubr.f32.mxu0 0.0
    %6942 = vmatmul.mubr.f32.gmra.mxu0 %v6854
    %v6943 = vpop.f32.mrf.mxu0
    %v6944 = vadd.f32 %v6876, %v6943
    %v6945 = vpop.f32.mrf.mxu0
    %6946 = vdwg.mxu0
    %6947 = vst [vmem:[#allocation8] sm:$0x3] %v6944
    // Predicated region
    $region30: #{mlpb_forward.1} parent=1 // pred_check
      _
    $region31: #{mlpb_forward.1} parent=1 // pred_check_branch
      %6949 = sbr.rel (0) target = $region33
    $region32: #{mlpb_forward.1} parent=1 // pred_region
      %s6951 = ssub.s32 32, 32
      %6952 = vsyncadd [#allocation4], %s6951
      %s6954 = sshll.u32 [#allocation8], 4
      %s6955 = int_to_ptr.vmem [resolvable:$true] %s6954
      %6957 = dma.vmem_to_hbm [thread:$0]  %s6955, 32, %s4, [#allocation4]
    $region33: #{mlpb_forward.1} parent=1 // pred_fallthru
      _
    // Predicated region
    $region34: #{mlpb_forward.1} parent=1 // pred_check
      _
    $region35: #{mlpb_forward.1} parent=1 // pred_check_branch
      %6959 = sbr.rel (0) target = $region37
    $region36: #{mlpb_forward.1} parent=1 // pred_region
      %6960 = dma.done [#allocation4], 32
    $region37: #{mlpb_forward.1} parent=1 // pred_fallthru
      _
    %6961 = vsyncpa [#allocation3], 1
    %6962 = vsyncpa [#allocation6], 1
    %6963 = vsyncpa [#allocation4], 1

</llo_original>
